<compile_context>
chip_gen: v6e
topology: v6e:2x2x1
jax: 0.10.0
libtpu: 0.0.40
codegen_flags: <defaults>
</compile_context>

<pallas_src>
import math
from functools import partial

import jax
import jax.numpy as jnp
from jax import lax
from jax.experimental import pallas as pl
from jax.experimental.pallas import tpu as pltpu

F32 = jnp.float32
MXU_DT = jnp.bfloat16          # MXU operand dtype (accumulation stays f32)
LN_EPS = 1e-6

# ----------------------------------------------------------------------------
# Model configuration (small synthetic MViT)
# ----------------------------------------------------------------------------
SPATIAL_SIZE = (16, 16)
TEMPORAL_SIZE = 4
NUM_CLASSES = 10
RESIDUAL_POOL = True
BLOCK_SETTING = [
    dict(num_heads=2, input_channels=16, output_channels=16,
         kernel_q=(1, 1, 1), kernel_kv=(3, 3, 3),
         stride_q=(1, 1, 1), stride_kv=(1, 2, 2)),
    dict(num_heads=2, input_channels=16, output_channels=32,
         kernel_q=(3, 3, 3), kernel_kv=(3, 3, 3),
         stride_q=(1, 2, 2), stride_kv=(1, 1, 1)),
]


def _prod(s):
    p = 1
    for v in s:
        p *= v
    return p


# ----------------------------------------------------------------------------
# In-kernel helpers
# ----------------------------------------------------------------------------
def _ln_f32(x, g, b, eps):
    mean = jnp.mean(x, axis=-1, keepdims=True)
    xc = x - mean
    var = jnp.mean(xc * xc, axis=-1, keepdims=True)
    return xc * lax.rsqrt(var + eps) * g + b


def _erf_approx(x):
    # Abramowitz & Stegun 7.1.26 rational approximation (|err| < 1.5e-7).
    # Keeps exact-GELU (erf) semantics; the divide goes to the EUP via
    # pl.reciprocal(approx=True).
    p = 0.3275911
    a1, a2, a3, a4, a5 = (0.254829592, -0.284496736, 1.421413741,
                          -1.453152027, 1.061405429)
    ax = jnp.abs(x)
    t = pl.reciprocal(1.0 + p * ax, approx=True)
    poly = ((((a5 * t + a4) * t + a3) * t + a2) * t + a1) * t
    y = 1.0 - poly * jnp.exp(-ax * ax)
    return jnp.where(x < 0.0, -y, y)


def _gelu_erf(x):
    return 0.5 * x * (1.0 + _erf_approx(x * 0.7071067811865476))


# ----------------------------------------------------------------------------
# Pallas kernels
# ----------------------------------------------------------------------------
def _ln_qkv_kernel(x_ref, g_ref, b_ref, wq_ref, wk_ref, wv_ref,
                   bq_ref, bk_ref, bv_ref, q_ref, k_ref, v_ref, *, heads, eps):
    """Fused LayerNorm1 + QKV projection, emitting (H, N, d) per batch element."""
    x = x_ref[0].astype(jnp.float32)                       # (N, Cin)
    xn = _ln_f32(x, g_ref[...], b_ref[...], eps)
    xm = xn.astype(MXU_DT)
    for h in range(heads):                                 # static unroll (H small)
        q_ref[0, h] = (jnp.dot(xm, wq_ref[h], preferred_element_type=jnp.float32)
                       + bq_ref[h]).astype(q_ref.dtype)
        k_ref[0, h] = (jnp.dot(xm, wk_ref[h], preferred_element_type=jnp.float32)
                       + bk_ref[h]).astype(k_ref.dtype)
        v_ref[0, h] = (jnp.dot(xm, wv_ref[h], preferred_element_type=jnp.float32)
                       + bv_ref[h]).astype(v_ref.dtype)


def _attn_block_kernel(*refs, heads, scale, ln_q, ln_kv, has_cproj, has_head,
                       residual_pool, eps):
    """pool-LN(q/k/v) + attention + residual-pool + out-proj + skip + LN2 +
    [channel proj] + MLP + residual (+ fused final LN + head on the class row)."""
    it = iter(refs)
    q_ref, k_ref, v_ref = next(it), next(it), next(it)
    qg = qb = kg = kb = vg = vb = None
    if ln_q:
        qg, qb = next(it), next(it)
    if ln_kv:
        kg, kb, vg, vb = next(it), next(it), next(it), next(it)
    pw_ref, pb_ref = next(it), next(it)
    skip_ref = next(it)
    g2_ref, b2_ref = next(it), next(it)
    w1_ref, b1_ref, w2_ref, b2m_ref = next(it), next(it), next(it), next(it)
    cw_ref = cb_ref = None
    if has_cproj:
        cw_ref, cb_ref = next(it), next(it)
    hg_ref = hb_ref = hw_ref = hbi_ref = None
    if has_head:
        hg_ref, hb_ref, hw_ref, hbi_ref = next(it), next(it), next(it), next(it)
    o_ref = next(it)

    q = q_ref[0].astype(jnp.float32)                       # (H, Nq, d)
    k = k_ref[0].astype(jnp.float32)                       # (H, Nk, d)
    v = v_ref[0].astype(jnp.float32)
    if ln_q:                                               # post-pool LN over head_dim
        q = _ln_f32(q, qg[...], qb[...], eps)
    if ln_kv:
        k = _ln_f32(k, kg[...], kb[...], eps)
        v = _ln_f32(v, vg[...], vb[...], eps)

    # scores: contract head_dim, batched over heads
    s = jnp.einsum('hqd,hkd->hqk', (q * scale).astype(MXU_DT), k.astype(MXU_DT),
                   preferred_element_type=jnp.float32)
    s = s - jnp.max(s, axis=-1, keepdims=True)
    p = jnp.exp(s)
    p = p * pl.reciprocal(jnp.sum(p, axis=-1, keepdims=True), approx=True)
    o = jnp.einsum('hqk,hkd->hqd', p.astype(MXU_DT), v.astype(MXU_DT),
                   preferred_element_type=jnp.float32)
    if residual_pool:
        o = o + q                                          # unscaled pooled/LN'd q

    # output projection accumulated per head on the MXU (no per-head concat)
    acc = None
    for h in range(heads):
        part = jnp.dot(o[h].astype(MXU_DT), pw_ref[h],
                       preferred_element_type=jnp.float32)
        acc = part if acc is None else acc + part
    x = acc + pb_ref[...] + skip_ref[0].astype(jnp.float32)   # (Nq, C) block residual

    # LayerNorm2 + [channel projection] + MLP + residual
    xn = _ln_f32(x, g2_ref[...], b2_ref[...], eps)
    xm = xn.astype(MXU_DT)
    hmid = jnp.dot(xm, w1_ref[...], preferred_element_type=jnp.float32) + b1_ref[...]
    hmid = _gelu_erf(hmid)
    y = jnp.dot(hmid.astype(MXU_DT), w2_ref[...],
                preferred_element_type=jnp.float32) + b2m_ref[...]
    if has_cproj:
        res = jnp.dot(xm, cw_ref[...], preferred_element_type=jnp.float32) + cb_ref[...]
    else:
        res = x
    blk = y + res                                          # (Nq, Cout)

    if has_head:
        # Final LayerNorm + classification head on the class-token row only.
        cls = blk[0:1, :]
        cn = _ln_f32(cls, hg_ref[...], hb_ref[...], eps)
        logits = jnp.dot(cn.astype(MXU_DT), hw_ref[...],
                         preferred_element_type=jnp.float32) + hbi_ref[...]
        o_ref[0] = logits.astype(o_ref.dtype)              # (1, 128) lane-dense store
    else:
        o_ref[0] = blk.astype(o_ref.dtype)


# ----------------------------------------------------------------------------
# Pallas wrappers
# ----------------------------------------------------------------------------
def _const_spec(a):
    # Constant operand: full block, block index fixed at 0 (fetched once).
    return pl.BlockSpec(a.shape, lambda i, nd=a.ndim: (0,) * nd)


def ln_qkv(x, g, b, qkv_w, qkv_b, heads, eps=LN_EPS):
    bsz, n, cin = x.shape
    c = cin
    d = c // heads

    def head_w(w):                                        # (Cin, C) -> (H, Cin, d) bf16
        return jnp.transpose(w.reshape(cin, heads, d), (1, 0, 2)).astype(MXU_DT)

    wq = head_w(qkv_w[:, :c])
    wk = head_w(qkv_w[:, c:2 * c])
    wv = head_w(qkv_w[:, 2 * c:])
    bq = qkv_b[:c].reshape(heads, 1, d)
    bk = qkv_b[c:2 * c].reshape(heads, 1, d)
    bv = qkv_b[2 * c:].reshape(heads, 1, d)
    consts = [g.reshape(1, cin), b.reshape(1, cin), wq, wk, wv, bq, bk, bv]

    in_specs = [pl.BlockSpec((1, n, cin), lambda i: (i, 0, 0))]
    in_specs += [_const_spec(a) for a in consts]
    out_spec = pl.BlockSpec((1, heads, n, d), lambda i: (i, 0, 0, 0))
    out_shape = jax.ShapeDtypeStruct((bsz, heads, n, d), x.dtype)

    q, k, v = pl.pallas_call(
        partial(_ln_qkv_kernel, heads=heads, eps=eps),
        grid=(bsz,),
        in_specs=in_specs,
        out_specs=[out_spec, out_spec, out_spec],
        out_shape=[out_shape, out_shape, out_shape],
        compiler_params=pltpu.CompilerParams(dimension_semantics=("parallel",)),
    )(x, *consts)
    return q, k, v


def attn_block(q, k, v, skip, *, heads, scale, proj_w, proj_b,
               norm2_g, norm2_b, mlp_w1, mlp_b1, mlp_w2, mlp_b2,
               ln_q=None, ln_kv=None, chan_proj=None, head=None, eps=LN_EPS):
    bsz, _, nq, d = q.shape
    nk = k.shape[2]
    c = heads * d
    cout = mlp_w2.shape[1]

    inputs = [q, k, v]
    in_specs = [pl.BlockSpec((1, heads, nq, d), lambda i: (i, 0, 0, 0)),
                pl.BlockSpec((1, heads, nk, d), lambda i: (i, 0, 0, 0)),
                pl.BlockSpec((1, heads, nk, d), lambda i: (i, 0, 0, 0))]

    def add_const(a):
        a2 = a.reshape(1, -1) if a.ndim == 1 else a
        inputs.append(a2)
        in_specs.append(_const_spec(a2))

    has_lnq = ln_q is not None
    has_lnkv = ln_kv is not None
    if has_lnq:
        add_const(ln_q[0]); add_const(ln_q[1])
    if has_lnkv:
        for a in ln_kv:
            add_const(a)
    add_const(proj_w.reshape(heads, d, c).astype(MXU_DT))   # per-head slabs, bf16
    add_const(proj_b)
    inputs.append(skip)
    in_specs.append(pl.BlockSpec((1, nq, c), lambda i: (i, 0, 0)))
    add_const(norm2_g); add_const(norm2_b)
    add_const(mlp_w1.astype(MXU_DT)); add_const(mlp_b1)
    add_const(mlp_w2.astype(MXU_DT)); add_const(mlp_b2)
    has_cproj = chan_proj is not None
    if has_cproj:
        add_const(chan_proj[0].astype(MXU_DT)); add_const(chan_proj[1])
    has_head = head is not None
    if has_head:
        hg, hb, hw, hbias = head
        ncls = hw.shape[1]
        npad = ((ncls + 127) // 128) * 128                 # lane-dense head output
        add_const(hg); add_const(hb)
        add_const(jnp.pad(hw.astype(MXU_DT), ((0, 0), (0, npad - ncls))))
        add_const(jnp.pad(hbias, (0, npad - ncls)))
        out_shape = jax.ShapeDtypeStruct((bsz, 1, npad), q.dtype)
        out_spec = pl.BlockSpec((1, 1, npad), lambda i: (i, 0, 0))
    else:
        out_shape = jax.ShapeDtypeStruct((bsz, nq, cout), q.dtype)
        out_spec = pl.BlockSpec((1, nq, cout), lambda i: (i, 0, 0))

    return pl.pallas_call(
        partial(_attn_block_kernel, heads=heads, scale=scale, ln_q=has_lnq,
                ln_kv=has_lnkv, has_cproj=has_cproj, has_head=has_head,
                residual_pool=RESIDUAL_POOL, eps=eps),
        grid=(bsz,),
        in_specs=in_specs,
        out_specs=out_spec,
        out_shape=out_shape,
        compiler_params=pltpu.CompilerParams(dimension_semantics=("parallel",)),
    )(*inputs)


# ----------------------------------------------------------------------------
# XLA-native conv / pooling glue (native MXU conv, no tap loops)
# ----------------------------------------------------------------------------
def conv_proj(x, w, bias):
    # x: (B, 3, T, H, W); w: (C0, 3, 3, 7, 7) (torch OITHW); out channel-last.
    y = lax.conv_general_dilated(
        x, w, window_strides=(2, 4, 4),
        padding=((1, 1), (3, 3), (3, 3)),
        dimension_numbers=('NCTHW', 'OITHW', 'NTHWC'))
    b = x.shape[0]
    t, hh, ww, c0 = y.shape[1:]
    y = y.reshape(b, t * hh * ww, c0) + bias.reshape(1, 1, c0)
    return y, (t, hh, ww)


def pool_conv(x, thw, w, stride, padding):
    # x: (B, heads, N, hd) with class token at index 0; depthwise Conv3d
    # (groups=hd, shared across heads).  The post-pool LayerNorm is fused into
    # the attention kernel, so the returned tensor is unnormalized.
    b, h, n, d = x.shape
    t, hh, ww = thw
    cls = x[:, :, :1, :]
    xs = x[:, :, 1:, :].reshape(b * h, t, hh, ww, d)       # free reshape, no transpose
    wk = jnp.transpose(w, (2, 3, 4, 1, 0))                 # (kT, kH, kW, 1, hd)
    y = lax.conv_general_dilated(
        xs, wk, window_strides=stride,
        padding=tuple((p, p) for p in padding),
        dimension_numbers=('NTHWC', 'THWIO', 'NTHWC'),
        feature_group_count=d)
    tn, hn, wn = y.shape[1:4]
    y = y.reshape(b, h, tn * hn * wn, d)
    y = jnp.concatenate([cls, y], axis=2)
    return y, (tn, hn, wn)


def pool_skip_maxpool(x, thw, kernel, stride, padding):
    # x: (B, N, C) with class token at index 0; MaxPool3d, no norm.
    b, n, c = x.shape
    t, hh, ww = thw
    cls = x[:, :1, :]
    xs = x[:, 1:, :].reshape(b, t, hh, ww, c)
    kt, kh, kw = kernel
    st, sh, sw = stride
    pt, ph, pw = padding
    y = lax.reduce_window(xs, -jnp.inf, lax.max,
                          (1, kt, kh, kw, 1), (1, st, sh, sw, 1),
                          ((0, 0), (pt, pt), (ph, ph), (pw, pw), (0, 0)))
    tn, hn, wn = y.shape[1:4]
    y = y.reshape(b, tn * hn * wn, c)
    return jnp.concatenate([cls, y], axis=1), (tn, hn, wn)


# ----------------------------------------------------------------------------
# MViT building blocks (functional)
# ----------------------------------------------------------------------------
def multiscale_block(x, thw, bp, cnf, head=None):
    cin, cout = cnf['input_channels'], cnf['output_channels']
    heads = cnf['num_heads']
    hd = cin // heads
    scale = 1.0 / math.sqrt(hd)
    ap = bp['attn']

    # residual skip path (MaxPool3d when strided q)
    if _prod(cnf['stride_q']) > 1:
        kernel_skip = tuple(s + 1 if s > 1 else s for s in cnf['stride_q'])
        padding_skip = tuple(kk // 2 for kk in kernel_skip)
        x_skip, _ = pool_skip_maxpool(x, thw, kernel_skip, cnf['stride_q'],
                                      padding_skip)
    else:
        x_skip = x

    # fused LayerNorm1 + QKV projection -> (B, H, N, d) each (no 5-D transpose)
    q, k, v = ln_qkv(x, bp['norm1_g'], bp['norm1_b'], ap['qkv_w'], ap['qkv_b'], heads)

    ln_q = ln_kv = None
    if 'pool_k' in ap:
        pad_kv = tuple(kk // 2 for kk in cnf['kernel_kv'])
        k, _ = pool_conv(k, thw, ap['pool_k']['w'], cnf['stride_kv'], pad_kv)
        v, _ = pool_conv(v, thw, ap['pool_v']['w'], cnf['stride_kv'], pad_kv)
        ln_kv = (ap['pool_k']['ln_g'], ap['pool_k']['ln_b'],
                 ap['pool_v']['ln_g'], ap['pool_v']['ln_b'])
    if 'pool_q' in ap:
        pad_q = tuple(kk // 2 for kk in cnf['kernel_q'])
        q, thw = pool_conv(q, thw, ap['pool_q']['w'], cnf['stride_q'], pad_q)
        ln_q = (ap['pool_q']['ln_g'], ap['pool_q']['ln_b'])

    chan_proj = (bp['proj_w'], bp['proj_b']) if 'proj_w' in bp else None
    out = attn_block(q, k, v, x_skip, heads=heads, scale=scale,
                     proj_w=ap['proj_w'], proj_b=ap['proj_b'],
                     norm2_g=bp['norm2_g'], norm2_b=bp['norm2_b'],
                     mlp_w1=bp['mlp_w1'], mlp_b1=bp['mlp_b1'],
                     mlp_w2=bp['mlp_w2'], mlp_b2=bp['mlp_b2'],
                     ln_q=ln_q, ln_kv=ln_kv, chan_proj=chan_proj, head=head)
    return out, thw


@jax.jit
def mvit_forward(x, params):
    b = x.shape[0]
    # patchify Conv3d(3, C0, (3,7,7), stride=(2,4,4), padding=(1,3,3))
    y, (t, hs, ws) = conv_proj(x, params['conv_w'], params['conv_b'])
    c0 = y.shape[-1]
    # positional encoding + class token
    pe = params['pos']
    hw = hs * ws
    pos = jnp.repeat(pe['temporal_pos'], hw, axis=0) + jnp.tile(pe['spatial_pos'], (t, 1))
    pos = jnp.concatenate([pe['class_pos'][None, :], pos], axis=0)[None]
    cls = jnp.broadcast_to(pe['class_token'][None, None, :], (b, 1, c0))
    y = jnp.concatenate([cls, y], axis=1) + pos
    thw = (t, hs, ws)

    n_blocks = len(params['blocks'])
    head = None
    for i, (bp, cnf) in enumerate(zip(params['blocks'], BLOCK_SETTING)):
        if i == n_blocks - 1:
            # fuse final LayerNorm + classification head into the last block kernel
            head = (params['norm_g'], params['norm_b'],
                    params['head_w'], params['head_b'])
        y, thw = multiscale_block(y, thw, bp, cnf, head=head)
    # y is (B, 1, 128) lane-dense padded logits for the class token
    return y[:, 0, :NUM_CLASSES]


# ----------------------------------------------------------------------------
# Deterministic parameter init
# ----------------------------------------------------------------------------
def trunc_normal(key, shape, std=0.02):
    return (std * jax.random.truncated_normal(key, -2.0, 2.0, shape)).astype(F32)


def init_params(key):
    keys = iter(jax.random.split(key, 64))
    p = {}
    c0 = BLOCK_SETTING[0]['input_channels']
    p['conv_w'] = trunc_normal(next(keys), (c0, 3, 3, 7, 7))
    p['conv_b'] = jnp.zeros((c0,), F32)
    t_out = TEMPORAL_SIZE // 2
    h_out = SPATIAL_SIZE[0] // 4
    w_out = SPATIAL_SIZE[1] // 4
    p['pos'] = dict(
        class_token=trunc_normal(next(keys), (c0,)),
        spatial_pos=trunc_normal(next(keys), (h_out * w_out, c0)),
        temporal_pos=trunc_normal(next(keys), (t_out, c0)),
        class_pos=trunc_normal(next(keys), (c0,)),
    )
    blocks = []
    for cnf in BLOCK_SETTING:
        cin, cout = cnf['input_channels'], cnf['output_channels']
        hd = cin // cnf['num_heads']
        bp = dict(
            norm1_g=jnp.ones((cin,), F32), norm1_b=jnp.zeros((cin,), F32),
            norm2_g=jnp.ones((cin,), F32), norm2_b=jnp.zeros((cin,), F32),
            attn=dict(
                qkv_w=trunc_normal(next(keys), (cin, 3 * cin)),
                qkv_b=jnp.zeros((3 * cin,), F32),
                proj_w=trunc_normal(next(keys), (cin, cin)),
                proj_b=jnp.zeros((cin,), F32),
            ),
            mlp_w1=trunc_normal(next(keys), (cin, 4 * cin)),
            mlp_b1=jnp.zeros((4 * cin,), F32),
            mlp_w2=trunc_normal(next(keys), (4 * cin, cout)),
            mlp_b2=jnp.zeros((cout,), F32),
        )
        if _prod(cnf['kernel_q']) > 1 or _prod(cnf['stride_q']) > 1:
            bp['attn']['pool_q'] = dict(
                w=trunc_normal(next(keys), (hd, 1) + tuple(cnf['kernel_q'])),
                ln_g=jnp.ones((hd,), F32), ln_b=jnp.zeros((hd,), F32))
        if _prod(cnf['kernel_kv']) > 1 or _prod(cnf['stride_kv']) > 1:
            bp['attn']['pool_k'] = dict(
                w=trunc_normal(next(keys), (hd, 1) + tuple(cnf['kernel_kv'])),
                ln_g=jnp.ones((hd,), F32), ln_b=jnp.zeros((hd,), F32))
            bp['attn']['pool_v'] = dict(
                w=trunc_normal(next(keys), (hd, 1) + tuple(cnf['kernel_kv'])),
                ln_g=jnp.ones((hd,), F32), ln_b=jnp.zeros((hd,), F32))
        if cin != cout:
            bp['proj_w'] = trunc_normal(next(keys), (cin, cout))
            bp['proj_b'] = jnp.zeros((cout,), F32)
        blocks.append(bp)
    p['blocks'] = blocks
    clast = BLOCK_SETTING[-1]['output_channels']
    p['norm_g'] = jnp.ones((clast,), F32)
    p['norm_b'] = jnp.zeros((clast,), F32)
    p['head_w'] = trunc_normal(next(keys), (clast, NUM_CLASSES))
    p['head_b'] = jnp.zeros((NUM_CLASSES,), F32)
    return p


if __name__ == "__main__":
    key = jax.random.PRNGKey(0)
    pkey, xkey = jax.random.split(key)
    params = init_params(pkey)
    x = jax.random.normal(
        xkey, (2, 3, TEMPORAL_SIZE, SPATIAL_SIZE[0], SPATIAL_SIZE[1]), F32)
    out = mvit_forward(x, params)
    jax.block_until_ready(out)
    assert out.shape == (2, NUM_CLASSES), out.shape
    assert bool(jnp.all(jnp.isfinite(out)))
    print("KERNEL_OK")
</pallas_src>

<mosaic_0001>
module attributes {stable_mosaic.version = 11 : i64} {
  func.func @_ln_qkv_kernel(%arg0: i32, %arg1: memref<1x33x16xf32, #tpu.memory_space<vmem>>, %arg2: memref<1x16xf32, #tpu.memory_space<vmem>>, %arg3: memref<1x16xf32, #tpu.memory_space<vmem>>, %arg4: memref<2x16x8xbf16, #tpu.memory_space<vmem>>, %arg5: memref<2x16x8xbf16, #tpu.memory_space<vmem>>, %arg6: memref<2x16x8xbf16, #tpu.memory_space<vmem>>, %arg7: memref<2x1x8xf32, #tpu.memory_space<vmem>>, %arg8: memref<2x1x8xf32, #tpu.memory_space<vmem>>, %arg9: memref<2x1x8xf32, #tpu.memory_space<vmem>>, %arg10: memref<1x2x33x8xf32, #tpu.memory_space<vmem>>, %arg11: memref<1x2x33x8xf32, #tpu.memory_space<vmem>>, %arg12: memref<1x2x33x8xf32, #tpu.memory_space<vmem>>) attributes {dimension_semantics = [#tpu.dimension_semantics<parallel>], iteration_bounds = array<i64: 2>, scalar_prefetch = 0 : i64, scratch_operands = 0 : i64, tpu.core_type = #tpu.core_type<tc>, window_params = [{transform_indices = @transform_0, window_bounds = array<i64: 1, 33, 16>}, {pipeline_mode = #tpu.pipeline_mode<synchronous>, transform_indices = @transform_1, window_bounds = array<i64: 1, 16>}, {pipeline_mode = #tpu.pipeline_mode<synchronous>, transform_indices = @transform_2, window_bounds = array<i64: 1, 16>}, {pipeline_mode = #tpu.pipeline_mode<synchronous>, transform_indices = @transform_3, window_bounds = array<i64: 2, 16, 8>}, {pipeline_mode = #tpu.pipeline_mode<synchronous>, transform_indices = @transform_4, window_bounds = array<i64: 2, 16, 8>}, {pipeline_mode = #tpu.pipeline_mode<synchronous>, transform_indices = @transform_5, window_bounds = array<i64: 2, 16, 8>}, {pipeline_mode = #tpu.pipeline_mode<synchronous>, transform_indices = @transform_6, window_bounds = array<i64: 2, 1, 8>}, {pipeline_mode = #tpu.pipeline_mode<synchronous>, transform_indices = @transform_7, window_bounds = array<i64: 2, 1, 8>}, {pipeline_mode = #tpu.pipeline_mode<synchronous>, transform_indices = @transform_8, window_bounds = array<i64: 2, 1, 8>}, {transform_indices = @transform_9, window_bounds = array<i64: 1, 2, 33, 8>}, {transform_indices = @transform_10, window_bounds = array<i64: 1, 2, 33, 8>}, {transform_indices = @transform_11, window_bounds = array<i64: 1, 2, 33, 8>}]} {
    %c0 = arith.constant 0 : index
    %c0_0 = arith.constant 0 : index
    %c0_1 = arith.constant 0 : index
    %0 = vector.load %arg1[%c0, %c0_0, %c0_1] : memref<1x33x16xf32, #tpu.memory_space<vmem>>, vector<1x33x16xf32>
    %1 = vector.shape_cast %0 : vector<1x33x16xf32> to vector<33x16xf32>
    %c0_2 = arith.constant 0 : index
    %c0_3 = arith.constant 0 : index
    %2 = vector.load %arg2[%c0_2, %c0_3] : memref<1x16xf32, #tpu.memory_space<vmem>>, vector<1x16xf32>
    %c0_4 = arith.constant 0 : index
    %c0_5 = arith.constant 0 : index
    %3 = vector.load %arg3[%c0_4, %c0_5] : memref<1x16xf32, #tpu.memory_space<vmem>>, vector<1x16xf32>
    %cst = arith.constant dense<0.000000e+00> : vector<33xf32>
    %4 = vector.multi_reduction <add>, %1, %cst [1] : vector<33x16xf32> to vector<33xf32>
    %5 = vector.shape_cast %4 : vector<33xf32> to vector<33x1xf32>
    %cst_6 = arith.constant 1.600000e+01 : f32
    %6 = vector.broadcast %cst_6 : f32 to vector<33x1xf32>
    %7 = arith.divf %5, %6 : vector<33x1xf32>
    %8 = vector.broadcast %7 : vector<33x1xf32> to vector<33x16xf32>
    %9 = arith.subf %1, %8 : vector<33x16xf32>
    %10 = arith.mulf %9, %9 : vector<33x16xf32>
    %cst_7 = arith.constant dense<0.000000e+00> : vector<33xf32>
    %11 = vector.multi_reduction <add>, %10, %cst_7 [1] : vector<33x16xf32> to vector<33xf32>
    %12 = vector.shape_cast %11 : vector<33xf32> to vector<33x1xf32>
    %cst_8 = arith.constant 1.600000e+01 : f32
    %13 = vector.broadcast %cst_8 : f32 to vector<33x1xf32>
    %14 = arith.divf %12, %13 : vector<33x1xf32>
    %cst_9 = arith.constant 9.99999997E-7 : f32
    %15 = vector.broadcast %cst_9 : f32 to vector<33x1xf32>
    %16 = arith.addf %14, %15 : vector<33x1xf32>
    %17 = math.rsqrt %16 : vector<33x1xf32>
    %18 = vector.broadcast %17 : vector<33x1xf32> to vector<33x16xf32>
    %19 = arith.mulf %9, %18 : vector<33x16xf32>
    %20 = vector.broadcast %2 : vector<1x16xf32> to vector<33x16xf32>
    %21 = arith.mulf %19, %20 : vector<33x16xf32>
    %22 = vector.broadcast %3 : vector<1x16xf32> to vector<33x16xf32>
    %23 = arith.addf %21, %22 : vector<33x16xf32>
    %24 = arith.truncf %23 : vector<33x16xf32> to vector<33x16xbf16>
    %c0_10 = arith.constant 0 : index
    %c0_11 = arith.constant 0 : index
    %c0_12 = arith.constant 0 : index
    %25 = vector.load %arg4[%c0_10, %c0_11, %c0_12] : memref<2x16x8xbf16, #tpu.memory_space<vmem>>, vector<1x16x8xbf16>
    %26 = vector.shape_cast %25 : vector<1x16x8xbf16> to vector<16x8xbf16>
    %cst_13 = arith.constant dense<0.000000e+00> : vector<33x8xf32>
    %27 = tpu.matmul %24, %26, %cst_13 {dimension_numbers = #tpu.dot_dimension_numbers<[1], [0], [0], [1], [0, 0, 1, 1], [], []>} : vector<33x16xbf16>, vector<16x8xbf16>, vector<33x8xf32> -> vector<33x8xf32>
    %c0_14 = arith.constant 0 : index
    %c0_15 = arith.constant 0 : index
    %c0_16 = arith.constant 0 : index
    %28 = vector.load %arg7[%c0_14, %c0_15, %c0_16] : memref<2x1x8xf32, #tpu.memory_space<vmem>>, vector<1x1x8xf32>
    %29 = vector.shape_cast %28 : vector<1x1x8xf32> to vector<1x8xf32>
    %30 = vector.broadcast %29 : vector<1x8xf32> to vector<33x8xf32>
    %31 = arith.addf %27, %30 : vector<33x8xf32>
    %c0_17 = arith.constant 0 : index
    %c0_18 = arith.constant 0 : index
    %c0_19 = arith.constant 0 : index
    %c0_20 = arith.constant 0 : index
    %32 = vector.load %arg10[%c0_17, %c0_18, %c0_19, %c0_20] : memref<1x2x33x8xf32, #tpu.memory_space<vmem>>, vector<1x1x33x8xf32>
    %33 = vector.shape_cast %32 : vector<1x1x33x8xf32> to vector<33x8xf32>
    %34 = vector.shape_cast %31 : vector<33x8xf32> to vector<1x1x33x8xf32>
    tpu.vector_store %arg10[%c0_17, %c0_18, %c0_19, %c0_20], %34 {strides = array<i32>} : memref<1x2x33x8xf32, #tpu.memory_space<vmem>>, vector<1x1x33x8xf32>,
    %c0_21 = arith.constant 0 : index
    %c0_22 = arith.constant 0 : index
    %c0_23 = arith.constant 0 : index
    %35 = vector.load %arg5[%c0_21, %c0_22, %c0_23] : memref<2x16x8xbf16, #tpu.memory_space<vmem>>, vector<1x16x8xbf16>
    %36 = vector.shape_cast %35 : vector<1x16x8xbf16> to vector<16x8xbf16>
    %cst_24 = arith.constant dense<0.000000e+00> : vector<33x8xf32>
    %37 = tpu.matmul %24, %36, %cst_24 {dimension_numbers = #tpu.dot_dimension_numbers<[1], [0], [0], [1], [0, 0, 1, 1], [], []>} : vector<33x16xbf16>, vector<16x8xbf16>, vector<33x8xf32> -> vector<33x8xf32>
    %c0_25 = arith.constant 0 : index
    %c0_26 = arith.constant 0 : index
    %c0_27 = arith.constant 0 : index
    %38 = vector.load %arg8[%c0_25, %c0_26, %c0_27] : memref<2x1x8xf32, #tpu.memory_space<vmem>>, vector<1x1x8xf32>
    %39 = vector.shape_cast %38 : vector<1x1x8xf32> to vector<1x8xf32>
    %40 = vector.broadcast %39 : vector<1x8xf32> to vector<33x8xf32>
    %41 = arith.addf %37, %40 : vector<33x8xf32>
    %c0_28 = arith.constant 0 : index
    %c0_29 = arith.constant 0 : index
    %c0_30 = arith.constant 0 : index
    %c0_31 = arith.constant 0 : index
    %42 = vector.load %arg11[%c0_28, %c0_29, %c0_30, %c0_31] : memref<1x2x33x8xf32, #tpu.memory_space<vmem>>, vector<1x1x33x8xf32>
    %43 = vector.shape_cast %42 : vector<1x1x33x8xf32> to vector<33x8xf32>
    %44 = vector.shape_cast %41 : vector<33x8xf32> to vector<1x1x33x8xf32>
    tpu.vector_store %arg11[%c0_28, %c0_29, %c0_30, %c0_31], %44 {strides = array<i32>} : memref<1x2x33x8xf32, #tpu.memory_space<vmem>>, vector<1x1x33x8xf32>,
    %c0_32 = arith.constant 0 : index
    %c0_33 = arith.constant 0 : index
    %c0_34 = arith.constant 0 : index
    %45 = vector.load %arg6[%c0_32, %c0_33, %c0_34] : memref<2x16x8xbf16, #tpu.memory_space<vmem>>, vector<1x16x8xbf16>
    %46 = vector.shape_cast %45 : vector<1x16x8xbf16> to vector<16x8xbf16>
    %cst_35 = arith.constant dense<0.000000e+00> : vector<33x8xf32>
    %47 = tpu.matmul %24, %46, %cst_35 {dimension_numbers = #tpu.dot_dimension_numbers<[1], [0], [0], [1], [0, 0, 1, 1], [], []>} : vector<33x16xbf16>, vector<16x8xbf16>, vector<33x8xf32> -> vector<33x8xf32>
    %c0_36 = arith.constant 0 : index
    %c0_37 = arith.constant 0 : index
    %c0_38 = arith.constant 0 : index
    %48 = vector.load %arg9[%c0_36, %c0_37, %c0_38] : memref<2x1x8xf32, #tpu.memory_space<vmem>>, vector<1x1x8xf32>
    %49 = vector.shape_cast %48 : vector<1x1x8xf32> to vector<1x8xf32>
    %50 = vector.broadcast %49 : vector<1x8xf32> to vector<33x8xf32>
    %51 = arith.addf %47, %50 : vector<33x8xf32>
    %c0_39 = arith.constant 0 : index
    %c0_40 = arith.constant 0 : index
    %c0_41 = arith.constant 0 : index
    %c0_42 = arith.constant 0 : index
    %52 = vector.load %arg12[%c0_39, %c0_40, %c0_41, %c0_42] : memref<1x2x33x8xf32, #tpu.memory_space<vmem>>, vector<1x1x33x8xf32>
    %53 = vector.shape_cast %52 : vector<1x1x33x8xf32> to vector<33x8xf32>
    %54 = vector.shape_cast %51 : vector<33x8xf32> to vector<1x1x33x8xf32>
    tpu.vector_store %arg12[%c0_39, %c0_40, %c0_41, %c0_42], %54 {strides = array<i32>} : memref<1x2x33x8xf32, #tpu.memory_space<vmem>>, vector<1x1x33x8xf32>,
    %c1 = arith.constant 1 : index
    %c0_43 = arith.constant 0 : index
    %c0_44 = arith.constant 0 : index
    %55 = vector.load %arg4[%c1, %c0_43, %c0_44] : memref<2x16x8xbf16, #tpu.memory_space<vmem>>, vector<1x16x8xbf16>
    %56 = vector.shape_cast %55 : vector<1x16x8xbf16> to vector<16x8xbf16>
    %cst_45 = arith.constant dense<0.000000e+00> : vector<33x8xf32>
    %57 = tpu.matmul %24, %56, %cst_45 {dimension_numbers = #tpu.dot_dimension_numbers<[1], [0], [0], [1], [0, 0, 1, 1], [], []>} : vector<33x16xbf16>, vector<16x8xbf16>, vector<33x8xf32> -> vector<33x8xf32>
    %c1_46 = arith.constant 1 : index
    %c0_47 = arith.constant 0 : index
    %c0_48 = arith.constant 0 : index
    %58 = vector.load %arg7[%c1_46, %c0_47, %c0_48] : memref<2x1x8xf32, #tpu.memory_space<vmem>>, vector<1x1x8xf32>
    %59 = vector.shape_cast %58 : vector<1x1x8xf32> to vector<1x8xf32>
    %60 = vector.broadcast %59 : vector<1x8xf32> to vector<33x8xf32>
    %61 = arith.addf %57, %60 : vector<33x8xf32>
    %c0_49 = arith.constant 0 : index
    %c1_50 = arith.constant 1 : index
    %c0_51 = arith.constant 0 : index
    %c0_52 = arith.constant 0 : index
    %62 = vector.load %arg10[%c0_49, %c1_50, %c0_51, %c0_52] : memref<1x2x33x8xf32, #tpu.memory_space<vmem>>, vector<1x1x33x8xf32>
    %63 = vector.shape_cast %62 : vector<1x1x33x8xf32> to vector<33x8xf32>
    %64 = vector.shape_cast %61 : vector<33x8xf32> to vector<1x1x33x8xf32>
    tpu.vector_store %arg10[%c0_49, %c1_50, %c0_51, %c0_52], %64 {strides = array<i32>} : memref<1x2x33x8xf32, #tpu.memory_space<vmem>>, vector<1x1x33x8xf32>,
    %c1_53 = arith.constant 1 : index
    %c0_54 = arith.constant 0 : index
    %c0_55 = arith.constant 0 : index
    %65 = vector.load %arg5[%c1_53, %c0_54, %c0_55] : memref<2x16x8xbf16, #tpu.memory_space<vmem>>, vector<1x16x8xbf16>
    %66 = vector.shape_cast %65 : vector<1x16x8xbf16> to vector<16x8xbf16>
    %cst_56 = arith.constant dense<0.000000e+00> : vector<33x8xf32>
    %67 = tpu.matmul %24, %66, %cst_56 {dimension_numbers = #tpu.dot_dimension_numbers<[1], [0], [0], [1], [0, 0, 1, 1], [], []>} : vector<33x16xbf16>, vector<16x8xbf16>, vector<33x8xf32> -> vector<33x8xf32>
    %c1_57 = arith.constant 1 : index
    %c0_58 = arith.constant 0 : index
    %c0_59 = arith.constant 0 : index
    %68 = vector.load %arg8[%c1_57, %c0_58, %c0_59] : memref<2x1x8xf32, #tpu.memory_space<vmem>>, vector<1x1x8xf32>
    %69 = vector.shape_cast %68 : vector<1x1x8xf32> to vector<1x8xf32>
    %70 = vector.broadcast %69 : vector<1x8xf32> to vector<33x8xf32>
    %71 = arith.addf %67, %70 : vector<33x8xf32>
    %c0_60 = arith.constant 0 : index
    %c1_61 = arith.constant 1 : index
    %c0_62 = arith.constant 0 : index
    %c0_63 = arith.constant 0 : index
    %72 = vector.load %arg11[%c0_60, %c1_61, %c0_62, %c0_63] : memref<1x2x33x8xf32, #tpu.memory_space<vmem>>, vector<1x1x33x8xf32>
    %73 = vector.shape_cast %72 : vector<1x1x33x8xf32> to vector<33x8xf32>
    %74 = vector.shape_cast %71 : vector<33x8xf32> to vector<1x1x33x8xf32>
    tpu.vector_store %arg11[%c0_60, %c1_61, %c0_62, %c0_63], %74 {strides = array<i32>} : memref<1x2x33x8xf32, #tpu.memory_space<vmem>>, vector<1x1x33x8xf32>,
    %c1_64 = arith.constant 1 : index
    %c0_65 = arith.constant 0 : index
    %c0_66 = arith.constant 0 : index
    %75 = vector.load %arg6[%c1_64, %c0_65, %c0_66] : memref<2x16x8xbf16, #tpu.memory_space<vmem>>, vector<1x16x8xbf16>
    %76 = vector.shape_cast %75 : vector<1x16x8xbf16> to vector<16x8xbf16>
    %cst_67 = arith.constant dense<0.000000e+00> : vector<33x8xf32>
    %77 = tpu.matmul %24, %76, %cst_67 {dimension_numbers = #tpu.dot_dimension_numbers<[1], [0], [0], [1], [0, 0, 1, 1], [], []>} : vector<33x16xbf16>, vector<16x8xbf16>, vector<33x8xf32> -> vector<33x8xf32>
    %c1_68 = arith.constant 1 : index
    %c0_69 = arith.constant 0 : index
    %c0_70 = arith.constant 0 : index
    %78 = vector.load %arg9[%c1_68, %c0_69, %c0_70] : memref<2x1x8xf32, #tpu.memory_space<vmem>>, vector<1x1x8xf32>
    %79 = vector.shape_cast %78 : vector<1x1x8xf32> to vector<1x8xf32>
    %80 = vector.broadcast %79 : vector<1x8xf32> to vector<33x8xf32>
    %81 = arith.addf %77, %80 : vector<33x8xf32>
    %c0_71 = arith.constant 0 : index
    %c1_72 = arith.constant 1 : index
    %c0_73 = arith.constant 0 : index
    %c0_74 = arith.constant 0 : index
    %82 = vector.load %arg12[%c0_71, %c1_72, %c0_73, %c0_74] : memref<1x2x33x8xf32, #tpu.memory_space<vmem>>, vector<1x1x33x8xf32>
    %83 = vector.shape_cast %82 : vector<1x1x33x8xf32> to vector<33x8xf32>
    %84 = vector.shape_cast %81 : vector<33x8xf32> to vector<1x1x33x8xf32>
    tpu.vector_store %arg12[%c0_71, %c1_72, %c0_73, %c0_74], %84 {strides = array<i32>} : memref<1x2x33x8xf32, #tpu.memory_space<vmem>>, vector<1x1x33x8xf32>,
    return
  }
  func.func @transform_0(%arg0: i32) -> (i32, i32, i32) {
    %c0_i32 = arith.constant 0 : i32
    %c0_i32_0 = arith.constant 0 : i32
    %c0_i32_1 = arith.constant 0 : i32
    return %arg0, %c0_i32, %c0_i32_0 : i32, i32, i32
  }
  func.func @transform_1(%arg0: i32) -> (i32, i32) {
    %c0_i32 = arith.constant 0 : i32
    %c0_i32_0 = arith.constant 0 : i32
    %c0_i32_1 = arith.constant 0 : i32
    return %c0_i32, %c0_i32_0 : i32, i32
  }
  func.func @transform_2(%arg0: i32) -> (i32, i32) {
    %c0_i32 = arith.constant 0 : i32
    %c0_i32_0 = arith.constant 0 : i32
    %c0_i32_1 = arith.constant 0 : i32
    return %c0_i32, %c0_i32_0 : i32, i32
  }
  func.func @transform_3(%arg0: i32) -> (i32, i32, i32) {
    %c0_i32 = arith.constant 0 : i32
    %c0_i32_0 = arith.constant 0 : i32
    %c0_i32_1 = arith.constant 0 : i32
    %c0_i32_2 = arith.constant 0 : i32
    return %c0_i32, %c0_i32_0, %c0_i32_1 : i32, i32, i32
  }
  func.func @transform_4(%arg0: i32) -> (i32, i32, i32) {
    %c0_i32 = arith.constant 0 : i32
    %c0_i32_0 = arith.constant 0 : i32
    %c0_i32_1 = arith.constant 0 : i32
    %c0_i32_2 = arith.constant 0 : i32
    return %c0_i32, %c0_i32_0, %c0_i32_1 : i32, i32, i32
  }
  func.func @transform_5(%arg0: i32) -> (i32, i32, i32) {
    %c0_i32 = arith.constant 0 : i32
    %c0_i32_0 = arith.constant 0 : i32
    %c0_i32_1 = arith.constant 0 : i32
    %c0_i32_2 = arith.constant 0 : i32
    return %c0_i32, %c0_i32_0, %c0_i32_1 : i32, i32, i32
  }
  func.func @transform_6(%arg0: i32) -> (i32, i32, i32) {
    %c0_i32 = arith.constant 0 : i32
    %c0_i32_0 = arith.constant 0 : i32
    %c0_i32_1 = arith.constant 0 : i32
    %c0_i32_2 = arith.constant 0 : i32
    return %c0_i32, %c0_i32_0, %c0_i32_1 : i32, i32, i32
  }
  func.func @transform_7(%arg0: i32) -> (i32, i32, i32) {
    %c0_i32 = arith.constant 0 : i32
    %c0_i32_0 = arith.constant 0 : i32
    %c0_i32_1 = arith.constant 0 : i32
    %c0_i32_2 = arith.constant 0 : i32
    return %c0_i32, %c0_i32_0, %c0_i32_1 : i32, i32, i32
  }
  func.func @transform_8(%arg0: i32) -> (i32, i32, i32) {
    %c0_i32 = arith.constant 0 : i32
    %c0_i32_0 = arith.constant 0 : i32
    %c0_i32_1 = arith.constant 0 : i32
    %c0_i32_2 = arith.constant 0 : i32
    return %c0_i32, %c0_i32_0, %c0_i32_1 : i32, i32, i32
  }
  func.func @transform_9(%arg0: i32) -> (i32, i32, i32, i32) {
    %c0_i32 = arith.constant 0 : i32
    %c0_i32_0 = arith.constant 0 : i32
    %c0_i32_1 = arith.constant 0 : i32
    %c0_i32_2 = arith.constant 0 : i32
    return %arg0, %c0_i32, %c0_i32_0, %c0_i32_1 : i32, i32, i32, i32
  }
  func.func @transform_10(%arg0: i32) -> (i32, i32, i32, i32) {
    %c0_i32 = arith.constant 0 : i32
    %c0_i32_0 = arith.constant 0 : i32
    %c0_i32_1 = arith.constant 0 : i32
    %c0_i32_2 = arith.constant 0 : i32
    return %arg0, %c0_i32, %c0_i32_0, %c0_i32_1 : i32, i32, i32, i32
  }
  func.func @transform_11(%arg0: i32) -> (i32, i32, i32, i32) {
    %c0_i32 = arith.constant 0 : i32
    %c0_i32_0 = arith.constant 0 : i32
    %c0_i32_1 = arith.constant 0 : i32
    %c0_i32_2 = arith.constant 0 : i32
    return %arg0, %c0_i32, %c0_i32_0, %c0_i32_1 : i32, i32, i32, i32
  }
}

module attributes {stable_mosaic.version = 11 : i64} {
  func.func @_attn_block_kernel(%arg0: i32, %arg1: memref<1x2x33x8xf32, #tpu.memory_space<vmem>>, %arg2: memref<1x2x9x8xf32, #tpu.memory_space<vmem>>, %arg3: memref<1x2x9x8xf32, #tpu.memory_space<vmem>>, %arg4: memref<1x8xf32, #tpu.memory_space<vmem>>, %arg5: memref<1x8xf32, #tpu.memory_space<vmem>>, %arg6: memref<1x8xf32, #tpu.memory_space<vmem>>, %arg7: memref<1x8xf32, #tpu.memory_space<vmem>>, %arg8: memref<2x8x16xbf16, #tpu.memory_space<vmem>>, %arg9: memref<1x16xf32, #tpu.memory_space<vmem>>, %arg10: memref<1x33x16xf32, #tpu.memory_space<vmem>>, %arg11: memref<1x16xf32, #tpu.memory_space<vmem>>, %arg12: memref<1x16xf32, #tpu.memory_space<vmem>>, %arg13: memref<16x64xbf16, #tpu.memory_space<vmem>>, %arg14: memref<1x64xf32, #tpu.memory_space<vmem>>, %arg15: memref<64x16xbf16, #tpu.memory_space<vmem>>, %arg16: memref<1x16xf32, #tpu.memory_space<vmem>>, %arg17: memref<1x33x16xf32, #tpu.memory_space<vmem>>) attributes {dimension_semantics = [#tpu.dimension_semantics<parallel>], iteration_bounds = array<i64: 2>, scalar_prefetch = 0 : i64, scratch_operands = 0 : i64, tpu.core_type = #tpu.core_type<tc>, window_params = [{transform_indices = @transform_0, window_bounds = array<i64: 1, 2, 33, 8>}, {transform_indices = @transform_1, window_bounds = array<i64: 1, 2, 9, 8>}, {transform_indices = @transform_2, window_bounds = array<i64: 1, 2, 9, 8>}, {pipeline_mode = #tpu.pipeline_mode<synchronous>, transform_indices = @transform_3, window_bounds = array<i64: 1, 8>}, {pipeline_mode = #tpu.pipeline_mode<synchronous>, transform_indices = @transform_4, window_bounds = array<i64: 1, 8>}, {pipeline_mode = #tpu.pipeline_mode<synchronous>, transform_indices = @transform_5, window_bounds = array<i64: 1, 8>}, {pipeline_mode = #tpu.pipeline_mode<synchronous>, transform_indices = @transform_6, window_bounds = array<i64: 1, 8>}, {pipeline_mode = #tpu.pipeline_mode<synchronous>, transform_indices = @transform_7, window_bounds = array<i64: 2, 8, 16>}, {pipeline_mode = #tpu.pipeline_mode<synchronous>, transform_indices = @transform_8, window_bounds = array<i64: 1, 16>}, {transform_indices = @transform_9, window_bounds = array<i64: 1, 33, 16>}, {pipeline_mode = #tpu.pipeline_mode<synchronous>, transform_indices = @transform_10, window_bounds = array<i64: 1, 16>}, {pipeline_mode = #tpu.pipeline_mode<synchronous>, transform_indices = @transform_11, window_bounds = array<i64: 1, 16>}, {pipeline_mode = #tpu.pipeline_mode<synchronous>, transform_indices = @transform_12, window_bounds = array<i64: 16, 64>}, {pipeline_mode = #tpu.pipeline_mode<synchronous>, transform_indices = @transform_13, window_bounds = array<i64: 1, 64>}, {pipeline_mode = #tpu.pipeline_mode<synchronous>, transform_indices = @transform_14, window_bounds = array<i64: 64, 16>}, {pipeline_mode = #tpu.pipeline_mode<synchronous>, transform_indices = @transform_15, window_bounds = array<i64: 1, 16>}, {transform_indices = @transform_16, window_bounds = array<i64: 1, 33, 16>}]} {
    %c0 = arith.constant 0 : index
    %c0_0 = arith.constant 0 : index
    %c0_1 = arith.constant 0 : index
    %c0_2 = arith.constant 0 : index
    %0 = vector.load %arg1[%c0, %c0_0, %c0_1, %c0_2] : memref<1x2x33x8xf32, #tpu.memory_space<vmem>>, vector<1x2x33x8xf32>
    %1 = vector.shape_cast %0 : vector<1x2x33x8xf32> to vector<2x33x8xf32>
    %c0_3 = arith.constant 0 : index
    %c0_4 = arith.constant 0 : index
    %c0_5 = arith.constant 0 : index
    %c0_6 = arith.constant 0 : index
    %2 = vector.load %arg2[%c0_3, %c0_4, %c0_5, %c0_6] : memref<1x2x9x8xf32, #tpu.memory_space<vmem>>, vector<1x2x9x8xf32>
    %3 = vector.shape_cast %2 : vector<1x2x9x8xf32> to vector<2x9x8xf32>
    %c0_7 = arith.constant 0 : index
    %c0_8 = arith.constant 0 : index
    %c0_9 = arith.constant 0 : index
    %c0_10 = arith.constant 0 : index
    %4 = vector.load %arg3[%c0_7, %c0_8, %c0_9, %c0_10] : memref<1x2x9x8xf32, #tpu.memory_space<vmem>>, vector<1x2x9x8xf32>
    %5 = vector.shape_cast %4 : vector<1x2x9x8xf32> to vector<2x9x8xf32>
    %c0_11 = arith.constant 0 : index
    %c0_12 = arith.constant 0 : index
    %6 = vector.load %arg4[%c0_11, %c0_12] : memref<1x8xf32, #tpu.memory_space<vmem>>, vector<1x8xf32>
    %c0_13 = arith.constant 0 : index
    %c0_14 = arith.constant 0 : index
    %7 = vector.load %arg5[%c0_13, %c0_14] : memref<1x8xf32, #tpu.memory_space<vmem>>, vector<1x8xf32>
    %cst = arith.constant dense<0.000000e+00> : vector<2x9xf32>
    %8 = vector.multi_reduction <add>, %3, %cst [2] : vector<2x9x8xf32> to vector<2x9xf32>
    %9 = vector.shape_cast %8 : vector<2x9xf32> to vector<2x9x1xf32>
    %cst_15 = arith.constant 8.000000e+00 : f32
    %10 = vector.broadcast %cst_15 : f32 to vector<2x9x1xf32>
    %11 = arith.divf %9, %10 : vector<2x9x1xf32>
    %12 = vector.broadcast %11 : vector<2x9x1xf32> to vector<2x9x8xf32>
    %13 = arith.subf %3, %12 : vector<2x9x8xf32>
    %14 = arith.mulf %13, %13 : vector<2x9x8xf32>
    %cst_16 = arith.constant dense<0.000000e+00> : vector<2x9xf32>
    %15 = vector.multi_reduction <add>, %14, %cst_16 [2] : vector<2x9x8xf32> to vector<2x9xf32>
    %16 = vector.shape_cast %15 : vector<2x9xf32> to vector<2x9x1xf32>
    %cst_17 = arith.constant 8.000000e+00 : f32
    %17 = vector.broadcast %cst_17 : f32 to vector<2x9x1xf32>
    %18 = arith.divf %16, %17 : vector<2x9x1xf32>
    %cst_18 = arith.constant 9.99999997E-7 : f32
    %19 = vector.broadcast %cst_18 : f32 to vector<2x9x1xf32>
    %20 = arith.addf %18, %19 : vector<2x9x1xf32>
    %21 = math.rsqrt %20 : vector<2x9x1xf32>
    %22 = vector.broadcast %21 : vector<2x9x1xf32> to vector<2x9x8xf32>
    %23 = arith.mulf %13, %22 : vector<2x9x8xf32>
    %24 = vector.shape_cast %6 : vector<1x8xf32> to vector<1x1x8xf32>
    %25 = vector.broadcast %24 : vector<1x1x8xf32> to vector<2x9x8xf32>
    %26 = arith.mulf %23, %25 : vector<2x9x8xf32>
    %27 = vector.shape_cast %7 : vector<1x8xf32> to vector<1x1x8xf32>
    %28 = vector.broadcast %27 : vector<1x1x8xf32> to vector<2x9x8xf32>
    %29 = arith.addf %26, %28 : vector<2x9x8xf32>
    %c0_19 = arith.constant 0 : index
    %c0_20 = arith.constant 0 : index
    %30 = vector.load %arg6[%c0_19, %c0_20] : memref<1x8xf32, #tpu.memory_space<vmem>>, vector<1x8xf32>
    %c0_21 = arith.constant 0 : index
    %c0_22 = arith.constant 0 : index
    %31 = vector.load %arg7[%c0_21, %c0_22] : memref<1x8xf32, #tpu.memory_space<vmem>>, vector<1x8xf32>
    %cst_23 = arith.constant dense<0.000000e+00> : vector<2x9xf32>
    %32 = vector.multi_reduction <add>, %5, %cst_23 [2] : vector<2x9x8xf32> to vector<2x9xf32>
    %33 = vector.shape_cast %32 : vector<2x9xf32> to vector<2x9x1xf32>
    %cst_24 = arith.constant 8.000000e+00 : f32
    %34 = vector.broadcast %cst_24 : f32 to vector<2x9x1xf32>
    %35 = arith.divf %33, %34 : vector<2x9x1xf32>
    %36 = vector.broadcast %35 : vector<2x9x1xf32> to vector<2x9x8xf32>
    %37 = arith.subf %5, %36 : vector<2x9x8xf32>
    %38 = arith.mulf %37, %37 : vector<2x9x8xf32>
    %cst_25 = arith.constant dense<0.000000e+00> : vector<2x9xf32>
    %39 = vector.multi_reduction <add>, %38, %cst_25 [2] : vector<2x9x8xf32> to vector<2x9xf32>
    %40 = vector.shape_cast %39 : vector<2x9xf32> to vector<2x9x1xf32>
    %cst_26 = arith.constant 8.000000e+00 : f32
    %41 = vector.broadcast %cst_26 : f32 to vector<2x9x1xf32>
    %42 = arith.divf %40, %41 : vector<2x9x1xf32>
    %cst_27 = arith.constant 9.99999997E-7 : f32
    %43 = vector.broadcast %cst_27 : f32 to vector<2x9x1xf32>
    %44 = arith.addf %42, %43 : vector<2x9x1xf32>
    %45 = math.rsqrt %44 : vector<2x9x1xf32>
    %46 = vector.broadcast %45 : vector<2x9x1xf32> to vector<2x9x8xf32>
    %47 = arith.mulf %37, %46 : vector<2x9x8xf32>
    %48 = vector.shape_cast %30 : vector<1x8xf32> to vector<1x1x8xf32>
    %49 = vector.broadcast %48 : vector<1x1x8xf32> to vector<2x9x8xf32>
    %50 = arith.mulf %47, %49 : vector<2x9x8xf32>
    %51 = vector.shape_cast %31 : vector<1x8xf32> to vector<1x1x8xf32>
    %52 = vector.broadcast %51 : vector<1x1x8xf32> to vector<2x9x8xf32>
    %53 = arith.addf %50, %52 : vector<2x9x8xf32>
    %cst_28 = arith.constant 0.353553385 : f32
    %54 = vector.broadcast %cst_28 : f32 to vector<2x33x8xf32>
    %55 = arith.mulf %1, %54 : vector<2x33x8xf32>
    %56 = arith.truncf %55 : vector<2x33x8xf32> to vector<2x33x8xbf16>
    %57 = arith.truncf %29 : vector<2x9x8xf32> to vector<2x9x8xbf16>
    "tpu.trace_start"() <{level = 10 : i32, message = "hqd,hkd->hqk"}> : () -> ()
    %cst_29 = arith.constant dense<0.000000e+00> : vector<2x33x9xf32>
    %58 = tpu.matmul %56, %57, %cst_29 {dimension_numbers = #tpu.dot_dimension_numbers<[2], [2], [1], [1], [0, 0, 0, 1, 1, 1], [0], [0]>} : vector<2x33x8xbf16>, vector<2x9x8xbf16>, vector<2x33x9xf32> -> vector<2x33x9xf32>
    "tpu.trace_stop"() : () -> ()
    %cst_30 = arith.constant dense<0xFF800000> : vector<2x33xf32>
    %59 = vector.multi_reduction <maximumf>, %58, %cst_30 [2] : vector<2x33x9xf32> to vector<2x33xf32>
    %60 = vector.shape_cast %59 : vector<2x33xf32> to vector<2x33x1xf32>
    %61 = vector.broadcast %60 : vector<2x33x1xf32> to vector<2x33x9xf32>
    %62 = arith.subf %58, %61 : vector<2x33x9xf32>
    %63 = math.exp %62 : vector<2x33x9xf32>
    %cst_31 = arith.constant dense<0.000000e+00> : vector<2x33xf32>
    %64 = vector.multi_reduction <add>, %63, %cst_31 [2] : vector<2x33x9xf32> to vector<2x33xf32>
    %65 = vector.shape_cast %64 : vector<2x33xf32> to vector<2x33x1xf32>
    %66 = tpu.reciprocal %65 {approx = true} : vector<2x33x1xf32> -> vector<2x33x1xf32>
    %67 = vector.broadcast %66 : vector<2x33x1xf32> to vector<2x33x9xf32>
    %68 = arith.mulf %63, %67 : vector<2x33x9xf32>
    %69 = arith.truncf %68 : vector<2x33x9xf32> to vector<2x33x9xbf16>
    %70 = arith.truncf %53 : vector<2x9x8xf32> to vector<2x9x8xbf16>
    "tpu.trace_start"() <{level = 10 : i32, message = "hqk,hkd->hqd"}> : () -> ()
    %cst_32 = arith.constant dense<0.000000e+00> : vector<2x33x8xf32>
    %71 = tpu.matmul %69, %70, %cst_32 {dimension_numbers = #tpu.dot_dimension_numbers<[2], [1], [1], [2], [0, 0, 0, 1, 1, 2], [0], [0]>} : vector<2x33x9xbf16>, vector<2x9x8xbf16>, vector<2x33x8xf32> -> vector<2x33x8xf32>
    "tpu.trace_stop"() : () -> ()
    %72 = arith.addf %71, %1 : vector<2x33x8xf32>
    %73 = vector.extract_strided_slice %72 {offsets = [0, 0, 0], sizes = [1, 33, 8], strides = [1, 1, 1]} : vector<2x33x8xf32> to vector<1x33x8xf32>
    %74 = vector.shape_cast %73 : vector<1x33x8xf32> to vector<33x8xf32>
    %75 = arith.truncf %74 : vector<33x8xf32> to vector<33x8xbf16>
    %c0_33 = arith.constant 0 : index
    %c0_34 = arith.constant 0 : index
    %c0_35 = arith.constant 0 : index
    %76 = vector.load %arg8[%c0_33, %c0_34, %c0_35] : memref<2x8x16xbf16, #tpu.memory_space<vmem>>, vector<1x8x16xbf16>
    %77 = vector.shape_cast %76 : vector<1x8x16xbf16> to vector<8x16xbf16>
    %cst_36 = arith.constant dense<0.000000e+00> : vector<33x16xf32>
    %78 = tpu.matmul %75, %77, %cst_36 {dimension_numbers = #tpu.dot_dimension_numbers<[1], [0], [0], [1], [0, 0, 1, 1], [], []>} : vector<33x8xbf16>, vector<8x16xbf16>, vector<33x16xf32> -> vector<33x16xf32>
    %79 = vector.extract_strided_slice %72 {offsets = [1, 0, 0], sizes = [1, 33, 8], strides = [1, 1, 1]} : vector<2x33x8xf32> to vector<1x33x8xf32>
    %80 = vector.shape_cast %79 : vector<1x33x8xf32> to vector<33x8xf32>
    %81 = arith.truncf %80 : vector<33x8xf32> to vector<33x8xbf16>
    %c1 = arith.constant 1 : index
    %c0_37 = arith.constant 0 : index
    %c0_38 = arith.constant 0 : index
    %82 = vector.load %arg8[%c1, %c0_37, %c0_38] : memref<2x8x16xbf16, #tpu.memory_space<vmem>>, vector<1x8x16xbf16>
    %83 = vector.shape_cast %82 : vector<1x8x16xbf16> to vector<8x16xbf16>
    %cst_39 = arith.constant dense<0.000000e+00> : vector<33x16xf32>
    %84 = tpu.matmul %81, %83, %cst_39 {dimension_numbers = #tpu.dot_dimension_numbers<[1], [0], [0], [1], [0, 0, 1, 1], [], []>} : vector<33x8xbf16>, vector<8x16xbf16>, vector<33x16xf32> -> vector<33x16xf32>
    %85 = arith.addf %78, %84 : vector<33x16xf32>
    %c0_40 = arith.constant 0 : index
    %c0_41 = arith.constant 0 : index
    %86 = vector.load %arg9[%c0_40, %c0_41] : memref<1x16xf32, #tpu.memory_space<vmem>>, vector<1x16xf32>
    %87 = vector.broadcast %86 : vector<1x16xf32> to vector<33x16xf32>
    %88 = arith.addf %85, %87 : vector<33x16xf32>
    %c0_42 = arith.constant 0 : index
    %c0_43 = arith.constant 0 : index
    %c0_44 = arith.constant 0 : index
    %89 = vector.load %arg10[%c0_42, %c0_43, %c0_44] : memref<1x33x16xf32, #tpu.memory_space<vmem>>, vector<1x33x16xf32>
    %90 = vector.shape_cast %89 : vector<1x33x16xf32> to vector<33x16xf32>
    %91 = arith.addf %88, %90 : vector<33x16xf32>
    %c0_45 = arith.constant 0 : index
    %c0_46 = arith.constant 0 : index
    %92 = vector.load %arg11[%c0_45, %c0_46] : memref<1x16xf32, #tpu.memory_space<vmem>>, vector<1x16xf32>
    %c0_47 = arith.constant 0 : index
    %c0_48 = arith.constant 0 : index
    %93 = vector.load %arg12[%c0_47, %c0_48] : memref<1x16xf32, #tpu.memory_space<vmem>>, vector<1x16xf32>
    %cst_49 = arith.constant dense<0.000000e+00> : vector<33xf32>
    %94 = vector.multi_reduction <add>, %91, %cst_49 [1] : vector<33x16xf32> to vector<33xf32>
    %95 = vector.shape_cast %94 : vector<33xf32> to vector<33x1xf32>
    %cst_50 = arith.constant 1.600000e+01 : f32
    %96 = vector.broadcast %cst_50 : f32 to vector<33x1xf32>
    %97 = arith.divf %95, %96 : vector<33x1xf32>
    %98 = vector.broadcast %97 : vector<33x1xf32> to vector<33x16xf32>
    %99 = arith.subf %91, %98 : vector<33x16xf32>
    %100 = arith.mulf %99, %99 : vector<33x16xf32>
    %cst_51 = arith.constant dense<0.000000e+00> : vector<33xf32>
    %101 = vector.multi_reduction <add>, %100, %cst_51 [1] : vector<33x16xf32> to vector<33xf32>
    %102 = vector.shape_cast %101 : vector<33xf32> to vector<33x1xf32>
    %cst_52 = arith.constant 1.600000e+01 : f32
    %103 = vector.broadcast %cst_52 : f32 to vector<33x1xf32>
    %104 = arith.divf %102, %103 : vector<33x1xf32>
    %cst_53 = arith.constant 9.99999997E-7 : f32
    %105 = vector.broadcast %cst_53 : f32 to vector<33x1xf32>
    %106 = arith.addf %104, %105 : vector<33x1xf32>
    %107 = math.rsqrt %106 : vector<33x1xf32>
    %108 = vector.broadcast %107 : vector<33x1xf32> to vector<33x16xf32>
    %109 = arith.mulf %99, %108 : vector<33x16xf32>
    %110 = vector.broadcast %92 : vector<1x16xf32> to vector<33x16xf32>
    %111 = arith.mulf %109, %110 : vector<33x16xf32>
    %112 = vector.broadcast %93 : vector<1x16xf32> to vector<33x16xf32>
    %113 = arith.addf %111, %112 : vector<33x16xf32>
    %114 = arith.truncf %113 : vector<33x16xf32> to vector<33x16xbf16>
    %c0_54 = arith.constant 0 : index
    %c0_55 = arith.constant 0 : index
    %115 = vector.load %arg13[%c0_54, %c0_55] : memref<16x64xbf16, #tpu.memory_space<vmem>>, vector<16x64xbf16>
    %cst_56 = arith.constant dense<0.000000e+00> : vector<33x64xf32>
    %116 = tpu.matmul %114, %115, %cst_56 {dimension_numbers = #tpu.dot_dimension_numbers<[1], [0], [0], [1], [0, 0, 1, 1], [], []>} : vector<33x16xbf16>, vector<16x64xbf16>, vector<33x64xf32> -> vector<33x64xf32>
    %c0_57 = arith.constant 0 : index
    %c0_58 = arith.constant 0 : index
    %117 = vector.load %arg14[%c0_57, %c0_58] : memref<1x64xf32, #tpu.memory_space<vmem>>, vector<1x64xf32>
    %118 = vector.broadcast %117 : vector<1x64xf32> to vector<33x64xf32>
    %119 = arith.addf %116, %118 : vector<33x64xf32>
    %cst_59 = arith.constant 5.000000e-01 : f32
    %120 = vector.broadcast %cst_59 : f32 to vector<33x64xf32>
    %121 = arith.mulf %120, %119 : vector<33x64xf32>
    %cst_60 = arith.constant 0.707106769 : f32
    %122 = vector.broadcast %cst_60 : f32 to vector<33x64xf32>
    %123 = arith.mulf %119, %122 : vector<33x64xf32>
    %124 = math.absf %123 : vector<33x64xf32>
    %cst_61 = arith.constant 0.327591091 : f32
    %125 = vector.broadcast %cst_61 : f32 to vector<33x64xf32>
    %126 = arith.mulf %125, %124 : vector<33x64xf32>
    %cst_62 = arith.constant 1.000000e+00 : f32
    %127 = vector.broadcast %cst_62 : f32 to vector<33x64xf32>
    %128 = arith.addf %127, %126 : vector<33x64xf32>
    %129 = tpu.reciprocal %128 {approx = true} : vector<33x64xf32> -> vector<33x64xf32>
    %cst_63 = arith.constant 1.06140542 : f32
    %130 = vector.broadcast %cst_63 : f32 to vector<33x64xf32>
    %131 = arith.mulf %130, %129 : vector<33x64xf32>
    %cst_64 = arith.constant -1.45315206 : f32
    %132 = vector.broadcast %cst_64 : f32 to vector<33x64xf32>
    %133 = arith.addf %131, %132 : vector<33x64xf32>
    %134 = arith.mulf %133, %129 : vector<33x64xf32>
    %cst_65 = arith.constant 1.42141378 : f32
    %135 = vector.broadcast %cst_65 : f32 to vector<33x64xf32>
    %136 = arith.addf %134, %135 : vector<33x64xf32>
    %137 = arith.mulf %136, %129 : vector<33x64xf32>
    %cst_66 = arith.constant -0.284496725 : f32
    %138 = vector.broadcast %cst_66 : f32 to vector<33x64xf32>
    %139 = arith.addf %137, %138 : vector<33x64xf32>
    %140 = arith.mulf %139, %129 : vector<33x64xf32>
    %cst_67 = arith.constant 0.254829586 : f32
    %141 = vector.broadcast %cst_67 : f32 to vector<33x64xf32>
    %142 = arith.addf %140, %141 : vector<33x64xf32>
    %143 = arith.mulf %142, %129 : vector<33x64xf32>
    %cst_68 = arith.constant 0.000000e+00 : f32
    %144 = vector.broadcast %cst_68 : f32 to vector<33x64xf32>
    %145 = arith.subf %144, %124 : vector<33x64xf32>
    %146 = arith.mulf %145, %124 : vector<33x64xf32>
    %147 = math.exp %146 : vector<33x64xf32>
    %148 = arith.mulf %143, %147 : vector<33x64xf32>
    %cst_69 = arith.constant 1.000000e+00 : f32
    %149 = vector.broadcast %cst_69 : f32 to vector<33x64xf32>
    %150 = arith.subf %149, %148 : vector<33x64xf32>
    %cst_70 = arith.constant 0.000000e+00 : f32
    %151 = vector.broadcast %cst_70 : f32 to vector<33x64xf32>
    %152 = arith.cmpf olt, %123, %151 : vector<33x64xf32>
    %cst_71 = arith.constant 0.000000e+00 : f32
    %153 = vector.broadcast %cst_71 : f32 to vector<33x64xf32>
    %154 = arith.subf %153, %150 : vector<33x64xf32>
    %155 = arith.select %152, %154, %150 : vector<33x64xi1>, vector<33x64xf32>
    %cst_72 = arith.constant 1.000000e+00 : f32
    %156 = vector.broadcast %cst_72 : f32 to vector<33x64xf32>
    %157 = arith.addf %156, %155 : vector<33x64xf32>
    %158 = arith.mulf %121, %157 : vector<33x64xf32>
    %159 = arith.truncf %158 : vector<33x64xf32> to vector<33x64xbf16>
    %c0_73 = arith.constant 0 : index
    %c0_74 = arith.constant 0 : index
    %160 = vector.load %arg15[%c0_73, %c0_74] : memref<64x16xbf16, #tpu.memory_space<vmem>>, vector<64x16xbf16>
    %cst_75 = arith.constant dense<0.000000e+00> : vector<33x16xf32>
    %161 = tpu.matmul %159, %160, %cst_75 {dimension_numbers = #tpu.dot_dimension_numbers<[1], [0], [0], [1], [0, 0, 1, 1], [], []>} : vector<33x64xbf16>, vector<64x16xbf16>, vector<33x16xf32> -> vector<33x16xf32>
    %c0_76 = arith.constant 0 : index
    %c0_77 = arith.constant 0 : index
    %162 = vector.load %arg16[%c0_76, %c0_77] : memref<1x16xf32, #tpu.memory_space<vmem>>, vector<1x16xf32>
    %163 = vector.broadcast %162 : vector<1x16xf32> to vector<33x16xf32>
    %164 = arith.addf %161, %163 : vector<33x16xf32>
    %165 = arith.addf %164, %91 : vector<33x16xf32>
    %c0_78 = arith.constant 0 : index
    %c0_79 = arith.constant 0 : index
    %c0_80 = arith.constant 0 : index
    %166 = vector.load %arg17[%c0_78, %c0_79, %c0_80] : memref<1x33x16xf32, #tpu.memory_space<vmem>>, vector<1x33x16xf32>
    %167 = vector.shape_cast %166 : vector<1x33x16xf32> to vector<33x16xf32>
    %168 = vector.shape_cast %165 : vector<33x16xf32> to vector<1x33x16xf32>
    tpu.vector_store %arg17[%c0_78, %c0_79, %c0_80], %168 {strides = array<i32>} : memref<1x33x16xf32, #tpu.memory_space<vmem>>, vector<1x33x16xf32>,
    return
  }
  func.func @transform_0(%arg0: i32) -> (i32, i32, i32, i32) {
    %c0_i32 = arith.constant 0 : i32
    %c0_i32_0 = arith.constant 0 : i32
    %c0_i32_1 = arith.constant 0 : i32
    %c0_i32_2 = arith.constant 0 : i32
    return %arg0, %c0_i32, %c0_i32_0, %c0_i32_1 : i32, i32, i32, i32
  }
  func.func @transform_1(%arg0: i32) -> (i32, i32, i32, i32) {
    %c0_i32 = arith.constant 0 : i32
    %c0_i32_0 = arith.constant 0 : i32
    %c0_i32_1 = arith.constant 0 : i32
    %c0_i32_2 = arith.constant 0 : i32
    return %arg0, %c0_i32, %c0_i32_0, %c0_i32_1 : i32, i32, i32, i32
  }
  func.func @transform_2(%arg0: i32) -> (i32, i32, i32, i32) {
    %c0_i32 = arith.constant 0 : i32
    %c0_i32_0 = arith.constant 0 : i32
    %c0_i32_1 = arith.constant 0 : i32
    %c0_i32_2 = arith.constant 0 : i32
    return %arg0, %c0_i32, %c0_i32_0, %c0_i32_1 : i32, i32, i32, i32
  }
  func.func @transform_3(%arg0: i32) -> (i32, i32) {
    %c0_i32 = arith.constant 0 : i32
    %c0_i32_0 = arith.constant 0 : i32
    %c0_i32_1 = arith.constant 0 : i32
    return %c0_i32, %c0_i32_0 : i32, i32
  }
  func.func @transform_4(%arg0: i32) -> (i32, i32) {
    %c0_i32 = arith.constant 0 : i32
    %c0_i32_0 = arith.constant 0 : i32
    %c0_i32_1 = arith.constant 0 : i32
    return %c0_i32, %c0_i32_0 : i32, i32
  }
  func.func @transform_5(%arg0: i32) -> (i32, i32) {
    %c0_i32 = arith.constant 0 : i32
    %c0_i32_0 = arith.constant 0 : i32
    %c0_i32_1 = arith.constant 0 : i32
    return %c0_i32, %c0_i32_0 : i32, i32
  }
  func.func @transform_6(%arg0: i32) -> (i32, i32) {
    %c0_i32 = arith.constant 0 : i32
    %c0_i32_0 = arith.constant 0 : i32
    %c0_i32_1 = arith.constant 0 : i32
    return %c0_i32, %c0_i32_0 : i32, i32
  }
  func.func @transform_7(%arg0: i32) -> (i32, i32, i32) {
    %c0_i32 = arith.constant 0 : i32
    %c0_i32_0 = arith.constant 0 : i32
    %c0_i32_1 = arith.constant 0 : i32
    %c0_i32_2 = arith.constant 0 : i32
    return %c0_i32, %c0_i32_0, %c0_i32_1 : i32, i32, i32
  }
  func.func @transform_8(%arg0: i32) -> (i32, i32) {
    %c0_i32 = arith.constant 0 : i32
    %c0_i32_0 = arith.constant 0 : i32
    %c0_i32_1 = arith.constant 0 : i32
    return %c0_i32, %c0_i32_0 : i32, i32
  }
  func.func @transform_9(%arg0: i32) -> (i32, i32, i32) {
    %c0_i32 = arith.constant 0 : i32
    %c0_i32_0 = arith.constant 0 : i32
    %c0_i32_1 = arith.constant 0 : i32
    return %arg0, %c0_i32, %c0_i32_0 : i32, i32, i32
  }
  func.func @transform_10(%arg0: i32) -> (i32, i32) {
    %c0_i32 = arith.constant 0 : i32
    %c0_i32_0 = arith.constant 0 : i32
    %c0_i32_1 = arith.constant 0 : i32
    return %c0_i32, %c0_i32_0 : i32, i32
  }
  func.func @transform_11(%arg0: i32) -> (i32, i32) {
    %c0_i32 = arith.constant 0 : i32
    %c0_i32_0 = arith.constant 0 : i32
    %c0_i32_1 = arith.constant 0 : i32
    return %c0_i32, %c0_i32_0 : i32, i32
  }
  func.func @transform_12(%arg0: i32) -> (i32, i32) {
    %c0_i32 = arith.constant 0 : i32
    %c0_i32_0 = arith.constant 0 : i32
    %c0_i32_1 = arith.constant 0 : i32
    return %c0_i32, %c0_i32_0 : i32, i32
  }
  func.func @transform_13(%arg0: i32) -> (i32, i32) {
    %c0_i32 = arith.constant 0 : i32
    %c0_i32_0 = arith.constant 0 : i32
    %c0_i32_1 = arith.constant 0 : i32
    return %c0_i32, %c0_i32_0 : i32, i32
  }
  func.func @transform_14(%arg0: i32) -> (i32, i32) {
    %c0_i32 = arith.constant 0 : i32
    %c0_i32_0 = arith.constant 0 : i32
    %c0_i32_1 = arith.constant 0 : i32
    return %c0_i32, %c0_i32_0 : i32, i32
  }
  func.func @transform_15(%arg0: i32) -> (i32, i32) {
    %c0_i32 = arith.constant 0 : i32
    %c0_i32_0 = arith.constant 0 : i32
    %c0_i32_1 = arith.constant 0 : i32
    return %c0_i32, %c0_i32_0 : i32, i32
  }
  func.func @transform_16(%arg0: i32) -> (i32, i32, i32) {
    %c0_i32 = arith.constant 0 : i32
    %c0_i32_0 = arith.constant 0 : i32
    %c0_i32_1 = arith.constant 0 : i32
    return %arg0, %c0_i32, %c0_i32_0 : i32, i32, i32
  }
}

module attributes {stable_mosaic.version = 11 : i64} {
  func.func @_attn_block_kernel(%arg0: i32, %arg1: memref<1x2x9x8xf32, #tpu.memory_space<vmem>>, %arg2: memref<1x2x33x8xf32, #tpu.memory_space<vmem>>, %arg3: memref<1x2x33x8xf32, #tpu.memory_space<vmem>>, %arg4: memref<1x8xf32, #tpu.memory_space<vmem>>, %arg5: memref<1x8xf32, #tpu.memory_space<vmem>>, %arg6: memref<1x8xf32, #tpu.memory_space<vmem>>, %arg7: memref<1x8xf32, #tpu.memory_space<vmem>>, %arg8: memref<1x8xf32, #tpu.memory_space<vmem>>, %arg9: memref<1x8xf32, #tpu.memory_space<vmem>>, %arg10: memref<2x8x16xbf16, #tpu.memory_space<vmem>>, %arg11: memref<1x16xf32, #tpu.memory_space<vmem>>, %arg12: memref<1x9x16xf32, #tpu.memory_space<vmem>>, %arg13: memref<1x16xf32, #tpu.memory_space<vmem>>, %arg14: memref<1x16xf32, #tpu.memory_space<vmem>>, %arg15: memref<16x64xbf16, #tpu.memory_space<vmem>>, %arg16: memref<1x64xf32, #tpu.memory_space<vmem>>, %arg17: memref<64x32xbf16, #tpu.memory_space<vmem>>, %arg18: memref<1x32xf32, #tpu.memory_space<vmem>>, %arg19: memref<16x32xbf16, #tpu.memory_space<vmem>>, %arg20: memref<1x32xf32, #tpu.memory_space<vmem>>, %arg21: memref<1x32xf32, #tpu.memory_space<vmem>>, %arg22: memref<1x32xf32, #tpu.memory_space<vmem>>, %arg23: memref<32x128xbf16, #tpu.memory_space<vmem>>, %arg24: memref<1x128xf32, #tpu.memory_space<vmem>>, %arg25: memref<1x1x128xf32, #tpu.memory_space<vmem>>) attributes {dimension_semantics = [#tpu.dimension_semantics<parallel>], iteration_bounds = array<i64: 2>, scalar_prefetch = 0 : i64, scratch_operands = 0 : i64, tpu.core_type = #tpu.core_type<tc>, window_params = [{transform_indices = @transform_0, window_bounds = array<i64: 1, 2, 9, 8>}, {transform_indices = @transform_1, window_bounds = array<i64: 1, 2, 33, 8>}, {transform_indices = @transform_2, window_bounds = array<i64: 1, 2, 33, 8>}, {pipeline_mode = #tpu.pipeline_mode<synchronous>, transform_indices = @transform_3, window_bounds = array<i64: 1, 8>}, {pipeline_mode = #tpu.pipeline_mode<synchronous>, transform_indices = @transform_4, window_bounds = array<i64: 1, 8>}, {pipeline_mode = #tpu.pipeline_mode<synchronous>, transform_indices = @transform_5, window_bounds = array<i64: 1, 8>}, {pipeline_mode = #tpu.pipeline_mode<synchronous>, transform_indices = @transform_6, window_bounds = array<i64: 1, 8>}, {pipeline_mode = #tpu.pipeline_mode<synchronous>, transform_indices = @transform_7, window_bounds = array<i64: 1, 8>}, {pipeline_mode = #tpu.pipeline_mode<synchronous>, transform_indices = @transform_8, window_bounds = array<i64: 1, 8>}, {pipeline_mode = #tpu.pipeline_mode<synchronous>, transform_indices = @transform_9, window_bounds = array<i64: 2, 8, 16>}, {pipeline_mode = #tpu.pipeline_mode<synchronous>, transform_indices = @transform_10, window_bounds = array<i64: 1, 16>}, {transform_indices = @transform_11, window_bounds = array<i64: 1, 9, 16>}, {pipeline_mode = #tpu.pipeline_mode<synchronous>, transform_indices = @transform_12, window_bounds = array<i64: 1, 16>}, {pipeline_mode = #tpu.pipeline_mode<synchronous>, transform_indices = @transform_13, window_bounds = array<i64: 1, 16>}, {pipeline_mode = #tpu.pipeline_mode<synchronous>, transform_indices = @transform_14, window_bounds = array<i64: 16, 64>}, {pipeline_mode = #tpu.pipeline_mode<synchronous>, transform_indices = @transform_15, window_bounds = array<i64: 1, 64>}, {pipeline_mode = #tpu.pipeline_mode<synchronous>, transform_indices = @transform_16, window_bounds = array<i64: 64, 32>}, {pipeline_mode = #tpu.pipeline_mode<synchronous>, transform_indices = @transform_17, window_bounds = array<i64: 1, 32>}, {pipeline_mode = #tpu.pipeline_mode<synchronous>, transform_indices = @transform_18, window_bounds = array<i64: 16, 32>}, {pipeline_mode = #tpu.pipeline_mode<synchronous>, transform_indices = @transform_19, window_bounds = array<i64: 1, 32>}, {pipeline_mode = #tpu.pipeline_mode<synchronous>, transform_indices = @transform_20, window_bounds = array<i64: 1, 32>}, {pipeline_mode = #tpu.pipeline_mode<synchronous>, transform_indices = @transform_21, window_bounds = array<i64: 1, 32>}, {pipeline_mode = #tpu.pipeline_mode<synchronous>, transform_indices = @transform_22, window_bounds = array<i64: 32, 128>}, {pipeline_mode = #tpu.pipeline_mode<synchronous>, transform_indices = @transform_23, window_bounds = array<i64: 1, 128>}, {transform_indices = @transform_24, window_bounds = array<i64: 1, 1, 128>}]} {
    %c0 = arith.constant 0 : index
    %c0_0 = arith.constant 0 : index
    %c0_1 = arith.constant 0 : index
    %c0_2 = arith.constant 0 : index
    %0 = vector.load %arg1[%c0, %c0_0, %c0_1, %c0_2] : memref<1x2x9x8xf32, #tpu.memory_space<vmem>>, vector<1x2x9x8xf32>
    %1 = vector.shape_cast %0 : vector<1x2x9x8xf32> to vector<2x9x8xf32>
    %c0_3 = arith.constant 0 : index
    %c0_4 = arith.constant 0 : index
    %c0_5 = arith.constant 0 : index
    %c0_6 = arith.constant 0 : index
    %2 = vector.load %arg2[%c0_3, %c0_4, %c0_5, %c0_6] : memref<1x2x33x8xf32, #tpu.memory_space<vmem>>, vector<1x2x33x8xf32>
    %3 = vector.shape_cast %2 : vector<1x2x33x8xf32> to vector<2x33x8xf32>
    %c0_7 = arith.constant 0 : index
    %c0_8 = arith.constant 0 : index
    %c0_9 = arith.constant 0 : index
    %c0_10 = arith.constant 0 : index
    %4 = vector.load %arg3[%c0_7, %c0_8, %c0_9, %c0_10] : memref<1x2x33x8xf32, #tpu.memory_space<vmem>>, vector<1x2x33x8xf32>
    %5 = vector.shape_cast %4 : vector<1x2x33x8xf32> to vector<2x33x8xf32>
    %c0_11 = arith.constant 0 : index
    %c0_12 = arith.constant 0 : index
    %6 = vector.load %arg4[%c0_11, %c0_12] : memref<1x8xf32, #tpu.memory_space<vmem>>, vector<1x8xf32>
    %c0_13 = arith.constant 0 : index
    %c0_14 = arith.constant 0 : index
    %7 = vector.load %arg5[%c0_13, %c0_14] : memref<1x8xf32, #tpu.memory_space<vmem>>, vector<1x8xf32>
    %cst = arith.constant dense<0.000000e+00> : vector<2x9xf32>
    %8 = vector.multi_reduction <add>, %1, %cst [2] : vector<2x9x8xf32> to vector<2x9xf32>
    %9 = vector.shape_cast %8 : vector<2x9xf32> to vector<2x9x1xf32>
    %cst_15 = arith.constant 8.000000e+00 : f32
    %10 = vector.broadcast %cst_15 : f32 to vector<2x9x1xf32>
    %11 = arith.divf %9, %10 : vector<2x9x1xf32>
    %12 = vector.broadcast %11 : vector<2x9x1xf32> to vector<2x9x8xf32>
    %13 = arith.subf %1, %12 : vector<2x9x8xf32>
    %14 = arith.mulf %13, %13 : vector<2x9x8xf32>
    %cst_16 = arith.constant dense<0.000000e+00> : vector<2x9xf32>
    %15 = vector.multi_reduction <add>, %14, %cst_16 [2] : vector<2x9x8xf32> to vector<2x9xf32>
    %16 = vector.shape_cast %15 : vector<2x9xf32> to vector<2x9x1xf32>
    %cst_17 = arith.constant 8.000000e+00 : f32
    %17 = vector.broadcast %cst_17 : f32 to vector<2x9x1xf32>
    %18 = arith.divf %16, %17 : vector<2x9x1xf32>
    %cst_18 = arith.constant 9.99999997E-7 : f32
    %19 = vector.broadcast %cst_18 : f32 to vector<2x9x1xf32>
    %20 = arith.addf %18, %19 : vector<2x9x1xf32>
    %21 = math.rsqrt %20 : vector<2x9x1xf32>
    %22 = vector.broadcast %21 : vector<2x9x1xf32> to vector<2x9x8xf32>
    %23 = arith.mulf %13, %22 : vector<2x9x8xf32>
    %24 = vector.shape_cast %6 : vector<1x8xf32> to vector<1x1x8xf32>
    %25 = vector.broadcast %24 : vector<1x1x8xf32> to vector<2x9x8xf32>
    %26 = arith.mulf %23, %25 : vector<2x9x8xf32>
    %27 = vector.shape_cast %7 : vector<1x8xf32> to vector<1x1x8xf32>
    %28 = vector.broadcast %27 : vector<1x1x8xf32> to vector<2x9x8xf32>
    %29 = arith.addf %26, %28 : vector<2x9x8xf32>
    %c0_19 = arith.constant 0 : index
    %c0_20 = arith.constant 0 : index
    %30 = vector.load %arg6[%c0_19, %c0_20] : memref<1x8xf32, #tpu.memory_space<vmem>>, vector<1x8xf32>
    %c0_21 = arith.constant 0 : index
    %c0_22 = arith.constant 0 : index
    %31 = vector.load %arg7[%c0_21, %c0_22] : memref<1x8xf32, #tpu.memory_space<vmem>>, vector<1x8xf32>
    %cst_23 = arith.constant dense<0.000000e+00> : vector<2x33xf32>
    %32 = vector.multi_reduction <add>, %3, %cst_23 [2] : vector<2x33x8xf32> to vector<2x33xf32>
    %33 = vector.shape_cast %32 : vector<2x33xf32> to vector<2x33x1xf32>
    %cst_24 = arith.constant 8.000000e+00 : f32
    %34 = vector.broadcast %cst_24 : f32 to vector<2x33x1xf32>
    %35 = arith.divf %33, %34 : vector<2x33x1xf32>
    %36 = vector.broadcast %35 : vector<2x33x1xf32> to vector<2x33x8xf32>
    %37 = arith.subf %3, %36 : vector<2x33x8xf32>
    %38 = arith.mulf %37, %37 : vector<2x33x8xf32>
    %cst_25 = arith.constant dense<0.000000e+00> : vector<2x33xf32>
    %39 = vector.multi_reduction <add>, %38, %cst_25 [2] : vector<2x33x8xf32> to vector<2x33xf32>
    %40 = vector.shape_cast %39 : vector<2x33xf32> to vector<2x33x1xf32>
    %cst_26 = arith.constant 8.000000e+00 : f32
    %41 = vector.broadcast %cst_26 : f32 to vector<2x33x1xf32>
    %42 = arith.divf %40, %41 : vector<2x33x1xf32>
    %cst_27 = arith.constant 9.99999997E-7 : f32
    %43 = vector.broadcast %cst_27 : f32 to vector<2x33x1xf32>
    %44 = arith.addf %42, %43 : vector<2x33x1xf32>
    %45 = math.rsqrt %44 : vector<2x33x1xf32>
    %46 = vector.broadcast %45 : vector<2x33x1xf32> to vector<2x33x8xf32>
    %47 = arith.mulf %37, %46 : vector<2x33x8xf32>
    %48 = vector.shape_cast %30 : vector<1x8xf32> to vector<1x1x8xf32>
    %49 = vector.broadcast %48 : vector<1x1x8xf32> to vector<2x33x8xf32>
    %50 = arith.mulf %47, %49 : vector<2x33x8xf32>
    %51 = vector.shape_cast %31 : vector<1x8xf32> to vector<1x1x8xf32>
    %52 = vector.broadcast %51 : vector<1x1x8xf32> to vector<2x33x8xf32>
    %53 = arith.addf %50, %52 : vector<2x33x8xf32>
    %c0_28 = arith.constant 0 : index
    %c0_29 = arith.constant 0 : index
    %54 = vector.load %arg8[%c0_28, %c0_29] : memref<1x8xf32, #tpu.memory_space<vmem>>, vector<1x8xf32>
    %c0_30 = arith.constant 0 : index
    %c0_31 = arith.constant 0 : index
    %55 = vector.load %arg9[%c0_30, %c0_31] : memref<1x8xf32, #tpu.memory_space<vmem>>, vector<1x8xf32>
    %cst_32 = arith.constant dense<0.000000e+00> : vector<2x33xf32>
    %56 = vector.multi_reduction <add>, %5, %cst_32 [2] : vector<2x33x8xf32> to vector<2x33xf32>
    %57 = vector.shape_cast %56 : vector<2x33xf32> to vector<2x33x1xf32>
    %cst_33 = arith.constant 8.000000e+00 : f32
    %58 = vector.broadcast %cst_33 : f32 to vector<2x33x1xf32>
    %59 = arith.divf %57, %58 : vector<2x33x1xf32>
    %60 = vector.broadcast %59 : vector<2x33x1xf32> to vector<2x33x8xf32>
    %61 = arith.subf %5, %60 : vector<2x33x8xf32>
    %62 = arith.mulf %61, %61 : vector<2x33x8xf32>
    %cst_34 = arith.constant dense<0.000000e+00> : vector<2x33xf32>
    %63 = vector.multi_reduction <add>, %62, %cst_34 [2] : vector<2x33x8xf32> to vector<2x33xf32>
    %64 = vector.shape_cast %63 : vector<2x33xf32> to vector<2x33x1xf32>
    %cst_35 = arith.constant 8.000000e+00 : f32
    %65 = vector.broadcast %cst_35 : f32 to vector<2x33x1xf32>
    %66 = arith.divf %64, %65 : vector<2x33x1xf32>
    %cst_36 = arith.constant 9.99999997E-7 : f32
    %67 = vector.broadcast %cst_36 : f32 to vector<2x33x1xf32>
    %68 = arith.addf %66, %67 : vector<2x33x1xf32>
    %69 = math.rsqrt %68 : vector<2x33x1xf32>
    %70 = vector.broadcast %69 : vector<2x33x1xf32> to vector<2x33x8xf32>
    %71 = arith.mulf %61, %70 : vector<2x33x8xf32>
    %72 = vector.shape_cast %54 : vector<1x8xf32> to vector<1x1x8xf32>
    %73 = vector.broadcast %72 : vector<1x1x8xf32> to vector<2x33x8xf32>
    %74 = arith.mulf %71, %73 : vector<2x33x8xf32>
    %75 = vector.shape_cast %55 : vector<1x8xf32> to vector<1x1x8xf32>
    %76 = vector.broadcast %75 : vector<1x1x8xf32> to vector<2x33x8xf32>
    %77 = arith.addf %74, %76 : vector<2x33x8xf32>
    %cst_37 = arith.constant 0.353553385 : f32
    %78 = vector.broadcast %cst_37 : f32 to vector<2x9x8xf32>
    %79 = arith.mulf %29, %78 : vector<2x9x8xf32>
    %80 = arith.truncf %79 : vector<2x9x8xf32> to vector<2x9x8xbf16>
    %81 = arith.truncf %53 : vector<2x33x8xf32> to vector<2x33x8xbf16>
    "tpu.trace_start"() <{level = 10 : i32, message = "hqd,hkd->hqk"}> : () -> ()
    %cst_38 = arith.constant dense<0.000000e+00> : vector<2x9x33xf32>
    %82 = tpu.matmul %80, %81, %cst_38 {dimension_numbers = #tpu.dot_dimension_numbers<[2], [2], [1], [1], [0, 0, 0, 1, 1, 1], [0], [0]>} : vector<2x9x8xbf16>, vector<2x33x8xbf16>, vector<2x9x33xf32> -> vector<2x9x33xf32>
    "tpu.trace_stop"() : () -> ()
    %cst_39 = arith.constant dense<0xFF800000> : vector<2x9xf32>
    %83 = vector.multi_reduction <maximumf>, %82, %cst_39 [2] : vector<2x9x33xf32> to vector<2x9xf32>
    %84 = vector.shape_cast %83 : vector<2x9xf32> to vector<2x9x1xf32>
    %85 = vector.broadcast %84 : vector<2x9x1xf32> to vector<2x9x33xf32>
    %86 = arith.subf %82, %85 : vector<2x9x33xf32>
    %87 = math.exp %86 : vector<2x9x33xf32>
    %cst_40 = arith.constant dense<0.000000e+00> : vector<2x9xf32>
    %88 = vector.multi_reduction <add>, %87, %cst_40 [2] : vector<2x9x33xf32> to vector<2x9xf32>
    %89 = vector.shape_cast %88 : vector<2x9xf32> to vector<2x9x1xf32>
    %90 = tpu.reciprocal %89 {approx = true} : vector<2x9x1xf32> -> vector<2x9x1xf32>
    %91 = vector.broadcast %90 : vector<2x9x1xf32> to vector<2x9x33xf32>
    %92 = arith.mulf %87, %91 : vector<2x9x33xf32>
    %93 = arith.truncf %92 : vector<2x9x33xf32> to vector<2x9x33xbf16>
    %94 = arith.truncf %77 : vector<2x33x8xf32> to vector<2x33x8xbf16>
    "tpu.trace_start"() <{level = 10 : i32, message = "hqk,hkd->hqd"}> : () -> ()
    %cst_41 = arith.constant dense<0.000000e+00> : vector<2x9x8xf32>
    %95 = tpu.matmul %93, %94, %cst_41 {dimension_numbers = #tpu.dot_dimension_numbers<[2], [1], [1], [2], [0, 0, 0, 1, 1, 2], [0], [0]>} : vector<2x9x33xbf16>, vector<2x33x8xbf16>, vector<2x9x8xf32> -> vector<2x9x8xf32>
    "tpu.trace_stop"() : () -> ()
    %96 = arith.addf %95, %29 : vector<2x9x8xf32>
    %97 = vector.extract_strided_slice %96 {offsets = [0, 0, 0], sizes = [1, 9, 8], strides = [1, 1, 1]} : vector<2x9x8xf32> to vector<1x9x8xf32>
    %98 = vector.shape_cast %97 : vector<1x9x8xf32> to vector<9x8xf32>
    %99 = arith.truncf %98 : vector<9x8xf32> to vector<9x8xbf16>
    %c0_42 = arith.constant 0 : index
    %c0_43 = arith.constant 0 : index
    %c0_44 = arith.constant 0 : index
    %100 = vector.load %arg10[%c0_42, %c0_43, %c0_44] : memref<2x8x16xbf16, #tpu.memory_space<vmem>>, vector<1x8x16xbf16>
    %101 = vector.shape_cast %100 : vector<1x8x16xbf16> to vector<8x16xbf16>
    %cst_45 = arith.constant dense<0.000000e+00> : vector<9x16xf32>
    %102 = tpu.matmul %99, %101, %cst_45 {dimension_numbers = #tpu.dot_dimension_numbers<[1], [0], [0], [1], [0, 0, 1, 1], [], []>} : vector<9x8xbf16>, vector<8x16xbf16>, vector<9x16xf32> -> vector<9x16xf32>
    %103 = vector.extract_strided_slice %96 {offsets = [1, 0, 0], sizes = [1, 9, 8], strides = [1, 1, 1]} : vector<2x9x8xf32> to vector<1x9x8xf32>
    %104 = vector.shape_cast %103 : vector<1x9x8xf32> to vector<9x8xf32>
    %105 = arith.truncf %104 : vector<9x8xf32> to vector<9x8xbf16>
    %c1 = arith.constant 1 : index
    %c0_46 = arith.constant 0 : index
    %c0_47 = arith.constant 0 : index
    %106 = vector.load %arg10[%c1, %c0_46, %c0_47] : memref<2x8x16xbf16, #tpu.memory_space<vmem>>, vector<1x8x16xbf16>
    %107 = vector.shape_cast %106 : vector<1x8x16xbf16> to vector<8x16xbf16>
    %cst_48 = arith.constant dense<0.000000e+00> : vector<9x16xf32>
    %108 = tpu.matmul %105, %107, %cst_48 {dimension_numbers = #tpu.dot_dimension_numbers<[1], [0], [0], [1], [0, 0, 1, 1], [], []>} : vector<9x8xbf16>, vector<8x16xbf16>, vector<9x16xf32> -> vector<9x16xf32>
    %109 = arith.addf %102, %108 : vector<9x16xf32>
    %c0_49 = arith.constant 0 : index
    %c0_50 = arith.constant 0 : index
    %110 = vector.load %arg11[%c0_49, %c0_50] : memref<1x16xf32, #tpu.memory_space<vmem>>, vector<1x16xf32>
    %111 = vector.broadcast %110 : vector<1x16xf32> to vector<9x16xf32>
    %112 = arith.addf %109, %111 : vector<9x16xf32>
    %c0_51 = arith.constant 0 : index
    %c0_52 = arith.constant 0 : index
    %c0_53 = arith.constant 0 : index
    %113 = vector.load %arg12[%c0_51, %c0_52, %c0_53] : memref<1x9x16xf32, #tpu.memory_space<vmem>>, vector<1x9x16xf32>
    %114 = vector.shape_cast %113 : vector<1x9x16xf32> to vector<9x16xf32>
    %115 = arith.addf %112, %114 : vector<9x16xf32>
    %c0_54 = arith.constant 0 : index
    %c0_55 = arith.constant 0 : index
    %116 = vector.load %arg13[%c0_54, %c0_55] : memref<1x16xf32, #tpu.memory_space<vmem>>, vector<1x16xf32>
    %c0_56 = arith.constant 0 : index
    %c0_57 = arith.constant 0 : index
    %117 = vector.load %arg14[%c0_56, %c0_57] : memref<1x16xf32, #tpu.memory_space<vmem>>, vector<1x16xf32>
    %cst_58 = arith.constant dense<0.000000e+00> : vector<9xf32>
    %118 = vector.multi_reduction <add>, %115, %cst_58 [1] : vector<9x16xf32> to vector<9xf32>
    %119 = vector.shape_cast %118 : vector<9xf32> to vector<9x1xf32>
    %cst_59 = arith.constant 1.600000e+01 : f32
    %120 = vector.broadcast %cst_59 : f32 to vector<9x1xf32>
    %121 = arith.divf %119, %120 : vector<9x1xf32>
    %122 = vector.broadcast %121 : vector<9x1xf32> to vector<9x16xf32>
    %123 = arith.subf %115, %122 : vector<9x16xf32>
    %124 = arith.mulf %123, %123 : vector<9x16xf32>
    %cst_60 = arith.constant dense<0.000000e+00> : vector<9xf32>
    %125 = vector.multi_reduction <add>, %124, %cst_60 [1] : vector<9x16xf32> to vector<9xf32>
    %126 = vector.shape_cast %125 : vector<9xf32> to vector<9x1xf32>
    %cst_61 = arith.constant 1.600000e+01 : f32
    %127 = vector.broadcast %cst_61 : f32 to vector<9x1xf32>
    %128 = arith.divf %126, %127 : vector<9x1xf32>
    %cst_62 = arith.constant 9.99999997E-7 : f32
    %129 = vector.broadcast %cst_62 : f32 to vector<9x1xf32>
    %130 = arith.addf %128, %129 : vector<9x1xf32>
    %131 = math.rsqrt %130 : vector<9x1xf32>
    %132 = vector.broadcast %131 : vector<9x1xf32> to vector<9x16xf32>
    %133 = arith.mulf %123, %132 : vector<9x16xf32>
    %134 = vector.broadcast %116 : vector<1x16xf32> to vector<9x16xf32>
    %135 = arith.mulf %133, %134 : vector<9x16xf32>
    %136 = vector.broadcast %117 : vector<1x16xf32> to vector<9x16xf32>
    %137 = arith.addf %135, %136 : vector<9x16xf32>
    %138 = arith.truncf %137 : vector<9x16xf32> to vector<9x16xbf16>
    %c0_63 = arith.constant 0 : index
    %c0_64 = arith.constant 0 : index
    %139 = vector.load %arg15[%c0_63, %c0_64] : memref<16x64xbf16, #tpu.memory_space<vmem>>, vector<16x64xbf16>
    %cst_65 = arith.constant dense<0.000000e+00> : vector<9x64xf32>
    %140 = tpu.matmul %138, %139, %cst_65 {dimension_numbers = #tpu.dot_dimension_numbers<[1], [0], [0], [1], [0, 0, 1, 1], [], []>} : vector<9x16xbf16>, vector<16x64xbf16>, vector<9x64xf32> -> vector<9x64xf32>
    %c0_66 = arith.constant 0 : index
    %c0_67 = arith.constant 0 : index
    %141 = vector.load %arg16[%c0_66, %c0_67] : memref<1x64xf32, #tpu.memory_space<vmem>>, vector<1x64xf32>
    %142 = vector.broadcast %141 : vector<1x64xf32> to vector<9x64xf32>
    %143 = arith.addf %140, %142 : vector<9x64xf32>
    %cst_68 = arith.constant 5.000000e-01 : f32
    %144 = vector.broadcast %cst_68 : f32 to vector<9x64xf32>
    %145 = arith.mulf %144, %143 : vector<9x64xf32>
    %cst_69 = arith.constant 0.707106769 : f32
    %146 = vector.broadcast %cst_69 : f32 to vector<9x64xf32>
    %147 = arith.mulf %143, %146 : vector<9x64xf32>
    %148 = math.absf %147 : vector<9x64xf32>
    %cst_70 = arith.constant 0.327591091 : f32
    %149 = vector.broadcast %cst_70 : f32 to vector<9x64xf32>
    %150 = arith.mulf %149, %148 : vector<9x64xf32>
    %cst_71 = arith.constant 1.000000e+00 : f32
    %151 = vector.broadcast %cst_71 : f32 to vector<9x64xf32>
    %152 = arith.addf %151, %150 : vector<9x64xf32>
    %153 = tpu.reciprocal %152 {approx = true} : vector<9x64xf32> -> vector<9x64xf32>
    %cst_72 = arith.constant 1.06140542 : f32
    %154 = vector.broadcast %cst_72 : f32 to vector<9x64xf32>
    %155 = arith.mulf %154, %153 : vector<9x64xf32>
    %cst_73 = arith.constant -1.45315206 : f32
    %156 = vector.broadcast %cst_73 : f32 to vector<9x64xf32>
    %157 = arith.addf %155, %156 : vector<9x64xf32>
    %158 = arith.mulf %157, %153 : vector<9x64xf32>
    %cst_74 = arith.constant 1.42141378 : f32
    %159 = vector.broadcast %cst_74 : f32 to vector<9x64xf32>
    %160 = arith.addf %158, %159 : vector<9x64xf32>
    %161 = arith.mulf %160, %153 : vector<9x64xf32>
    %cst_75 = arith.constant -0.284496725 : f32
    %162 = vector.broadcast %cst_75 : f32 to vector<9x64xf32>
    %163 = arith.addf %161, %162 : vector<9x64xf32>
    %164 = arith.mulf %163, %153 : vector<9x64xf32>
    %cst_76 = arith.constant 0.254829586 : f32
    %165 = vector.broadcast %cst_76 : f32 to vector<9x64xf32>
    %166 = arith.addf %164, %165 : vector<9x64xf32>
    %167 = arith.mulf %166, %153 : vector<9x64xf32>
    %cst_77 = arith.constant 0.000000e+00 : f32
    %168 = vector.broadcast %cst_77 : f32 to vector<9x64xf32>
    %169 = arith.subf %168, %148 : vector<9x64xf32>
    %170 = arith.mulf %169, %148 : vector<9x64xf32>
    %171 = math.exp %170 : vector<9x64xf32>
    %172 = arith.mulf %167, %171 : vector<9x64xf32>
    %cst_78 = arith.constant 1.000000e+00 : f32
    %173 = vector.broadcast %cst_78 : f32 to vector<9x64xf32>
    %174 = arith.subf %173, %172 : vector<9x64xf32>
    %cst_79 = arith.constant 0.000000e+00 : f32
    %175 = vector.broadcast %cst_79 : f32 to vector<9x64xf32>
    %176 = arith.cmpf olt, %147, %175 : vector<9x64xf32>
    %cst_80 = arith.constant 0.000000e+00 : f32
    %177 = vector.broadcast %cst_80 : f32 to vector<9x64xf32>
    %178 = arith.subf %177, %174 : vector<9x64xf32>
    %179 = arith.select %176, %178, %174 : vector<9x64xi1>, vector<9x64xf32>
    %cst_81 = arith.constant 1.000000e+00 : f32
    %180 = vector.broadcast %cst_81 : f32 to vector<9x64xf32>
    %181 = arith.addf %180, %179 : vector<9x64xf32>
    %182 = arith.mulf %145, %181 : vector<9x64xf32>
    %183 = arith.truncf %182 : vector<9x64xf32> to vector<9x64xbf16>
    %c0_82 = arith.constant 0 : index
    %c0_83 = arith.constant 0 : index
    %184 = vector.load %arg17[%c0_82, %c0_83] : memref<64x32xbf16, #tpu.memory_space<vmem>>, vector<64x32xbf16>
    %cst_84 = arith.constant dense<0.000000e+00> : vector<9x32xf32>
    %185 = tpu.matmul %183, %184, %cst_84 {dimension_numbers = #tpu.dot_dimension_numbers<[1], [0], [0], [1], [0, 0, 1, 1], [], []>} : vector<9x64xbf16>, vector<64x32xbf16>, vector<9x32xf32> -> vector<9x32xf32>
    %c0_85 = arith.constant 0 : index
    %c0_86 = arith.constant 0 : index
    %186 = vector.load %arg18[%c0_85, %c0_86] : memref<1x32xf32, #tpu.memory_space<vmem>>, vector<1x32xf32>
    %187 = vector.broadcast %186 : vector<1x32xf32> to vector<9x32xf32>
    %188 = arith.addf %185, %187 : vector<9x32xf32>
    %c0_87 = arith.constant 0 : index
    %c0_88 = arith.constant 0 : index
    %189 = vector.load %arg19[%c0_87, %c0_88] : memref<16x32xbf16, #tpu.memory_space<vmem>>, vector<16x32xbf16>
    %cst_89 = arith.constant dense<0.000000e+00> : vector<9x32xf32>
    %190 = tpu.matmul %138, %189, %cst_89 {dimension_numbers = #tpu.dot_dimension_numbers<[1], [0], [0], [1], [0, 0, 1, 1], [], []>} : vector<9x16xbf16>, vector<16x32xbf16>, vector<9x32xf32> -> vector<9x32xf32>
    %c0_90 = arith.constant 0 : index
    %c0_91 = arith.constant 0 : index
    %191 = vector.load %arg20[%c0_90, %c0_91] : memref<1x32xf32, #tpu.memory_space<vmem>>, vector<1x32xf32>
    %192 = vector.broadcast %191 : vector<1x32xf32> to vector<9x32xf32>
    %193 = arith.addf %190, %192 : vector<9x32xf32>
    %194 = arith.addf %188, %193 : vector<9x32xf32>
    %195 = vector.extract_strided_slice %194 {offsets = [0, 0], sizes = [1, 32], strides = [1, 1]} : vector<9x32xf32> to vector<1x32xf32>
    %c0_92 = arith.constant 0 : index
    %c0_93 = arith.constant 0 : index
    %196 = vector.load %arg21[%c0_92, %c0_93] : memref<1x32xf32, #tpu.memory_space<vmem>>, vector<1x32xf32>
    %c0_94 = arith.constant 0 : index
    %c0_95 = arith.constant 0 : index
    %197 = vector.load %arg22[%c0_94, %c0_95] : memref<1x32xf32, #tpu.memory_space<vmem>>, vector<1x32xf32>
    %cst_96 = arith.constant dense<0.000000e+00> : vector<1xf32>
    %198 = vector.multi_reduction <add>, %195, %cst_96 [1] : vector<1x32xf32> to vector<1xf32>
    %199 = vector.shape_cast %198 : vector<1xf32> to vector<1x1xf32>
    %cst_97 = arith.constant 3.200000e+01 : f32
    %200 = vector.broadcast %cst_97 : f32 to vector<1x1xf32>
    %201 = arith.divf %199, %200 : vector<1x1xf32>
    %202 = vector.broadcast %201 : vector<1x1xf32> to vector<1x32xf32>
    %203 = arith.subf %195, %202 : vector<1x32xf32>
    %204 = arith.mulf %203, %203 : vector<1x32xf32>
    %cst_98 = arith.constant dense<0.000000e+00> : vector<1xf32>
    %205 = vector.multi_reduction <add>, %204, %cst_98 [1] : vector<1x32xf32> to vector<1xf32>
    %206 = vector.shape_cast %205 : vector<1xf32> to vector<1x1xf32>
    %cst_99 = arith.constant 3.200000e+01 : f32
    %207 = vector.broadcast %cst_99 : f32 to vector<1x1xf32>
    %208 = arith.divf %206, %207 : vector<1x1xf32>
    %cst_100 = arith.constant 9.99999997E-7 : f32
    %209 = vector.broadcast %cst_100 : f32 to vector<1x1xf32>
    %210 = arith.addf %208, %209 : vector<1x1xf32>
    %211 = math.rsqrt %210 : vector<1x1xf32>
    %212 = vector.broadcast %211 : vector<1x1xf32> to vector<1x32xf32>
    %213 = arith.mulf %203, %212 : vector<1x32xf32>
    %214 = arith.mulf %213, %196 : vector<1x32xf32>
    %215 = arith.addf %214, %197 : vector<1x32xf32>
    %216 = arith.truncf %215 : vector<1x32xf32> to vector<1x32xbf16>
    %c0_101 = arith.constant 0 : index
    %c0_102 = arith.constant 0 : index
    %217 = vector.load %arg23[%c0_101, %c0_102] : memref<32x128xbf16, #tpu.memory_space<vmem>>, vector<32x128xbf16>
    %cst_103 = arith.constant dense<0.000000e+00> : vector<1x128xf32>
    %218 = tpu.matmul %216, %217, %cst_103 {dimension_numbers = #tpu.dot_dimension_numbers<[1], [0], [0], [1], [0, 0, 1, 1], [], []>} : vector<1x32xbf16>, vector<32x128xbf16>, vector<1x128xf32> -> vector<1x128xf32>
    %c0_104 = arith.constant 0 : index
    %c0_105 = arith.constant 0 : index
    %219 = vector.load %arg24[%c0_104, %c0_105] : memref<1x128xf32, #tpu.memory_space<vmem>>, vector<1x128xf32>
    %220 = arith.addf %218, %219 : vector<1x128xf32>
    %c0_106 = arith.constant 0 : index
    %c0_107 = arith.constant 0 : index
    %c0_108 = arith.constant 0 : index
    %221 = vector.load %arg25[%c0_106, %c0_107, %c0_108] : memref<1x1x128xf32, #tpu.memory_space<vmem>>, vector<1x1x128xf32>
    %222 = vector.shape_cast %221 : vector<1x1x128xf32> to vector<1x128xf32>
    %223 = vector.shape_cast %220 : vector<1x128xf32> to vector<1x1x128xf32>
    tpu.vector_store %arg25[%c0_106, %c0_107, %c0_108], %223 {strides = array<i32>} : memref<1x1x128xf32, #tpu.memory_space<vmem>>, vector<1x1x128xf32>,
    return
  }
  func.func @transform_0(%arg0: i32) -> (i32, i32, i32, i32) {
    %c0_i32 = arith.constant 0 : i32
    %c0_i32_0 = arith.constant 0 : i32
    %c0_i32_1 = arith.constant 0 : i32
    %c0_i32_2 = arith.constant 0 : i32
    return %arg0, %c0_i32, %c0_i32_0, %c0_i32_1 : i32, i32, i32, i32
  }
  func.func @transform_1(%arg0: i32) -> (i32, i32, i32, i32) {
    %c0_i32 = arith.constant 0 : i32
    %c0_i32_0 = arith.constant 0 : i32
    %c0_i32_1 = arith.constant 0 : i32
    %c0_i32_2 = arith.constant 0 : i32
    return %arg0, %c0_i32, %c0_i32_0, %c0_i32_1 : i32, i32, i32, i32
  }
  func.func @transform_2(%arg0: i32) -> (i32, i32, i32, i32) {
    %c0_i32 = arith.constant 0 : i32
    %c0_i32_0 = arith.constant 0 : i32
    %c0_i32_1 = arith.constant 0 : i32
    %c0_i32_2 = arith.constant 0 : i32
    return %arg0, %c0_i32, %c0_i32_0, %c0_i32_1 : i32, i32, i32, i32
  }
  func.func @transform_3(%arg0: i32) -> (i32, i32) {
    %c0_i32 = arith.constant 0 : i32
    %c0_i32_0 = arith.constant 0 : i32
    %c0_i32_1 = arith.constant 0 : i32
    return %c0_i32, %c0_i32_0 : i32, i32
  }
  func.func @transform_4(%arg0: i32) -> (i32, i32) {
    %c0_i32 = arith.constant 0 : i32
    %c0_i32_0 = arith.constant 0 : i32
    %c0_i32_1 = arith.constant 0 : i32
    return %c0_i32, %c0_i32_0 : i32, i32
  }
  func.func @transform_5(%arg0: i32) -> (i32, i32) {
    %c0_i32 = arith.constant 0 : i32
    %c0_i32_0 = arith.constant 0 : i32
    %c0_i32_1 = arith.constant 0 : i32
    return %c0_i32, %c0_i32_0 : i32, i32
  }
  func.func @transform_6(%arg0: i32) -> (i32, i32) {
    %c0_i32 = arith.constant 0 : i32
    %c0_i32_0 = arith.constant 0 : i32
    %c0_i32_1 = arith.constant 0 : i32
    return %c0_i32, %c0_i32_0 : i32, i32
  }
  func.func @transform_7(%arg0: i32) -> (i32, i32) {
    %c0_i32 = arith.constant 0 : i32
    %c0_i32_0 = arith.constant 0 : i32
    %c0_i32_1 = arith.constant 0 : i32
    return %c0_i32, %c0_i32_0 : i32, i32
  }
  func.func @transform_8(%arg0: i32) -> (i32, i32) {
    %c0_i32 = arith.constant 0 : i32
    %c0_i32_0 = arith.constant 0 : i32
    %c0_i32_1 = arith.constant 0 : i32
    return %c0_i32, %c0_i32_0 : i32, i32
  }
  func.func @transform_9(%arg0: i32) -> (i32, i32, i32) {
    %c0_i32 = arith.constant 0 : i32
    %c0_i32_0 = arith.constant 0 : i32
    %c0_i32_1 = arith.constant 0 : i32
    %c0_i32_2 = arith.constant 0 : i32
    return %c0_i32, %c0_i32_0, %c0_i32_1 : i32, i32, i32
  }
  func.func @transform_10(%arg0: i32) -> (i32, i32) {
    %c0_i32 = arith.constant 0 : i32
    %c0_i32_0 = arith.constant 0 : i32
    %c0_i32_1 = arith.constant 0 : i32
    return %c0_i32, %c0_i32_0 : i32, i32
  }
  func.func @transform_11(%arg0: i32) -> (i32, i32, i32) {
    %c0_i32 = arith.constant 0 : i32
    %c0_i32_0 = arith.constant 0 : i32
    %c0_i32_1 = arith.constant 0 : i32
    return %arg0, %c0_i32, %c0_i32_0 : i32, i32, i32
  }
  func.func @transform_12(%arg0: i32) -> (i32, i32) {
    %c0_i32 = arith.constant 0 : i32
    %c0_i32_0 = arith.constant 0 : i32
    %c0_i32_1 = arith.constant 0 : i32
    return %c0_i32, %c0_i32_0 : i32, i32
  }
  func.func @transform_13(%arg0: i32) -> (i32, i32) {
    %c0_i32 = arith.constant 0 : i32
    %c0_i32_0 = arith.constant 0 : i32
    %c0_i32_1 = arith.constant 0 : i32
    return %c0_i32, %c0_i32_0 : i32, i32
  }
  func.func @transform_14(%arg0: i32) -> (i32, i32) {
    %c0_i32 = arith.constant 0 : i32
    %c0_i32_0 = arith.constant 0 : i32
    %c0_i32_1 = arith.constant 0 : i32
    return %c0_i32, %c0_i32_0 : i32, i32
  }
  func.func @transform_15(%arg0: i32) -> (i32, i32) {
    %c0_i32 = arith.constant 0 : i32
    %c0_i32_0 = arith.constant 0 : i32
    %c0_i32_1 = arith.constant 0 : i32
    return %c0_i32, %c0_i32_0 : i32, i32
  }
  func.func @transform_16(%arg0: i32) -> (i32, i32) {
    %c0_i32 = arith.constant 0 : i32
    %c0_i32_0 = arith.constant 0 : i32
    %c0_i32_1 = arith.constant 0 : i32
    return %c0_i32, %c0_i32_0 : i32, i32
  }
  func.func @transform_17(%arg0: i32) -> (i32, i32) {
    %c0_i32 = arith.constant 0 : i32
    %c0_i32_0 = arith.constant 0 : i32
    %c0_i32_1 = arith.constant 0 : i32
    return %c0_i32, %c0_i32_0 : i32, i32
  }
  func.func @transform_18(%arg0: i32) -> (i32, i32) {
    %c0_i32 = arith.constant 0 : i32
    %c0_i32_0 = arith.constant 0 : i32
    %c0_i32_1 = arith.constant 0 : i32
    return %c0_i32, %c0_i32_0 : i32, i32
  }
  func.func @transform_19(%arg0: i32) -> (i32, i32) {
    %c0_i32 = arith.constant 0 : i32
    %c0_i32_0 = arith.constant 0 : i32
    %c0_i32_1 = arith.constant 0 : i32
    return %c0_i32, %c0_i32_0 : i32, i32
  }
  func.func @transform_20(%arg0: i32) -> (i32, i32) {
    %c0_i32 = arith.constant 0 : i32
    %c0_i32_0 = arith.constant 0 : i32
    %c0_i32_1 = arith.constant 0 : i32
    return %c0_i32, %c0_i32_0 : i32, i32
  }
  func.func @transform_21(%arg0: i32) -> (i32, i32) {
    %c0_i32 = arith.constant 0 : i32
    %c0_i32_0 = arith.constant 0 : i32
    %c0_i32_1 = arith.constant 0 : i32
    return %c0_i32, %c0_i32_0 : i32, i32
  }
  func.func @transform_22(%arg0: i32) -> (i32, i32) {
    %c0_i32 = arith.constant 0 : i32
    %c0_i32_0 = arith.constant 0 : i32
    %c0_i32_1 = arith.constant 0 : i32
    return %c0_i32, %c0_i32_0 : i32, i32
  }
  func.func @transform_23(%arg0: i32) -> (i32, i32) {
    %c0_i32 = arith.constant 0 : i32
    %c0_i32_0 = arith.constant 0 : i32
    %c0_i32_1 = arith.constant 0 : i32
    return %c0_i32, %c0_i32_0 : i32, i32
  }
  func.func @transform_24(%arg0: i32) -> (i32, i32, i32) {
    %c0_i32 = arith.constant 0 : i32
    %c0_i32_0 = arith.constant 0 : i32
    %c0_i32_1 = arith.constant 0 : i32
    return %arg0, %c0_i32, %c0_i32_0 : i32, i32, i32
  }
}

</mosaic_0001>

<llo_original>
// kernel: mvit_forward.4
$region0: #{mvit_forward.4}
  #allocation0 [shape = 'u32[]', space=smem, size = 0x4, offset = 0x4, fixed_abs, tag = 'smem constant byte address 0x4 - core index']
  #allocation1 [shape = 'u32[144,128]{1,0:T(1,128)}', space=vmem, size = 0x12000, scoped, tag = 'internal scratch']
  %s0 = inlined_call_operand.vmem [shape: f32[2,33,16], index: 0, kind: input, shape index: {}]
  %s1 = inlined_call_operand.vmem [shape: f32[1,16], index: 1, kind: input, shape index: {}]
  %s2 = inlined_call_operand.vmem [shape: f32[1,16], index: 2, kind: input, shape index: {}]
  %s3 = inlined_call_operand.vmem [shape: bf16[2,16,8], index: 3, kind: input, shape index: {}]
  %s4 = inlined_call_operand.vmem [shape: bf16[2,16,8], index: 4, kind: input, shape index: {}]
  %s5 = inlined_call_operand.vmem [shape: bf16[2,16,8], index: 5, kind: input, shape index: {}]
  %s6 = inlined_call_operand.vmem [shape: f32[2,1,8], index: 6, kind: input, shape index: {}]
  %s7 = inlined_call_operand.vmem [shape: f32[2,1,8], index: 7, kind: input, shape index: {}]
  %s8 = inlined_call_operand.vmem [shape: f32[2,1,8], index: 8, kind: input, shape index: {}]
  %s9 = inlined_call_operand.vmem [shape: f32[2,2,33,8], index: 9, kind: output, shape index: {0}]
  %s10 = inlined_call_operand.vmem [shape: f32[2,2,33,8], index: 10, kind: output, shape index: {1}]
  %s11 = inlined_call_operand.vmem [shape: f32[2,2,33,8], index: 11, kind: output, shape index: {2}]
  %12 = xla_tuple %s9, %s10, %s11
  %s13 = sld [smem:[#allocation0]]
  $region85: #{mvit_forward.4} parent=0
    _
  %s15 = ssub.s32 1, %s13
  %s16 = scalar_select 0, %s15, %s13
  loop: start=0, step=1, limit=4
  $region2: #{mvit_forward.4} parent=0 // loop_pre_header
    _
  $region3: #{mvit_forward.4} parent=0 // loop_header
    %s18 = sphi 0, %s22
    %p19 = scmp.ge.s32.totalorder %s18, 4
    %s28 = sphi 0, %s30
    %s31 = sphi 0, %s28
    %s32 = sphi 0, %s31
    %s48 = sphi 0, %s32
    %s52 = sphi 0, %s52
    %s54 = sphi 0, %s52
    %s55 = sphi 0, %s54
    %s69 = sphi 0, %s55
    %s73 = sphi 0, %s73
    %s75 = sphi 0, %s73
    %s76 = sphi 0, %s75
    %s90 = sphi 0, %s76
    %s94 = sphi 0, %s94
    %s96 = sphi 0, %s94
    %s97 = sphi 0, %s96
    %s111 = sphi 0, %s97
    %s115 = sphi 0, %s115
    %s117 = sphi 0, %s115
    %s118 = sphi 0, %s117
    %s132 = sphi 0, %s118
    %s136 = sphi 0, %s136
    %s138 = sphi 0, %s136
    %s139 = sphi 0, %s138
    %s153 = sphi 0, %s139
    %s157 = sphi 0, %s157
    %s159 = sphi 0, %s157
    %s160 = sphi 0, %s159
    %s174 = sphi 0, %s160
    %s178 = sphi 0, %s178
    %s180 = sphi 0, %s178
    %s181 = sphi 0, %s180
    %s195 = sphi 0, %s181
    %s199 = sphi 0, %s199
    %s201 = sphi 0, %s199
    %s202 = sphi 0, %s201
    %s216 = sphi 0, %s202
    %s222 = sphi 0, %s224
    %s225 = sphi 0, %s222
    %s226 = sphi 0, %s225
    %s242 = sphi 0, %s226
    %s248 = sphi 0, %s250
    %s251 = sphi 0, %s248
    %s252 = sphi 0, %s251
    %s268 = sphi 0, %s252
    %s274 = sphi 0, %s276
    %s277 = sphi 0, %s274
    %s278 = sphi 0, %s277
    %s294 = sphi 0, %s278
  $region4: #{mvit_forward.4} parent=0 // loop_header_branch
    %21 = sbr.rel (%p19) target = $region8
  $region5: #{mvit_forward.4} parent=0 // loop_body
    %s23 = ssub.s32 %s18, 1
    %s24 = ssub.s32 %s18, 2
    %s25 = sadd.s32 %s18, 1
    %s26 = ssub.s32 %s18, %s25
    %p27 = scmp.eq.s32.totalorder %s26, 0
    %s29 = sadd.s32 %s28, 1
    %s30 = scalar_select %p27, %s28, %s29
    %p33 = pneg %p27
    %p34 = scmp.eq.s32.totalorder %s18, 1
    %p35 = por %p33, %p34
    %p36 = scmp.ne.s32.totalorder %s28, %s31
    %p37 = scmp.eq.s32.totalorder %s18, 0
    %p38 = por %p36, %p37
    %p39 = scmp.ne.s32.totalorder %s28, %s31
    %p40 = scmp.eq.s32.totalorder %s23, 1
    %p41 = por %p39, %p40
    %p42 = scmp.ne.s32.totalorder %s31, %s32
    %p43 = scmp.eq.s32.totalorder %s23, 0
    %p44 = por %p42, %p43
    %p45 = scmp.ne.s32.totalorder %s31, %s32
    %p46 = scmp.eq.s32.totalorder %s24, 1
    %p47 = por %p45, %p46
    %p49 = scmp.ne.s32.totalorder %s32, %s48
    %p50 = scmp.eq.s32.totalorder %s24, 0
    %p51 = por %p49, %p50
    %s53 = sadd.s32 %s52, 1
    %p56 = scmp.eq.s32.totalorder %s18, 1
    %p57 = scmp.ne.s32.totalorder %s52, %s54
    %p58 = scmp.eq.s32.totalorder %s18, 0
    %p59 = por %p57, %p58
    %p60 = scmp.ne.s32.totalorder %s52, %s54
    %p61 = scmp.eq.s32.totalorder %s23, 1
    %p62 = por %p60, %p61
    %p63 = scmp.ne.s32.totalorder %s54, %s55
    %p64 = scmp.eq.s32.totalorder %s23, 0
    %p65 = por %p63, %p64
    %p66 = scmp.ne.s32.totalorder %s54, %s55
    %p67 = scmp.eq.s32.totalorder %s24, 1
    %p68 = por %p66, %p67
    %p70 = scmp.ne.s32.totalorder %s55, %s69
    %p71 = scmp.eq.s32.totalorder %s24, 0
    %p72 = por %p70, %p71
    %s74 = sadd.s32 %s73, 1
    %p77 = scmp.eq.s32.totalorder %s18, 1
    %p78 = scmp.ne.s32.totalorder %s73, %s75
    %p79 = scmp.eq.s32.totalorder %s18, 0
    %p80 = por %p78, %p79
    %p81 = scmp.ne.s32.totalorder %s73, %s75
    %p82 = scmp.eq.s32.totalorder %s23, 1
    %p83 = por %p81, %p82
    %p84 = scmp.ne.s32.totalorder %s75, %s76
    %p85 = scmp.eq.s32.totalorder %s23, 0
    %p86 = por %p84, %p85
    %p87 = scmp.ne.s32.totalorder %s75, %s76
    %p88 = scmp.eq.s32.totalorder %s24, 1
    %p89 = por %p87, %p88
    %p91 = scmp.ne.s32.totalorder %s76, %s90
    %p92 = scmp.eq.s32.totalorder %s24, 0
    %p93 = por %p91, %p92
    %s95 = sadd.s32 %s94, 1
    %p98 = scmp.eq.s32.totalorder %s18, 1
    %p99 = scmp.ne.s32.totalorder %s94, %s96
    %p100 = scmp.eq.s32.totalorder %s18, 0
    %p101 = por %p99, %p100
    %p102 = scmp.ne.s32.totalorder %s94, %s96
    %p103 = scmp.eq.s32.totalorder %s23, 1
    %p104 = por %p102, %p103
    %p105 = scmp.ne.s32.totalorder %s96, %s97
    %p106 = scmp.eq.s32.totalorder %s23, 0
    %p107 = por %p105, %p106
    %p108 = scmp.ne.s32.totalorder %s96, %s97
    %p109 = scmp.eq.s32.totalorder %s24, 1
    %p110 = por %p108, %p109
    %p112 = scmp.ne.s32.totalorder %s97, %s111
    %p113 = scmp.eq.s32.totalorder %s24, 0
    %p114 = por %p112, %p113
    %s116 = sadd.s32 %s115, 1
    %p119 = scmp.eq.s32.totalorder %s18, 1
    %p120 = scmp.ne.s32.totalorder %s115, %s117
    %p121 = scmp.eq.s32.totalorder %s18, 0
    %p122 = por %p120, %p121
    %p123 = scmp.ne.s32.totalorder %s115, %s117
    %p124 = scmp.eq.s32.totalorder %s23, 1
    %p125 = por %p123, %p124
    %p126 = scmp.ne.s32.totalorder %s117, %s118
    %p127 = scmp.eq.s32.totalorder %s23, 0
    %p128 = por %p126, %p127
    %p129 = scmp.ne.s32.totalorder %s117, %s118
    %p130 = scmp.eq.s32.totalorder %s24, 1
    %p131 = por %p129, %p130
    %p133 = scmp.ne.s32.totalorder %s118, %s132
    %p134 = scmp.eq.s32.totalorder %s24, 0
    %p135 = por %p133, %p134
    %s137 = sadd.s32 %s136, 1
    %p140 = scmp.eq.s32.totalorder %s18, 1
    %p141 = scmp.ne.s32.totalorder %s136, %s138
    %p142 = scmp.eq.s32.totalorder %s18, 0
    %p143 = por %p141, %p142
    %p144 = scmp.ne.s32.totalorder %s136, %s138
    %p145 = scmp.eq.s32.totalorder %s23, 1
    %p146 = por %p144, %p145
    %p147 = scmp.ne.s32.totalorder %s138, %s139
    %p148 = scmp.eq.s32.totalorder %s23, 0
    %p149 = por %p147, %p148
    %p150 = scmp.ne.s32.totalorder %s138, %s139
    %p151 = scmp.eq.s32.totalorder %s24, 1
    %p152 = por %p150, %p151
    %p154 = scmp.ne.s32.totalorder %s139, %s153
    %p155 = scmp.eq.s32.totalorder %s24, 0
    %p156 = por %p154, %p155
    %s158 = sadd.s32 %s157, 1
    %p161 = scmp.eq.s32.totalorder %s18, 1
    %p162 = scmp.ne.s32.totalorder %s157, %s159
    %p163 = scmp.eq.s32.totalorder %s18, 0
    %p164 = por %p162, %p163
    %p165 = scmp.ne.s32.totalorder %s157, %s159
    %p166 = scmp.eq.s32.totalorder %s23, 1
    %p167 = por %p165, %p166
    %p168 = scmp.ne.s32.totalorder %s159, %s160
    %p169 = scmp.eq.s32.totalorder %s23, 0
    %p170 = por %p168, %p169
    %p171 = scmp.ne.s32.totalorder %s159, %s160
    %p172 = scmp.eq.s32.totalorder %s24, 1
    %p173 = por %p171, %p172
    %p175 = scmp.ne.s32.totalorder %s160, %s174
    %p176 = scmp.eq.s32.totalorder %s24, 0
    %p177 = por %p175, %p176
    %s179 = sadd.s32 %s178, 1
    %p182 = scmp.eq.s32.totalorder %s18, 1
    %p183 = scmp.ne.s32.totalorder %s178, %s180
    %p184 = scmp.eq.s32.totalorder %s18, 0
    %p185 = por %p183, %p184
    %p186 = scmp.ne.s32.totalorder %s178, %s180
    %p187 = scmp.eq.s32.totalorder %s23, 1
    %p188 = por %p186, %p187
    %p189 = scmp.ne.s32.totalorder %s180, %s181
    %p190 = scmp.eq.s32.totalorder %s23, 0
    %p191 = por %p189, %p190
    %p192 = scmp.ne.s32.totalorder %s180, %s181
    %p193 = scmp.eq.s32.totalorder %s24, 1
    %p194 = por %p192, %p193
    %p196 = scmp.ne.s32.totalorder %s181, %s195
    %p197 = scmp.eq.s32.totalorder %s24, 0
    %p198 = por %p196, %p197
    %s200 = sadd.s32 %s199, 1
    %p203 = scmp.eq.s32.totalorder %s18, 1
    %p204 = scmp.ne.s32.totalorder %s199, %s201
    %p205 = scmp.eq.s32.totalorder %s18, 0
    %p206 = por %p204, %p205
    %p207 = scmp.ne.s32.totalorder %s199, %s201
    %p208 = scmp.eq.s32.totalorder %s23, 1
    %p209 = por %p207, %p208
    %p210 = scmp.ne.s32.totalorder %s201, %s202
    %p211 = scmp.eq.s32.totalorder %s23, 0
    %p212 = por %p210, %p211
    %p213 = scmp.ne.s32.totalorder %s201, %s202
    %p214 = scmp.eq.s32.totalorder %s24, 1
    %p215 = por %p213, %p214
    %p217 = scmp.ne.s32.totalorder %s202, %s216
    %p218 = scmp.eq.s32.totalorder %s24, 0
    %p219 = por %p217, %p218
    %s220 = ssub.s32 %s18, %s25
    %p221 = scmp.eq.s32.totalorder %s220, 0
    %s223 = sadd.s32 %s222, 1
    %s224 = scalar_select %p221, %s222, %s223
    %p227 = pneg %p221
    %p228 = scmp.eq.s32.totalorder %s18, 1
    %p229 = por %p227, %p228
    %p230 = scmp.ne.s32.totalorder %s222, %s225
    %p231 = scmp.eq.s32.totalorder %s18, 0
    %p232 = por %p230, %p231
    %p233 = scmp.ne.s32.totalorder %s222, %s225
    %p234 = scmp.eq.s32.totalorder %s23, 1
    %p235 = por %p233, %p234
    %p236 = scmp.ne.s32.totalorder %s225, %s226
    %p237 = scmp.eq.s32.totalorder %s23, 0
    %p238 = por %p236, %p237
    %p239 = scmp.ne.s32.totalorder %s225, %s226
    %p240 = scmp.eq.s32.totalorder %s24, 1
    %p241 = por %p239, %p240
    %p243 = scmp.ne.s32.totalorder %s226, %s242
    %p244 = scmp.eq.s32.totalorder %s24, 0
    %p245 = por %p243, %p244
    %s246 = ssub.s32 %s18, %s25
    %p247 = scmp.eq.s32.totalorder %s246, 0
    %s249 = sadd.s32 %s248, 1
    %s250 = scalar_select %p247, %s248, %s249
    %p253 = pneg %p247
    %p254 = scmp.eq.s32.totalorder %s18, 1
    %p255 = por %p253, %p254
    %p256 = scmp.ne.s32.totalorder %s248, %s251
    %p257 = scmp.eq.s32.totalorder %s18, 0
    %p258 = por %p256, %p257
    %p259 = scmp.ne.s32.totalorder %s248, %s251
    %p260 = scmp.eq.s32.totalorder %s23, 1
    %p261 = por %p259, %p260
    %p262 = scmp.ne.s32.totalorder %s251, %s252
    %p263 = scmp.eq.s32.totalorder %s23, 0
    %p264 = por %p262, %p263
    %p265 = scmp.ne.s32.totalorder %s251, %s252
    %p266 = scmp.eq.s32.totalorder %s24, 1
    %p267 = por %p265, %p266
    %p269 = scmp.ne.s32.totalorder %s252, %s268
    %p270 = scmp.eq.s32.totalorder %s24, 0
    %p271 = por %p269, %p270
    %s272 = ssub.s32 %s18, %s25
    %p273 = scmp.eq.s32.totalorder %s272, 0
    %s275 = sadd.s32 %s274, 1
    %s276 = scalar_select %p273, %s274, %s275
    %p279 = pneg %p273
    %p280 = scmp.eq.s32.totalorder %s18, 1
    %p281 = por %p279, %p280
    %p282 = scmp.ne.s32.totalorder %s274, %s277
    %p283 = scmp.eq.s32.totalorder %s18, 0
    %p284 = por %p282, %p283
    %p285 = scmp.ne.s32.totalorder %s274, %s277
    %p286 = scmp.eq.s32.totalorder %s23, 1
    %p287 = por %p285, %p286
    %p288 = scmp.ne.s32.totalorder %s277, %s278
    %p289 = scmp.eq.s32.totalorder %s23, 0
    %p290 = por %p288, %p289
    %p291 = scmp.ne.s32.totalorder %s277, %s278
    %p292 = scmp.eq.s32.totalorder %s24, 1
    %p293 = por %p291, %p292
    %p295 = scmp.ne.s32.totalorder %s278, %s294
    %p296 = scmp.eq.s32.totalorder %s24, 0
    %p297 = por %p295, %p296
    %p298 = scmp.le.s32.totalorder 1, %s18
    %p299 = scmp.lt.s32.totalorder %s18, 3
    %p300 = pnand %p298, %p299
    %p301 = pneg %p300
    // Predicated region
    $region9: #{mvit_forward.4} parent=5 // pred_check
      _
    $region10: #{mvit_forward.4} parent=5 // pred_check_branch
      %303 = sbr.rel (%p300) target = $region12
    $region11: #{mvit_forward.4} parent=5 // pred_region
      %s304 = ssub.s32 %s18, 1
      // Predicated region
      $region13: #{mvit_forward.4} parent=11 // pred_check
        %p305 = pneg %p65
      $region14: #{mvit_forward.4} parent=11 // pred_check_branch
        %307 = sbr.rel (%p305) target = $region16
      $region15: #{mvit_forward.4} parent=11 // pred_region
        _
      $region16: #{mvit_forward.4} parent=11 // pred_fallthru
        _
      // Predicated region
      $region17: #{mvit_forward.4} parent=11 // pred_check
        %p308 = pneg %p86
      $region18: #{mvit_forward.4} parent=11 // pred_check_branch
        %310 = sbr.rel (%p308) target = $region20
      $region19: #{mvit_forward.4} parent=11 // pred_region
        _
      $region20: #{mvit_forward.4} parent=11 // pred_fallthru
        _
      // Predicated region
      $region21: #{mvit_forward.4} parent=11 // pred_check
        %p311 = pneg %p107
      $region22: #{mvit_forward.4} parent=11 // pred_check_branch
        %313 = sbr.rel (%p311) target = $region24
      $region23: #{mvit_forward.4} parent=11 // pred_region
        _
      $region24: #{mvit_forward.4} parent=11 // pred_fallthru
        _
      // Predicated region
      $region25: #{mvit_forward.4} parent=11 // pred_check
        %p314 = pneg %p128
      $region26: #{mvit_forward.4} parent=11 // pred_check_branch
        %316 = sbr.rel (%p314) target = $region28
      $region27: #{mvit_forward.4} parent=11 // pred_region
        _
      $region28: #{mvit_forward.4} parent=11 // pred_fallthru
        _
      // Predicated region
      $region29: #{mvit_forward.4} parent=11 // pred_check
        %p317 = pneg %p149
      $region30: #{mvit_forward.4} parent=11 // pred_check_branch
        %319 = sbr.rel (%p317) target = $region32
      $region31: #{mvit_forward.4} parent=11 // pred_region
        _
      $region32: #{mvit_forward.4} parent=11 // pred_fallthru
        _
      // Predicated region
      $region33: #{mvit_forward.4} parent=11 // pred_check
        %p320 = pneg %p170
      $region34: #{mvit_forward.4} parent=11 // pred_check_branch
        %322 = sbr.rel (%p320) target = $region36
      $region35: #{mvit_forward.4} parent=11 // pred_region
        _
      $region36: #{mvit_forward.4} parent=11 // pred_fallthru
        _
      // Predicated region
      $region37: #{mvit_forward.4} parent=11 // pred_check
        %p323 = pneg %p191
      $region38: #{mvit_forward.4} parent=11 // pred_check_branch
        %325 = sbr.rel (%p323) target = $region40
      $region39: #{mvit_forward.4} parent=11 // pred_region
        _
      $region40: #{mvit_forward.4} parent=11 // pred_fallthru
        _
      // Predicated region
      $region41: #{mvit_forward.4} parent=11 // pred_check
        %p326 = pneg %p212
      $region42: #{mvit_forward.4} parent=11 // pred_check_branch
        %328 = sbr.rel (%p326) target = $region44
      $region43: #{mvit_forward.4} parent=11 // pred_region
        _
      $region44: #{mvit_forward.4} parent=11 // pred_fallthru
        _
    $region12: #{mvit_forward.4} parent=5 // pred_fallthru
      _
    %p329 = scmp.lt.s32.totalorder %s18, 2
    // Predicated region
    $region45: #{mvit_forward.4} parent=5 // pred_check
      %p330 = pneg %p329
    $region46: #{mvit_forward.4} parent=5 // pred_check_branch
      %332 = sbr.rel (%p330) target = $region48
    $region47: #{mvit_forward.4} parent=5 // pred_region
      // Predicated region
      $region49: #{mvit_forward.4} parent=47 // pred_check
        %p333 = pneg %p38
      $region50: #{mvit_forward.4} parent=47 // pred_check_branch
        %335 = sbr.rel (%p333) target = $region52
      $region51: #{mvit_forward.4} parent=47 // pred_region
        %p336 = scmp.lt.s32.totalorder %s18, 1
        %s337 = scalar_select %p336, %s18, 1
        %s338 = smul.addr %s337, 5
        %s339 = smul.addr %s338, 8
        %s340 = scalar_lea.vmem %s0, %s339
      $region52: #{mvit_forward.4} parent=47 // pred_fallthru
        _
    $region48: #{mvit_forward.4} parent=5 // pred_fallthru
      _
    %p341 = scmp.le.s32.totalorder 1, %s18
    %p342 = scmp.lt.s32.totalorder %s18, 3
    %p343 = pnand %p341, %p342
    %p344 = pneg %p343
    // Predicated region
    $region53: #{mvit_forward.4} parent=5 // pred_check
      _
    $region54: #{mvit_forward.4} parent=5 // pred_check_branch
      %346 = sbr.rel (%p343) target = $region56
    $region55: #{mvit_forward.4} parent=5 // pred_region
      %s347 = ssub.s32 %s18, 1
      %p348 = scmp.lt.s32.totalorder %s23, 1
      %s349 = scalar_select %p348, %s23, 1
      %s350 = smul.addr %s349, 5
      %s351 = smul.addr %s350, 8
      %s352 = scalar_lea.vmem %s0, %s351
      %p353 = pneg %p44
      %p354 = pneg %p41
      %p355 = pneg %p65
      %p356 = pneg %p62
      %p357 = pneg %p86
      %p358 = pneg %p83
      %p359 = pneg %p107
      %p360 = pneg %p104
      %p361 = pneg %p128
      %p362 = pneg %p125
      %p363 = pneg %p149
      %p364 = pneg %p146
      %p365 = pneg %p170
      %p366 = pneg %p167
      %p367 = pneg %p191
      %p368 = pneg %p188
      %p369 = pneg %p212
      %p370 = pneg %p209
      %p371 = pneg %p238
      %p372 = pneg %p235
      %p373 = scmp.lt.s32.totalorder %s23, 1
      %s374 = scalar_select %p373, %s23, 1
      %s375 = smul.addr %s374, 10
      %s376 = smul.addr %s375, 8
      %s377 = scalar_lea.vmem %s9, %s376
      %p378 = pneg %p264
      %p379 = pneg %p261
      %p380 = scmp.lt.s32.totalorder %s23, 1
      %s381 = scalar_select %p380, %s23, 1
      %s382 = smul.addr %s381, 10
      %s383 = smul.addr %s382, 8
      %s384 = scalar_lea.vmem %s10, %s383
      %p385 = pneg %p290
      %p386 = pneg %p287
      %p387 = scmp.lt.s32.totalorder %s23, 1
      %s388 = scalar_select %p387, %s23, 1
      %s389 = smul.addr %s388, 10
      %s390 = smul.addr %s389, 8
      %s391 = scalar_lea.vmem %s11, %s390
      %p392 = scmp.lt.s32.totalorder %s23, 1
      %s393 = scalar_select %p392, %s23, 1
      %s394 = smul.addr %s393, 5
      %s395 = smul.addr %s394, 8
      %s396 = scalar_lea.vmem %s0, %s395
      %p397 = scmp.lt.s32.totalorder %s23, 1
      %s398 = scalar_select %p397, %s23, 1
      %s399 = smul.addr %s398, 10
      %s400 = smul.addr %s399, 8
      %s401 = scalar_lea.vmem %s9, %s400
      %p402 = scmp.lt.s32.totalorder %s23, 1
      %s403 = scalar_select %p402, %s23, 1
      %s404 = smul.addr %s403, 10
      %s405 = smul.addr %s404, 8
      %s406 = scalar_lea.vmem %s10, %s405
      %p407 = scmp.lt.s32.totalorder %s23, 1
      %s408 = scalar_select %p407, %s23, 1
      %s409 = smul.addr %s408, 10
      %s410 = smul.addr %s409, 8
      %s411 = scalar_lea.vmem %s11, %s410
      %v413 = vld [vmem:[%s396] sm:$0xff]
      %v414 = vld [vmem:[%s396 + $0x8] sm:$0xff]
      %v415 = vld [vmem:[%s396 + $0x10] sm:$0xff]
      %v416 = vld [vmem:[%s396 + $0x18] sm:$0xff]
      %v417 = vld [vmem:[%s396 + $0x20] sm:$0x1]
      %v418 = vld [vmem:[%s1] sm:$0x1]
      %v419 = vld [vmem:[%s2] sm:$0x1]
      %vm420 = vcmask 130048
      %v421 = vsel %vm420, %v413, 0.0
      %422 = vadd.xlane.f32.xlu0 %v421
      %v423 = vpop.xlane.xlu0 %422
      %v424 = vsel %vm420, %v414, 0.0
      %425 = vadd.xlane.f32.xlu0 %v424
      %v426 = vpop.xlane.xlu0 %425
      %v427 = vsel %vm420, %v415, 0.0
      %428 = vadd.xlane.f32.xlu0 %v427
      %v429 = vpop.xlane.xlu0 %428
      %v430 = vsel %vm420, %v416, 0.0
      %431 = vadd.xlane.f32.xlu0 %v430
      %v432 = vpop.xlane.xlu0 %431
      %vm433 = vcmask 122880
      %v434 = vsel %vm433, %v417, 0.0
      %435 = vadd.xlane.f32.xlu0 %v434
      %v436 = vpop.xlane.xlu0 %435
      %v437 = vrcp.pop 16.0
      %v438 = vmul.f32 %v423, %v437
      %v439 = vmul.f32 %v426, %v437
      %v440 = vmul.f32 %v429, %v437
      %v441 = vmul.f32 %v432, %v437
      %v442 = vmul.f32 %v436, %v437
      %v443 = vsub.f32 %v413, %v438
      %v444 = vsub.f32 %v414, %v439
      %v445 = vsub.f32 %v415, %v440
      %v446 = vsub.f32 %v416, %v441
      %v447 = vsub.f32 %v417, %v442
      %v448 = vmul.f32 %v443, %v443
      %v449 = vmul.f32 %v444, %v444
      %v450 = vmul.f32 %v445, %v445
      %v451 = vmul.f32 %v446, %v446
      %v452 = vmul.f32 %v447, %v447
      %v453 = vsel %vm420, %v448, 0.0
      %454 = vadd.xlane.f32.xlu0 %v453
      %v455 = vpop.xlane.xlu0 %454
      %v456 = vsel %vm420, %v449, 0.0
      %457 = vadd.xlane.f32.xlu0 %v456
      %v458 = vpop.xlane.xlu0 %457
      %v459 = vsel %vm420, %v450, 0.0
      %460 = vadd.xlane.f32.xlu0 %v459
      %v461 = vpop.xlane.xlu0 %460
      %v462 = vsel %vm420, %v451, 0.0
      %463 = vadd.xlane.f32.xlu0 %v462
      %v464 = vpop.xlane.xlu0 %463
      %v465 = vsel %vm433, %v452, 0.0
      %466 = vadd.xlane.f32.xlu0 %v465
      %v467 = vpop.xlane.xlu0 %466
      %v468 = vmul.f32 %v455, %v437
      %v469 = vmul.f32 %v458, %v437
      %v470 = vmul.f32 %v461, %v437
      %v471 = vmul.f32 %v464, %v437
      %v472 = vmul.f32 %v467, %v437
      %v473 = vadd.f32 %v468, 1e-06
      %v474 = vadd.f32 %v469, 1e-06
      %v475 = vadd.f32 %v470, 1e-06
      %v476 = vadd.f32 %v471, 1e-06
      %v477 = vadd.f32 %v472, 1e-06
      %v478 = vrsqrt.pop %v473
      %v479 = vrsqrt.pop %v474
      %v480 = vrsqrt.pop %v475
      %v481 = vrsqrt.pop %v476
      %v482 = vrsqrt.pop %v477
      %v483 = vmul.f32 %v443, %v478
      %v484 = vmul.f32 %v444, %v479
      %v485 = vmul.f32 %v445, %v480
      %v486 = vmul.f32 %v446, %v481
      %v487 = vmul.f32 %v447, %v482
      %v489 = vlaneseq
      %v490 = vshrl.u32 %v489, 7
      %v491 = vsub.s32 0, %v490
      %v492 = vrot.slane %v418, %v491
      %v494 = vmul.f32 %v483, %v492
      %v495 = vmul.f32 %v484, %v492
      %v496 = vmul.f32 %v485, %v492
      %v497 = vmul.f32 %v486, %v492
      %v498 = vmul.f32 %v487, %v492
      %v500 = vlaneseq
      %v501 = vshrl.u32 %v500, 7
      %v502 = vsub.s32 0, %v501
      %v503 = vrot.slane %v419, %v502
      %v505 = vadd.f32 %v494, %v503
      %v506 = vadd.f32 %v495, %v503
      %v507 = vadd.f32 %v496, %v503
      %v508 = vadd.f32 %v497, %v503
      %v509 = vadd.f32 %v498, %v503
      %v510 = vpack.c.bf16 %v506, %v505
      %v511 = vpack.c.bf16 %v508, %v507
      %v512 = vpack.c.bf16 %v509, %v509
      %v513 = vld [vmem:[%s3] sm:$0xf]
      %v514 = vld [vmem:[%s3 + $0x4] sm:$0xf]
      %v515 = vld [vmem:[%s6] sm:$0x1]
      %v517 = vlaneseq
      %v518 = vshrl.u32 %v517, 7
      %v519 = vsub.s32 0, %v518
      %v520 = vrot.slane %v515, %v519
      %v524 = vunpack.c.l.b16 %v513
      %v525 = vunpack.c.l.b16 %v514
      %v526 = vpack.c.b16 %v525, %v524
      %v529 = vsel %vm420, %v510, 0
      %v532 = vsel %vm420, %v511, 0
      %v535 = vsel %vm420, %v512, 0
      %537 = vmatprep.subr.bf16.mxu0 0
      %538 = vmatpush1.bf16.msra.mxu0 0
      %539 = vmatprep.subr.bf16.mxu0 0
      %540 = vmatpush1.bf16.msra.mxu0 0
      %541 = vmatprep.subr.bf16.mxu0 0
      %542 = vmatpush1.bf16.msra.mxu0 0
      %543 = vmatprep.subr.bf16.mxu0 0
      %544 = vmatpush1.bf16.msra.mxu0 0
      %545 = vmatprep.subr.bf16.mxu0 0
      %546 = vmatpush1.bf16.msra.mxu0 0
      %547 = vmatprep.subr.bf16.mxu0 0
      %548 = vmatpush1.bf16.msra.mxu0 0
      %549 = vmatprep.subr.bf16.mxu0 0
      %550 = vmatpush1.bf16.msra.mxu0 0
      %551 = vmatprep.subr.bf16.mxu0 0
      %552 = vmatpush1.bf16.msra.mxu0 %v526
      %553 = vmatprep.subr.bf16.mxu0 0
      %554 = vmatpush2.bf16.msra.mxu0 0
      %555 = vmatprep.subr.bf16.mxu0 0
      %556 = vmatpush2.bf16.msra.mxu0 0
      %557 = vmatprep.subr.bf16.mxu0 0
      %558 = vmatpush2.bf16.msra.mxu0 0
      %559 = vmatprep.subr.bf16.mxu0 0
      %560 = vmatpush2.bf16.msra.mxu0 0
      %561 = vmatprep.subr.bf16.mxu0 0
      %562 = vmatpush2.bf16.msra.mxu0 0
      %563 = vmatprep.subr.bf16.mxu0 0
      %564 = vmatpush2.bf16.msra.mxu0 0
      %565 = vmatprep.subr.bf16.mxu0 0
      %566 = vmatpush2.bf16.msra.mxu0 0
      %567 = vmatprep.subr.bf16.mxu0 0
      %568 = vmatpush2.bf16.msra.mxu0 0
      %569 = vmatprep.mubr.bf16.mxu0 0
      %570 = vmatmul.mubr.bf16.gmra.mxu0 %v529
      %v571 = vpop.f32.mrf.mxu0
      %v572 = vadd.f32 %v520, %v571
      %v573 = vpop.f32.mrf.mxu0
      %v574 = vpop.f32.mrf.mxu0
      %v575 = vadd.f32 %v520, %v574
      %v576 = vpop.f32.mrf.mxu0
      %577 = vmatprep.mubr.bf16.mxu0 0
      %578 = vmatmul.mubr.bf16.gmra.mxu0 %v532
      %v579 = vpop.f32.mrf.mxu0
      %v580 = vadd.f32 %v520, %v579
      %v581 = vpop.f32.mrf.mxu0
      %v582 = vpop.f32.mrf.mxu0
      %v583 = vadd.f32 %v520, %v582
      %v584 = vpop.f32.mrf.mxu0
      %585 = vmatprep.mubr.bf16.mxu0 0
      %586 = vmatmul.mubr.bf16.gmra.mxu0 %v535
      %v587 = vpop.f32.mrf.mxu0
      %v588 = vadd.f32 %v520, %v587
      %v589 = vpop.f32.mrf.mxu0
      %v590 = vpop.f32.mrf.mxu0
      %v591 = vpop.f32.mrf.mxu0
      %592 = vdwg.mxu0
      %vm593 = vcmask 64512
      %594 = vst.msk [vmem:[%s401] sm:$0xff] %vm593, %v572
      %595 = vst.msk [vmem:[%s401 + $0x8] sm:$0xff] %vm593, %v575
      %596 = vst.msk [vmem:[%s401 + $0x10] sm:$0xff] %vm593, %v580
      %597 = vst.msk [vmem:[%s401 + $0x18] sm:$0xff] %vm593, %v583
      %vm598 = vcmask 57344
      %599 = vst.msk [vmem:[%s401 + $0x20] sm:$0x1] %vm598, %v588
      %v600 = vld [vmem:[%s4] sm:$0xf]
      %v601 = vld [vmem:[%s4 + $0x4] sm:$0xf]
      %v602 = vld [vmem:[%s7] sm:$0x1]
      %v604 = vlaneseq
      %v605 = vshrl.u32 %v604, 7
      %v606 = vsub.s32 0, %v605
      %v607 = vrot.slane %v602, %v606
      %v611 = vunpack.c.l.b16 %v600
      %v612 = vunpack.c.l.b16 %v601
      %v613 = vpack.c.b16 %v612, %v611
      %615 = vmatprep.subr.bf16.mxu0 0
      %616 = vmatpush1.bf16.msra.mxu0 0
      %617 = vmatprep.subr.bf16.mxu0 0
      %618 = vmatpush1.bf16.msra.mxu0 0
      %619 = vmatprep.subr.bf16.mxu0 0
      %620 = vmatpush1.bf16.msra.mxu0 0
      %621 = vmatprep.subr.bf16.mxu0 0
      %622 = vmatpush1.bf16.msra.mxu0 0
      %623 = vmatprep.subr.bf16.mxu0 0
      %624 = vmatpush1.bf16.msra.mxu0 0
      %625 = vmatprep.subr.bf16.mxu0 0
      %626 = vmatpush1.bf16.msra.mxu0 0
      %627 = vmatprep.subr.bf16.mxu0 0
      %628 = vmatpush1.bf16.msra.mxu0 0
      %629 = vmatprep.subr.bf16.mxu0 0
      %630 = vmatpush1.bf16.msra.mxu0 %v613
      %631 = vmatprep.subr.bf16.mxu0 0
      %632 = vmatpush2.bf16.msra.mxu0 0
      %633 = vmatprep.subr.bf16.mxu0 0
      %634 = vmatpush2.bf16.msra.mxu0 0
      %635 = vmatprep.subr.bf16.mxu0 0
      %636 = vmatpush2.bf16.msra.mxu0 0
      %637 = vmatprep.subr.bf16.mxu0 0
      %638 = vmatpush2.bf16.msra.mxu0 0
      %639 = vmatprep.subr.bf16.mxu0 0
      %640 = vmatpush2.bf16.msra.mxu0 0
      %641 = vmatprep.subr.bf16.mxu0 0
      %642 = vmatpush2.bf16.msra.mxu0 0
      %643 = vmatprep.subr.bf16.mxu0 0
      %644 = vmatpush2.bf16.msra.mxu0 0
      %645 = vmatprep.subr.bf16.mxu0 0
      %646 = vmatpush2.bf16.msra.mxu0 0
      %647 = vmatprep.mubr.bf16.mxu0 0
      %648 = vmatmul.mubr.bf16.gmra.mxu0 %v529
      %v649 = vpop.f32.mrf.mxu0
      %v650 = vadd.f32 %v607, %v649
      %v651 = vpop.f32.mrf.mxu0
      %v652 = vpop.f32.mrf.mxu0
      %v653 = vadd.f32 %v607, %v652
      %v654 = vpop.f32.mrf.mxu0
      %655 = vmatprep.mubr.bf16.mxu0 0
      %656 = vmatmul.mubr.bf16.gmra.mxu0 %v532
      %v657 = vpop.f32.mrf.mxu0
      %v658 = vadd.f32 %v607, %v657
      %v659 = vpop.f32.mrf.mxu0
      %v660 = vpop.f32.mrf.mxu0
      %v661 = vadd.f32 %v607, %v660
      %v662 = vpop.f32.mrf.mxu0
      %663 = vmatprep.mubr.bf16.mxu0 0
      %664 = vmatmul.mubr.bf16.gmra.mxu0 %v535
      %v665 = vpop.f32.mrf.mxu0
      %v666 = vadd.f32 %v607, %v665
      %v667 = vpop.f32.mrf.mxu0
      %v668 = vpop.f32.mrf.mxu0
      %v669 = vpop.f32.mrf.mxu0
      %670 = vdwg.mxu0
      %671 = vst.msk [vmem:[%s406] sm:$0xff] %vm593, %v650
      %672 = vst.msk [vmem:[%s406 + $0x8] sm:$0xff] %vm593, %v653
      %673 = vst.msk [vmem:[%s406 + $0x10] sm:$0xff] %vm593, %v658
      %674 = vst.msk [vmem:[%s406 + $0x18] sm:$0xff] %vm593, %v661
      %675 = vst.msk [vmem:[%s406 + $0x20] sm:$0x1] %vm598, %v666
      %v676 = vld [vmem:[%s5] sm:$0xf]
      %v677 = vld [vmem:[%s5 + $0x4] sm:$0xf]
      %v678 = vld [vmem:[%s8] sm:$0x1]
      %v680 = vlaneseq
      %v681 = vshrl.u32 %v680, 7
      %v682 = vsub.s32 0, %v681
      %v683 = vrot.slane %v678, %v682
      %v687 = vunpack.c.l.b16 %v676
      %v688 = vunpack.c.l.b16 %v677
      %v689 = vpack.c.b16 %v688, %v687
      %691 = vmatprep.subr.bf16.mxu0 0
      %692 = vmatpush1.bf16.msra.mxu0 0
      %693 = vmatprep.subr.bf16.mxu0 0
      %694 = vmatpush1.bf16.msra.mxu0 0
      %695 = vmatprep.subr.bf16.mxu0 0
      %696 = vmatpush1.bf16.msra.mxu0 0
      %697 = vmatprep.subr.bf16.mxu0 0
      %698 = vmatpush1.bf16.msra.mxu0 0
      %699 = vmatprep.subr.bf16.mxu0 0
      %700 = vmatpush1.bf16.msra.mxu0 0
      %701 = vmatprep.subr.bf16.mxu0 0
      %702 = vmatpush1.bf16.msra.mxu0 0
      %703 = vmatprep.subr.bf16.mxu0 0
      %704 = vmatpush1.bf16.msra.mxu0 0
      %705 = vmatprep.subr.bf16.mxu0 0
      %706 = vmatpush1.bf16.msra.mxu0 %v689
      %707 = vmatprep.subr.bf16.mxu0 0
      %708 = vmatpush2.bf16.msra.mxu0 0
      %709 = vmatprep.subr.bf16.mxu0 0
      %710 = vmatpush2.bf16.msra.mxu0 0
      %711 = vmatprep.subr.bf16.mxu0 0
      %712 = vmatpush2.bf16.msra.mxu0 0
      %713 = vmatprep.subr.bf16.mxu0 0
      %714 = vmatpush2.bf16.msra.mxu0 0
      %715 = vmatprep.subr.bf16.mxu0 0
      %716 = vmatpush2.bf16.msra.mxu0 0
      %717 = vmatprep.subr.bf16.mxu0 0
      %718 = vmatpush2.bf16.msra.mxu0 0
      %719 = vmatprep.subr.bf16.mxu0 0
      %720 = vmatpush2.bf16.msra.mxu0 0
      %721 = vmatprep.subr.bf16.mxu0 0
      %722 = vmatpush2.bf16.msra.mxu0 0
      %723 = vmatprep.mubr.bf16.mxu0 0
      %724 = vmatmul.mubr.bf16.gmra.mxu0 %v529
      %v725 = vpop.f32.mrf.mxu0
      %v726 = vadd.f32 %v683, %v725
      %v727 = vpop.f32.mrf.mxu0
      %v728 = vpop.f32.mrf.mxu0
      %v729 = vadd.f32 %v683, %v728
      %v730 = vpop.f32.mrf.mxu0
      %731 = vmatprep.mubr.bf16.mxu0 0
      %732 = vmatmul.mubr.bf16.gmra.mxu0 %v532
      %v733 = vpop.f32.mrf.mxu0
      %v734 = vadd.f32 %v683, %v733
      %v735 = vpop.f32.mrf.mxu0
      %v736 = vpop.f32.mrf.mxu0
      %v737 = vadd.f32 %v683, %v736
      %v738 = vpop.f32.mrf.mxu0
      %739 = vmatprep.mubr.bf16.mxu0 0
      %740 = vmatmul.mubr.bf16.gmra.mxu0 %v535
      %v741 = vpop.f32.mrf.mxu0
      %v742 = vadd.f32 %v683, %v741
      %v743 = vpop.f32.mrf.mxu0
      %v744 = vpop.f32.mrf.mxu0
      %v745 = vpop.f32.mrf.mxu0
      %746 = vdwg.mxu0
      %747 = vst.msk [vmem:[%s411] sm:$0xff] %vm593, %v726
      %748 = vst.msk [vmem:[%s411 + $0x8] sm:$0xff] %vm593, %v729
      %749 = vst.msk [vmem:[%s411 + $0x10] sm:$0xff] %vm593, %v734
      %750 = vst.msk [vmem:[%s411 + $0x18] sm:$0xff] %vm593, %v737
      %751 = vst.msk [vmem:[%s411 + $0x20] sm:$0x1] %vm598, %v742
      %s752 = scalar_lea.vmem %s3, 8
      %v753 = vld [vmem:[%s752] sm:$0xf]
      %v754 = vld [vmem:[%s752 + $0x4] sm:$0xf]
      %s755 = scalar_lea.vmem %s6, 1
      %v756 = vld [vmem:[%s755] sm:$0x1]
      %v758 = vlaneseq
      %v759 = vshrl.u32 %v758, 7
      %v760 = vsub.s32 0, %v759
      %v761 = vrot.slane %v756, %v760
      %v765 = vunpack.c.l.b16 %v753
      %v766 = vunpack.c.l.b16 %v754
      %v767 = vpack.c.b16 %v766, %v765
      %769 = vmatprep.subr.bf16.mxu0 0
      %770 = vmatpush1.bf16.msra.mxu0 0
      %771 = vmatprep.subr.bf16.mxu0 0
      %772 = vmatpush1.bf16.msra.mxu0 0
      %773 = vmatprep.subr.bf16.mxu0 0
      %774 = vmatpush1.bf16.msra.mxu0 0
      %775 = vmatprep.subr.bf16.mxu0 0
      %776 = vmatpush1.bf16.msra.mxu0 0
      %777 = vmatprep.subr.bf16.mxu0 0
      %778 = vmatpush1.bf16.msra.mxu0 0
      %779 = vmatprep.subr.bf16.mxu0 0
      %780 = vmatpush1.bf16.msra.mxu0 0
      %781 = vmatprep.subr.bf16.mxu0 0
      %782 = vmatpush1.bf16.msra.mxu0 0
      %783 = vmatprep.subr.bf16.mxu0 0
      %784 = vmatpush1.bf16.msra.mxu0 %v767
      %785 = vmatprep.subr.bf16.mxu0 0
      %786 = vmatpush2.bf16.msra.mxu0 0
      %787 = vmatprep.subr.bf16.mxu0 0
      %788 = vmatpush2.bf16.msra.mxu0 0
      %789 = vmatprep.subr.bf16.mxu0 0
      %790 = vmatpush2.bf16.msra.mxu0 0
      %791 = vmatprep.subr.bf16.mxu0 0
      %792 = vmatpush2.bf16.msra.mxu0 0
      %793 = vmatprep.subr.bf16.mxu0 0
      %794 = vmatpush2.bf16.msra.mxu0 0
      %795 = vmatprep.subr.bf16.mxu0 0
      %796 = vmatpush2.bf16.msra.mxu0 0
      %797 = vmatprep.subr.bf16.mxu0 0
      %798 = vmatpush2.bf16.msra.mxu0 0
      %799 = vmatprep.subr.bf16.mxu0 0
      %800 = vmatpush2.bf16.msra.mxu0 0
      %801 = vmatprep.mubr.bf16.mxu0 0
      %802 = vmatmul.mubr.bf16.gmra.mxu0 %v529
      %v803 = vpop.f32.mrf.mxu0
      %v804 = vadd.f32 %v761, %v803
      %v805 = vpop.f32.mrf.mxu0
      %v806 = vpop.f32.mrf.mxu0
      %v807 = vadd.f32 %v761, %v806
      %v808 = vpop.f32.mrf.mxu0
      %809 = vmatprep.mubr.bf16.mxu0 0
      %810 = vmatmul.mubr.bf16.gmra.mxu0 %v532
      %v811 = vpop.f32.mrf.mxu0
      %v812 = vadd.f32 %v761, %v811
      %v813 = vpop.f32.mrf.mxu0
      %v814 = vpop.f32.mrf.mxu0
      %v815 = vadd.f32 %v761, %v814
      %v816 = vpop.f32.mrf.mxu0
      %817 = vmatprep.mubr.bf16.mxu0 0
      %818 = vmatmul.mubr.bf16.gmra.mxu0 %v535
      %v819 = vpop.f32.mrf.mxu0
      %v820 = vadd.f32 %v761, %v819
      %v821 = vpop.f32.mrf.mxu0
      %v822 = vpop.f32.mrf.mxu0
      %v823 = vpop.f32.mrf.mxu0
      %824 = vdwg.mxu0
      %s825 = scalar_lea.vmem %s401, 40
      %826 = vst.msk [vmem:[%s825] sm:$0xff] %vm593, %v804
      %827 = vst.msk [vmem:[%s825 + $0x8] sm:$0xff] %vm593, %v807
      %828 = vst.msk [vmem:[%s825 + $0x10] sm:$0xff] %vm593, %v812
      %829 = vst.msk [vmem:[%s825 + $0x18] sm:$0xff] %vm593, %v815
      %830 = vst.msk [vmem:[%s825 + $0x20] sm:$0x1] %vm598, %v820
      %s831 = scalar_lea.vmem %s4, 8
      %v832 = vld [vmem:[%s831] sm:$0xf]
      %v833 = vld [vmem:[%s831 + $0x4] sm:$0xf]
      %s834 = scalar_lea.vmem %s7, 1
      %v835 = vld [vmem:[%s834] sm:$0x1]
      %v837 = vlaneseq
      %v838 = vshrl.u32 %v837, 7
      %v839 = vsub.s32 0, %v838
      %v840 = vrot.slane %v835, %v839
      %v844 = vunpack.c.l.b16 %v832
      %v845 = vunpack.c.l.b16 %v833
      %v846 = vpack.c.b16 %v845, %v844
      %848 = vmatprep.subr.bf16.mxu0 0
      %849 = vmatpush1.bf16.msra.mxu0 0
      %850 = vmatprep.subr.bf16.mxu0 0
      %851 = vmatpush1.bf16.msra.mxu0 0
      %852 = vmatprep.subr.bf16.mxu0 0
      %853 = vmatpush1.bf16.msra.mxu0 0
      %854 = vmatprep.subr.bf16.mxu0 0
      %855 = vmatpush1.bf16.msra.mxu0 0
      %856 = vmatprep.subr.bf16.mxu0 0
      %857 = vmatpush1.bf16.msra.mxu0 0
      %858 = vmatprep.subr.bf16.mxu0 0
      %859 = vmatpush1.bf16.msra.mxu0 0
      %860 = vmatprep.subr.bf16.mxu0 0
      %861 = vmatpush1.bf16.msra.mxu0 0
      %862 = vmatprep.subr.bf16.mxu0 0
      %863 = vmatpush1.bf16.msra.mxu0 %v846
      %864 = vmatprep.subr.bf16.mxu0 0
      %865 = vmatpush2.bf16.msra.mxu0 0
      %866 = vmatprep.subr.bf16.mxu0 0
      %867 = vmatpush2.bf16.msra.mxu0 0
      %868 = vmatprep.subr.bf16.mxu0 0
      %869 = vmatpush2.bf16.msra.mxu0 0
      %870 = vmatprep.subr.bf16.mxu0 0
      %871 = vmatpush2.bf16.msra.mxu0 0
      %872 = vmatprep.subr.bf16.mxu0 0
      %873 = vmatpush2.bf16.msra.mxu0 0
      %874 = vmatprep.subr.bf16.mxu0 0
      %875 = vmatpush2.bf16.msra.mxu0 0
      %876 = vmatprep.subr.bf16.mxu0 0
      %877 = vmatpush2.bf16.msra.mxu0 0
      %878 = vmatprep.subr.bf16.mxu0 0
      %879 = vmatpush2.bf16.msra.mxu0 0
      %880 = vmatprep.mubr.bf16.mxu0 0
      %881 = vmatmul.mubr.bf16.gmra.mxu0 %v529
      %v882 = vpop.f32.mrf.mxu0
      %v883 = vadd.f32 %v840, %v882
      %v884 = vpop.f32.mrf.mxu0
      %v885 = vpop.f32.mrf.mxu0
      %v886 = vadd.f32 %v840, %v885
      %v887 = vpop.f32.mrf.mxu0
      %888 = vmatprep.mubr.bf16.mxu0 0
      %889 = vmatmul.mubr.bf16.gmra.mxu0 %v532
      %v890 = vpop.f32.mrf.mxu0
      %v891 = vadd.f32 %v840, %v890
      %v892 = vpop.f32.mrf.mxu0
      %v893 = vpop.f32.mrf.mxu0
      %v894 = vadd.f32 %v840, %v893
      %v895 = vpop.f32.mrf.mxu0
      %896 = vmatprep.mubr.bf16.mxu0 0
      %897 = vmatmul.mubr.bf16.gmra.mxu0 %v535
      %v898 = vpop.f32.mrf.mxu0
      %v899 = vadd.f32 %v840, %v898
      %v900 = vpop.f32.mrf.mxu0
      %v901 = vpop.f32.mrf.mxu0
      %v902 = vpop.f32.mrf.mxu0
      %903 = vdwg.mxu0
      %s904 = scalar_lea.vmem %s406, 40
      %905 = vst.msk [vmem:[%s904] sm:$0xff] %vm593, %v883
      %906 = vst.msk [vmem:[%s904 + $0x8] sm:$0xff] %vm593, %v886
      %907 = vst.msk [vmem:[%s904 + $0x10] sm:$0xff] %vm593, %v891
      %908 = vst.msk [vmem:[%s904 + $0x18] sm:$0xff] %vm593, %v894
      %909 = vst.msk [vmem:[%s904 + $0x20] sm:$0x1] %vm598, %v899
      %s910 = scalar_lea.vmem %s5, 8
      %v911 = vld [vmem:[%s910] sm:$0xf]
      %v912 = vld [vmem:[%s910 + $0x4] sm:$0xf]
      %s913 = scalar_lea.vmem %s8, 1
      %v914 = vld [vmem:[%s913] sm:$0x1]
      %v916 = vlaneseq
      %v917 = vshrl.u32 %v916, 7
      %v918 = vsub.s32 0, %v917
      %v919 = vrot.slane %v914, %v918
      %v923 = vunpack.c.l.b16 %v911
      %v924 = vunpack.c.l.b16 %v912
      %v925 = vpack.c.b16 %v924, %v923
      %927 = vmatprep.subr.bf16.mxu0 0
      %928 = vmatpush1.bf16.msra.mxu0 0
      %929 = vmatprep.subr.bf16.mxu0 0
      %930 = vmatpush1.bf16.msra.mxu0 0
      %931 = vmatprep.subr.bf16.mxu0 0
      %932 = vmatpush1.bf16.msra.mxu0 0
      %933 = vmatprep.subr.bf16.mxu0 0
      %934 = vmatpush1.bf16.msra.mxu0 0
      %935 = vmatprep.subr.bf16.mxu0 0
      %936 = vmatpush1.bf16.msra.mxu0 0
      %937 = vmatprep.subr.bf16.mxu0 0
      %938 = vmatpush1.bf16.msra.mxu0 0
      %939 = vmatprep.subr.bf16.mxu0 0
      %940 = vmatpush1.bf16.msra.mxu0 0
      %941 = vmatprep.subr.bf16.mxu0 0
      %942 = vmatpush1.bf16.msra.mxu0 %v925
      %943 = vmatprep.subr.bf16.mxu0 0
      %944 = vmatpush2.bf16.msra.mxu0 0
      %945 = vmatprep.subr.bf16.mxu0 0
      %946 = vmatpush2.bf16.msra.mxu0 0
      %947 = vmatprep.subr.bf16.mxu0 0
      %948 = vmatpush2.bf16.msra.mxu0 0
      %949 = vmatprep.subr.bf16.mxu0 0
      %950 = vmatpush2.bf16.msra.mxu0 0
      %951 = vmatprep.subr.bf16.mxu0 0
      %952 = vmatpush2.bf16.msra.mxu0 0
      %953 = vmatprep.subr.bf16.mxu0 0
      %954 = vmatpush2.bf16.msra.mxu0 0
      %955 = vmatprep.subr.bf16.mxu0 0
      %956 = vmatpush2.bf16.msra.mxu0 0
      %957 = vmatprep.subr.bf16.mxu0 0
      %958 = vmatpush2.bf16.msra.mxu0 0
      %959 = vmatprep.mubr.bf16.mxu0 0
      %960 = vmatmul.mubr.bf16.gmra.mxu0 %v529
      %v961 = vpop.f32.mrf.mxu0
      %v962 = vadd.f32 %v919, %v961
      %v963 = vpop.f32.mrf.mxu0
      %v964 = vpop.f32.mrf.mxu0
      %v965 = vadd.f32 %v919, %v964
      %v966 = vpop.f32.mrf.mxu0
      %967 = vmatprep.mubr.bf16.mxu0 0
      %968 = vmatmul.mubr.bf16.gmra.mxu0 %v532
      %v969 = vpop.f32.mrf.mxu0
      %v970 = vadd.f32 %v919, %v969
      %v971 = vpop.f32.mrf.mxu0
      %v972 = vpop.f32.mrf.mxu0
      %v973 = vadd.f32 %v919, %v972
      %v974 = vpop.f32.mrf.mxu0
      %975 = vmatprep.mubr.bf16.mxu0 0
      %976 = vmatmul.mubr.bf16.gmra.mxu0 %v535
      %v977 = vpop.f32.mrf.mxu0
      %v978 = vadd.f32 %v919, %v977
      %v979 = vpop.f32.mrf.mxu0
      %v980 = vpop.f32.mrf.mxu0
      %v981 = vpop.f32.mrf.mxu0
      %982 = vdwg.mxu0
      %s983 = scalar_lea.vmem %s411, 40
      %984 = vst.msk [vmem:[%s983] sm:$0xff] %vm593, %v962
      %985 = vst.msk [vmem:[%s983 + $0x8] sm:$0xff] %vm593, %v965
      %986 = vst.msk [vmem:[%s983 + $0x10] sm:$0xff] %vm593, %v970
      %987 = vst.msk [vmem:[%s983 + $0x18] sm:$0xff] %vm593, %v973
      %988 = vst.msk [vmem:[%s983 + $0x20] sm:$0x1] %vm598, %v978
      %p989 = scmp.lt.s32.totalorder %s23, 1
      %s990 = scalar_select %p989, %s23, 1
      %s991 = smul.addr %s990, 10
      %s992 = smul.addr %s991, 8
      %s993 = scalar_lea.vmem %s9, %s992
      %p994 = scmp.lt.s32.totalorder %s23, 1
      %s995 = scalar_select %p994, %s23, 1
      %s996 = smul.addr %s995, 10
      %s997 = smul.addr %s996, 8
      %s998 = scalar_lea.vmem %s10, %s997
      %p999 = scmp.lt.s32.totalorder %s23, 1
      %s1000 = scalar_select %p999, %s23, 1
      %s1001 = smul.addr %s1000, 10
      %s1002 = smul.addr %s1001, 8
      %s1003 = scalar_lea.vmem %s11, %s1002
      // Predicated region
      $region57: #{mvit_forward.4} parent=55 // pred_check
        %p1004 = pneg %p235
      $region58: #{mvit_forward.4} parent=55 // pred_check_branch
        %1006 = sbr.rel (%p1004) target = $region60
      $region59: #{mvit_forward.4} parent=55 // pred_region
        _
      $region60: #{mvit_forward.4} parent=55 // pred_fallthru
        _
      // Predicated region
      $region61: #{mvit_forward.4} parent=55 // pred_check
        %p1007 = pneg %p261
      $region62: #{mvit_forward.4} parent=55 // pred_check_branch
        %1009 = sbr.rel (%p1007) target = $region64
      $region63: #{mvit_forward.4} parent=55 // pred_region
        _
      $region64: #{mvit_forward.4} parent=55 // pred_fallthru
        _
      // Predicated region
      $region65: #{mvit_forward.4} parent=55 // pred_check
        %p1010 = pneg %p287
      $region66: #{mvit_forward.4} parent=55 // pred_check_branch
        %1012 = sbr.rel (%p1010) target = $region68
      $region67: #{mvit_forward.4} parent=55 // pred_region
        _
      $region68: #{mvit_forward.4} parent=55 // pred_fallthru
        _
    $region56: #{mvit_forward.4} parent=5 // pred_fallthru
      _
    %p1013 = scmp.le.s32.totalorder 2, %s18
    // Predicated region
    $region69: #{mvit_forward.4} parent=5 // pred_check
      %p1014 = pneg %p1013
    $region70: #{mvit_forward.4} parent=5 // pred_check_branch
      %1016 = sbr.rel (%p1014) target = $region72
    $region71: #{mvit_forward.4} parent=5 // pred_region
      %s1017 = ssub.s32 %s18, 2
      // Predicated region
      $region73: #{mvit_forward.4} parent=71 // pred_check
        %p1018 = pneg %p241
      $region74: #{mvit_forward.4} parent=71 // pred_check_branch
        %1020 = sbr.rel (%p1018) target = $region76
      $region75: #{mvit_forward.4} parent=71 // pred_region
        %p1021 = scmp.lt.s32.totalorder %s24, 1
        %s1022 = scalar_select %p1021, %s24, 1
        %s1023 = smul.addr %s1022, 10
        %s1024 = smul.addr %s1023, 8
        %s1025 = scalar_lea.vmem %s9, %s1024
      $region76: #{mvit_forward.4} parent=71 // pred_fallthru
        _
      // Predicated region
      $region77: #{mvit_forward.4} parent=71 // pred_check
        %p1026 = pneg %p267
      $region78: #{mvit_forward.4} parent=71 // pred_check_branch
        %1028 = sbr.rel (%p1026) target = $region80
      $region79: #{mvit_forward.4} parent=71 // pred_region
        %p1029 = scmp.lt.s32.totalorder %s24, 1
        %s1030 = scalar_select %p1029, %s24, 1
        %s1031 = smul.addr %s1030, 10
        %s1032 = smul.addr %s1031, 8
        %s1033 = scalar_lea.vmem %s10, %s1032
      $region80: #{mvit_forward.4} parent=71 // pred_fallthru
        _
      // Predicated region
      $region81: #{mvit_forward.4} parent=71 // pred_check
        %p1034 = pneg %p293
      $region82: #{mvit_forward.4} parent=71 // pred_check_branch
        %1036 = sbr.rel (%p1034) target = $region84
      $region83: #{mvit_forward.4} parent=71 // pred_region
        %p1037 = scmp.lt.s32.totalorder %s24, 1
        %s1038 = scalar_select %p1037, %s24, 1
        %s1039 = smul.addr %s1038, 10
        %s1040 = smul.addr %s1039, 8
        %s1041 = scalar_lea.vmem %s11, %s1040
      $region84: #{mvit_forward.4} parent=71 // pred_fallthru
        _
    $region72: #{mvit_forward.4} parent=5 // pred_fallthru
      _
  $region6: #{mvit_forward.4} parent=0 // loop_footer
    %s22 = sadd.s32 1, %s18
  $region7: #{mvit_forward.4} parent=0 // loop_footer_branch
    %17 = sbr.rel target = $region3
  $region8: #{mvit_forward.4} parent=0 // loop_exit
    _

// kernel: mvit_forward.5
$region0: #{mvit_forward.5}
  #allocation0 [shape = 'u32[]', space=smem, size = 0x4, offset = 0x4, fixed_abs, tag = 'smem constant byte address 0x4 - core index']
  #allocation1 [shape = 'u32[144,128]{1,0:T(1,128)}', space=vmem, size = 0x12000, scoped, tag = 'internal scratch']
  %s0 = inlined_call_operand.vmem [shape: f32[2,2,33,8], index: 0, kind: input, shape index: {}]
  %s1 = inlined_call_operand.vmem [shape: f32[2,2,9,8], index: 1, kind: input, shape index: {}]
  %s2 = inlined_call_operand.vmem [shape: f32[2,2,9,8], index: 2, kind: input, shape index: {}]
  %s3 = inlined_call_operand.vmem [shape: f32[1,8], index: 3, kind: input, shape index: {}]
  %s4 = inlined_call_operand.vmem [shape: f32[1,8], index: 4, kind: input, shape index: {}]
  %s5 = inlined_call_operand.vmem [shape: f32[1,8], index: 5, kind: input, shape index: {}]
  %s6 = inlined_call_operand.vmem [shape: f32[1,8], index: 6, kind: input, shape index: {}]
  %s7 = inlined_call_operand.vmem [shape: bf16[2,8,16], index: 7, kind: input, shape index: {}]
  %s8 = inlined_call_operand.vmem [shape: f32[1,16], index: 8, kind: input, shape index: {}]
  %s9 = inlined_call_operand.vmem [shape: f32[2,33,16], index: 9, kind: input, shape index: {}]
  %s10 = inlined_call_operand.vmem [shape: f32[1,16], index: 10, kind: input, shape index: {}]
  %s11 = inlined_call_operand.vmem [shape: f32[1,16], index: 11, kind: input, shape index: {}]
  %s12 = inlined_call_operand.vmem [shape: bf16[16,64], index: 12, kind: input, shape index: {}]
  %s13 = inlined_call_operand.vmem [shape: f32[1,64], index: 13, kind: input, shape index: {}]
  %s14 = inlined_call_operand.vmem [shape: bf16[64,16], index: 14, kind: input, shape index: {}]
  %s15 = inlined_call_operand.vmem [shape: f32[1,16], index: 15, kind: input, shape index: {}]
  %s16 = inlined_call_operand.vmem [shape: f32[2,33,16], index: 16, kind: output, shape index: {}]
  %s17 = sld [smem:[#allocation0]]
  $region97: #{mvit_forward.5} parent=0
    _
  %s19 = ssub.s32 1, %s17
  %s20 = scalar_select 0, %s19, %s17
  loop: start=0, step=1, limit=4
  $region2: #{mvit_forward.5} parent=0 // loop_pre_header
    _
  $region3: #{mvit_forward.5} parent=0 // loop_header
    %s22 = sphi 0, %s26
    %p23 = scmp.ge.s32.totalorder %s22, 4
    %s32 = sphi 0, %s34
    %s35 = sphi 0, %s32
    %s36 = sphi 0, %s35
    %s52 = sphi 0, %s36
    %s58 = sphi 0, %s60
    %s61 = sphi 0, %s58
    %s62 = sphi 0, %s61
    %s78 = sphi 0, %s62
    %s84 = sphi 0, %s86
    %s87 = sphi 0, %s84
    %s88 = sphi 0, %s87
    %s104 = sphi 0, %s88
    %s108 = sphi 0, %s108
    %s110 = sphi 0, %s108
    %s111 = sphi 0, %s110
    %s125 = sphi 0, %s111
    %s129 = sphi 0, %s129
    %s131 = sphi 0, %s129
    %s132 = sphi 0, %s131
    %s146 = sphi 0, %s132
    %s150 = sphi 0, %s150
    %s152 = sphi 0, %s150
    %s153 = sphi 0, %s152
    %s167 = sphi 0, %s153
    %s171 = sphi 0, %s171
    %s173 = sphi 0, %s171
    %s174 = sphi 0, %s173
    %s188 = sphi 0, %s174
    %s192 = sphi 0, %s192
    %s194 = sphi 0, %s192
    %s195 = sphi 0, %s194
    %s209 = sphi 0, %s195
    %s213 = sphi 0, %s213
    %s215 = sphi 0, %s213
    %s216 = sphi 0, %s215
    %s230 = sphi 0, %s216
    %s236 = sphi 0, %s238
    %s239 = sphi 0, %s236
    %s240 = sphi 0, %s239
    %s256 = sphi 0, %s240
    %s260 = sphi 0, %s260
    %s262 = sphi 0, %s260
    %s263 = sphi 0, %s262
    %s277 = sphi 0, %s263
    %s281 = sphi 0, %s281
    %s283 = sphi 0, %s281
    %s284 = sphi 0, %s283
    %s298 = sphi 0, %s284
    %s302 = sphi 0, %s302
    %s304 = sphi 0, %s302
    %s305 = sphi 0, %s304
    %s319 = sphi 0, %s305
    %s323 = sphi 0, %s323
    %s325 = sphi 0, %s323
    %s326 = sphi 0, %s325
    %s340 = sphi 0, %s326
    %s344 = sphi 0, %s344
    %s346 = sphi 0, %s344
    %s347 = sphi 0, %s346
    %s361 = sphi 0, %s347
    %s365 = sphi 0, %s365
    %s367 = sphi 0, %s365
    %s368 = sphi 0, %s367
    %s382 = sphi 0, %s368
    %s388 = sphi 0, %s390
    %s391 = sphi 0, %s388
    %s392 = sphi 0, %s391
    %s408 = sphi 0, %s392
  $region4: #{mvit_forward.5} parent=0 // loop_header_branch
    %25 = sbr.rel (%p23) target = $region8
  $region5: #{mvit_forward.5} parent=0 // loop_body
    %s27 = ssub.s32 %s22, 1
    %s28 = ssub.s32 %s22, 2
    %s29 = sadd.s32 %s22, 1
    %s30 = ssub.s32 %s22, %s29
    %p31 = scmp.eq.s32.totalorder %s30, 0
    %s33 = sadd.s32 %s32, 1
    %s34 = scalar_select %p31, %s32, %s33
    %p37 = pneg %p31
    %p38 = scmp.eq.s32.totalorder %s22, 1
    %p39 = por %p37, %p38
    %p40 = scmp.ne.s32.totalorder %s32, %s35
    %p41 = scmp.eq.s32.totalorder %s22, 0
    %p42 = por %p40, %p41
    %p43 = scmp.ne.s32.totalorder %s32, %s35
    %p44 = scmp.eq.s32.totalorder %s27, 1
    %p45 = por %p43, %p44
    %p46 = scmp.ne.s32.totalorder %s35, %s36
    %p47 = scmp.eq.s32.totalorder %s27, 0
    %p48 = por %p46, %p47
    %p49 = scmp.ne.s32.totalorder %s35, %s36
    %p50 = scmp.eq.s32.totalorder %s28, 1
    %p51 = por %p49, %p50
    %p53 = scmp.ne.s32.totalorder %s36, %s52
    %p54 = scmp.eq.s32.totalorder %s28, 0
    %p55 = por %p53, %p54
    %s56 = ssub.s32 %s22, %s29
    %p57 = scmp.eq.s32.totalorder %s56, 0
    %s59 = sadd.s32 %s58, 1
    %s60 = scalar_select %p57, %s58, %s59
    %p63 = pneg %p57
    %p64 = scmp.eq.s32.totalorder %s22, 1
    %p65 = por %p63, %p64
    %p66 = scmp.ne.s32.totalorder %s58, %s61
    %p67 = scmp.eq.s32.totalorder %s22, 0
    %p68 = por %p66, %p67
    %p69 = scmp.ne.s32.totalorder %s58, %s61
    %p70 = scmp.eq.s32.totalorder %s27, 1
    %p71 = por %p69, %p70
    %p72 = scmp.ne.s32.totalorder %s61, %s62
    %p73 = scmp.eq.s32.totalorder %s27, 0
    %p74 = por %p72, %p73
    %p75 = scmp.ne.s32.totalorder %s61, %s62
    %p76 = scmp.eq.s32.totalorder %s28, 1
    %p77 = por %p75, %p76
    %p79 = scmp.ne.s32.totalorder %s62, %s78
    %p80 = scmp.eq.s32.totalorder %s28, 0
    %p81 = por %p79, %p80
    %s82 = ssub.s32 %s22, %s29
    %p83 = scmp.eq.s32.totalorder %s82, 0
    %s85 = sadd.s32 %s84, 1
    %s86 = scalar_select %p83, %s84, %s85
    %p89 = pneg %p83
    %p90 = scmp.eq.s32.totalorder %s22, 1
    %p91 = por %p89, %p90
    %p92 = scmp.ne.s32.totalorder %s84, %s87
    %p93 = scmp.eq.s32.totalorder %s22, 0
    %p94 = por %p92, %p93
    %p95 = scmp.ne.s32.totalorder %s84, %s87
    %p96 = scmp.eq.s32.totalorder %s27, 1
    %p97 = por %p95, %p96
    %p98 = scmp.ne.s32.totalorder %s87, %s88
    %p99 = scmp.eq.s32.totalorder %s27, 0
    %p100 = por %p98, %p99
    %p101 = scmp.ne.s32.totalorder %s87, %s88
    %p102 = scmp.eq.s32.totalorder %s28, 1
    %p103 = por %p101, %p102
    %p105 = scmp.ne.s32.totalorder %s88, %s104
    %p106 = scmp.eq.s32.totalorder %s28, 0
    %p107 = por %p105, %p106
    %s109 = sadd.s32 %s108, 1
    %p112 = scmp.eq.s32.totalorder %s22, 1
    %p113 = scmp.ne.s32.totalorder %s108, %s110
    %p114 = scmp.eq.s32.totalorder %s22, 0
    %p115 = por %p113, %p114
    %p116 = scmp.ne.s32.totalorder %s108, %s110
    %p117 = scmp.eq.s32.totalorder %s27, 1
    %p118 = por %p116, %p117
    %p119 = scmp.ne.s32.totalorder %s110, %s111
    %p120 = scmp.eq.s32.totalorder %s27, 0
    %p121 = por %p119, %p120
    %p122 = scmp.ne.s32.totalorder %s110, %s111
    %p123 = scmp.eq.s32.totalorder %s28, 1
    %p124 = por %p122, %p123
    %p126 = scmp.ne.s32.totalorder %s111, %s125
    %p127 = scmp.eq.s32.totalorder %s28, 0
    %p128 = por %p126, %p127
    %s130 = sadd.s32 %s129, 1
    %p133 = scmp.eq.s32.totalorder %s22, 1
    %p134 = scmp.ne.s32.totalorder %s129, %s131
    %p135 = scmp.eq.s32.totalorder %s22, 0
    %p136 = por %p134, %p135
    %p137 = scmp.ne.s32.totalorder %s129, %s131
    %p138 = scmp.eq.s32.totalorder %s27, 1
    %p139 = por %p137, %p138
    %p140 = scmp.ne.s32.totalorder %s131, %s132
    %p141 = scmp.eq.s32.totalorder %s27, 0
    %p142 = por %p140, %p141
    %p143 = scmp.ne.s32.totalorder %s131, %s132
    %p144 = scmp.eq.s32.totalorder %s28, 1
    %p145 = por %p143, %p144
    %p147 = scmp.ne.s32.totalorder %s132, %s146
    %p148 = scmp.eq.s32.totalorder %s28, 0
    %p149 = por %p147, %p148
    %s151 = sadd.s32 %s150, 1
    %p154 = scmp.eq.s32.totalorder %s22, 1
    %p155 = scmp.ne.s32.totalorder %s150, %s152
    %p156 = scmp.eq.s32.totalorder %s22, 0
    %p157 = por %p155, %p156
    %p158 = scmp.ne.s32.totalorder %s150, %s152
    %p159 = scmp.eq.s32.totalorder %s27, 1
    %p160 = por %p158, %p159
    %p161 = scmp.ne.s32.totalorder %s152, %s153
    %p162 = scmp.eq.s32.totalorder %s27, 0
    %p163 = por %p161, %p162
    %p164 = scmp.ne.s32.totalorder %s152, %s153
    %p165 = scmp.eq.s32.totalorder %s28, 1
    %p166 = por %p164, %p165
    %p168 = scmp.ne.s32.totalorder %s153, %s167
    %p169 = scmp.eq.s32.totalorder %s28, 0
    %p170 = por %p168, %p169
    %s172 = sadd.s32 %s171, 1
    %p175 = scmp.eq.s32.totalorder %s22, 1
    %p176 = scmp.ne.s32.totalorder %s171, %s173
    %p177 = scmp.eq.s32.totalorder %s22, 0
    %p178 = por %p176, %p177
    %p179 = scmp.ne.s32.totalorder %s171, %s173
    %p180 = scmp.eq.s32.totalorder %s27, 1
    %p181 = por %p179, %p180
    %p182 = scmp.ne.s32.totalorder %s173, %s174
    %p183 = scmp.eq.s32.totalorder %s27, 0
    %p184 = por %p182, %p183
    %p185 = scmp.ne.s32.totalorder %s173, %s174
    %p186 = scmp.eq.s32.totalorder %s28, 1
    %p187 = por %p185, %p186
    %p189 = scmp.ne.s32.totalorder %s174, %s188
    %p190 = scmp.eq.s32.totalorder %s28, 0
    %p191 = por %p189, %p190
    %s193 = sadd.s32 %s192, 1
    %p196 = scmp.eq.s32.totalorder %s22, 1
    %p197 = scmp.ne.s32.totalorder %s192, %s194
    %p198 = scmp.eq.s32.totalorder %s22, 0
    %p199 = por %p197, %p198
    %p200 = scmp.ne.s32.totalorder %s192, %s194
    %p201 = scmp.eq.s32.totalorder %s27, 1
    %p202 = por %p200, %p201
    %p203 = scmp.ne.s32.totalorder %s194, %s195
    %p204 = scmp.eq.s32.totalorder %s27, 0
    %p205 = por %p203, %p204
    %p206 = scmp.ne.s32.totalorder %s194, %s195
    %p207 = scmp.eq.s32.totalorder %s28, 1
    %p208 = por %p206, %p207
    %p210 = scmp.ne.s32.totalorder %s195, %s209
    %p211 = scmp.eq.s32.totalorder %s28, 0
    %p212 = por %p210, %p211
    %s214 = sadd.s32 %s213, 1
    %p217 = scmp.eq.s32.totalorder %s22, 1
    %p218 = scmp.ne.s32.totalorder %s213, %s215
    %p219 = scmp.eq.s32.totalorder %s22, 0
    %p220 = por %p218, %p219
    %p221 = scmp.ne.s32.totalorder %s213, %s215
    %p222 = scmp.eq.s32.totalorder %s27, 1
    %p223 = por %p221, %p222
    %p224 = scmp.ne.s32.totalorder %s215, %s216
    %p225 = scmp.eq.s32.totalorder %s27, 0
    %p226 = por %p224, %p225
    %p227 = scmp.ne.s32.totalorder %s215, %s216
    %p228 = scmp.eq.s32.totalorder %s28, 1
    %p229 = por %p227, %p228
    %p231 = scmp.ne.s32.totalorder %s216, %s230
    %p232 = scmp.eq.s32.totalorder %s28, 0
    %p233 = por %p231, %p232
    %s234 = ssub.s32 %s22, %s29
    %p235 = scmp.eq.s32.totalorder %s234, 0
    %s237 = sadd.s32 %s236, 1
    %s238 = scalar_select %p235, %s236, %s237
    %p241 = pneg %p235
    %p242 = scmp.eq.s32.totalorder %s22, 1
    %p243 = por %p241, %p242
    %p244 = scmp.ne.s32.totalorder %s236, %s239
    %p245 = scmp.eq.s32.totalorder %s22, 0
    %p246 = por %p244, %p245
    %p247 = scmp.ne.s32.totalorder %s236, %s239
    %p248 = scmp.eq.s32.totalorder %s27, 1
    %p249 = por %p247, %p248
    %p250 = scmp.ne.s32.totalorder %s239, %s240
    %p251 = scmp.eq.s32.totalorder %s27, 0
    %p252 = por %p250, %p251
    %p253 = scmp.ne.s32.totalorder %s239, %s240
    %p254 = scmp.eq.s32.totalorder %s28, 1
    %p255 = por %p253, %p254
    %p257 = scmp.ne.s32.totalorder %s240, %s256
    %p258 = scmp.eq.s32.totalorder %s28, 0
    %p259 = por %p257, %p258
    %s261 = sadd.s32 %s260, 1
    %p264 = scmp.eq.s32.totalorder %s22, 1
    %p265 = scmp.ne.s32.totalorder %s260, %s262
    %p266 = scmp.eq.s32.totalorder %s22, 0
    %p267 = por %p265, %p266
    %p268 = scmp.ne.s32.totalorder %s260, %s262
    %p269 = scmp.eq.s32.totalorder %s27, 1
    %p270 = por %p268, %p269
    %p271 = scmp.ne.s32.totalorder %s262, %s263
    %p272 = scmp.eq.s32.totalorder %s27, 0
    %p273 = por %p271, %p272
    %p274 = scmp.ne.s32.totalorder %s262, %s263
    %p275 = scmp.eq.s32.totalorder %s28, 1
    %p276 = por %p274, %p275
    %p278 = scmp.ne.s32.totalorder %s263, %s277
    %p279 = scmp.eq.s32.totalorder %s28, 0
    %p280 = por %p278, %p279
    %s282 = sadd.s32 %s281, 1
    %p285 = scmp.eq.s32.totalorder %s22, 1
    %p286 = scmp.ne.s32.totalorder %s281, %s283
    %p287 = scmp.eq.s32.totalorder %s22, 0
    %p288 = por %p286, %p287
    %p289 = scmp.ne.s32.totalorder %s281, %s283
    %p290 = scmp.eq.s32.totalorder %s27, 1
    %p291 = por %p289, %p290
    %p292 = scmp.ne.s32.totalorder %s283, %s284
    %p293 = scmp.eq.s32.totalorder %s27, 0
    %p294 = por %p292, %p293
    %p295 = scmp.ne.s32.totalorder %s283, %s284
    %p296 = scmp.eq.s32.totalorder %s28, 1
    %p297 = por %p295, %p296
    %p299 = scmp.ne.s32.totalorder %s284, %s298
    %p300 = scmp.eq.s32.totalorder %s28, 0
    %p301 = por %p299, %p300
    %s303 = sadd.s32 %s302, 1
    %p306 = scmp.eq.s32.totalorder %s22, 1
    %p307 = scmp.ne.s32.totalorder %s302, %s304
    %p308 = scmp.eq.s32.totalorder %s22, 0
    %p309 = por %p307, %p308
    %p310 = scmp.ne.s32.totalorder %s302, %s304
    %p311 = scmp.eq.s32.totalorder %s27, 1
    %p312 = por %p310, %p311
    %p313 = scmp.ne.s32.totalorder %s304, %s305
    %p314 = scmp.eq.s32.totalorder %s27, 0
    %p315 = por %p313, %p314
    %p316 = scmp.ne.s32.totalorder %s304, %s305
    %p317 = scmp.eq.s32.totalorder %s28, 1
    %p318 = por %p316, %p317
    %p320 = scmp.ne.s32.totalorder %s305, %s319
    %p321 = scmp.eq.s32.totalorder %s28, 0
    %p322 = por %p320, %p321
    %s324 = sadd.s32 %s323, 1
    %p327 = scmp.eq.s32.totalorder %s22, 1
    %p328 = scmp.ne.s32.totalorder %s323, %s325
    %p329 = scmp.eq.s32.totalorder %s22, 0
    %p330 = por %p328, %p329
    %p331 = scmp.ne.s32.totalorder %s323, %s325
    %p332 = scmp.eq.s32.totalorder %s27, 1
    %p333 = por %p331, %p332
    %p334 = scmp.ne.s32.totalorder %s325, %s326
    %p335 = scmp.eq.s32.totalorder %s27, 0
    %p336 = por %p334, %p335
    %p337 = scmp.ne.s32.totalorder %s325, %s326
    %p338 = scmp.eq.s32.totalorder %s28, 1
    %p339 = por %p337, %p338
    %p341 = scmp.ne.s32.totalorder %s326, %s340
    %p342 = scmp.eq.s32.totalorder %s28, 0
    %p343 = por %p341, %p342
    %s345 = sadd.s32 %s344, 1
    %p348 = scmp.eq.s32.totalorder %s22, 1
    %p349 = scmp.ne.s32.totalorder %s344, %s346
    %p350 = scmp.eq.s32.totalorder %s22, 0
    %p351 = por %p349, %p350
    %p352 = scmp.ne.s32.totalorder %s344, %s346
    %p353 = scmp.eq.s32.totalorder %s27, 1
    %p354 = por %p352, %p353
    %p355 = scmp.ne.s32.totalorder %s346, %s347
    %p356 = scmp.eq.s32.totalorder %s27, 0
    %p357 = por %p355, %p356
    %p358 = scmp.ne.s32.totalorder %s346, %s347
    %p359 = scmp.eq.s32.totalorder %s28, 1
    %p360 = por %p358, %p359
    %p362 = scmp.ne.s32.totalorder %s347, %s361
    %p363 = scmp.eq.s32.totalorder %s28, 0
    %p364 = por %p362, %p363
    %s366 = sadd.s32 %s365, 1
    %p369 = scmp.eq.s32.totalorder %s22, 1
    %p370 = scmp.ne.s32.totalorder %s365, %s367
    %p371 = scmp.eq.s32.totalorder %s22, 0
    %p372 = por %p370, %p371
    %p373 = scmp.ne.s32.totalorder %s365, %s367
    %p374 = scmp.eq.s32.totalorder %s27, 1
    %p375 = por %p373, %p374
    %p376 = scmp.ne.s32.totalorder %s367, %s368
    %p377 = scmp.eq.s32.totalorder %s27, 0
    %p378 = por %p376, %p377
    %p379 = scmp.ne.s32.totalorder %s367, %s368
    %p380 = scmp.eq.s32.totalorder %s28, 1
    %p381 = por %p379, %p380
    %p383 = scmp.ne.s32.totalorder %s368, %s382
    %p384 = scmp.eq.s32.totalorder %s28, 0
    %p385 = por %p383, %p384
    %s386 = ssub.s32 %s22, %s29
    %p387 = scmp.eq.s32.totalorder %s386, 0
    %s389 = sadd.s32 %s388, 1
    %s390 = scalar_select %p387, %s388, %s389
    %p393 = pneg %p387
    %p394 = scmp.eq.s32.totalorder %s22, 1
    %p395 = por %p393, %p394
    %p396 = scmp.ne.s32.totalorder %s388, %s391
    %p397 = scmp.eq.s32.totalorder %s22, 0
    %p398 = por %p396, %p397
    %p399 = scmp.ne.s32.totalorder %s388, %s391
    %p400 = scmp.eq.s32.totalorder %s27, 1
    %p401 = por %p399, %p400
    %p402 = scmp.ne.s32.totalorder %s391, %s392
    %p403 = scmp.eq.s32.totalorder %s27, 0
    %p404 = por %p402, %p403
    %p405 = scmp.ne.s32.totalorder %s391, %s392
    %p406 = scmp.eq.s32.totalorder %s28, 1
    %p407 = por %p405, %p406
    %p409 = scmp.ne.s32.totalorder %s392, %s408
    %p410 = scmp.eq.s32.totalorder %s28, 0
    %p411 = por %p409, %p410
    %p412 = scmp.le.s32.totalorder 1, %s22
    %p413 = scmp.lt.s32.totalorder %s22, 3
    %p414 = pnand %p412, %p413
    %p415 = pneg %p414
    // Predicated region
    $region9: #{mvit_forward.5} parent=5 // pred_check
      _
    $region10: #{mvit_forward.5} parent=5 // pred_check_branch
      %417 = sbr.rel (%p414) target = $region12
    $region11: #{mvit_forward.5} parent=5 // pred_region
      %s418 = ssub.s32 %s22, 1
      // Predicated region
      $region13: #{mvit_forward.5} parent=11 // pred_check
        %p419 = pneg %p121
      $region14: #{mvit_forward.5} parent=11 // pred_check_branch
        %421 = sbr.rel (%p419) target = $region16
      $region15: #{mvit_forward.5} parent=11 // pred_region
        _
      $region16: #{mvit_forward.5} parent=11 // pred_fallthru
        _
      // Predicated region
      $region17: #{mvit_forward.5} parent=11 // pred_check
        %p422 = pneg %p142
      $region18: #{mvit_forward.5} parent=11 // pred_check_branch
        %424 = sbr.rel (%p422) target = $region20
      $region19: #{mvit_forward.5} parent=11 // pred_region
        _
      $region20: #{mvit_forward.5} parent=11 // pred_fallthru
        _
      // Predicated region
      $region21: #{mvit_forward.5} parent=11 // pred_check
        %p425 = pneg %p163
      $region22: #{mvit_forward.5} parent=11 // pred_check_branch
        %427 = sbr.rel (%p425) target = $region24
      $region23: #{mvit_forward.5} parent=11 // pred_region
        _
      $region24: #{mvit_forward.5} parent=11 // pred_fallthru
        _
      // Predicated region
      $region25: #{mvit_forward.5} parent=11 // pred_check
        %p428 = pneg %p184
      $region26: #{mvit_forward.5} parent=11 // pred_check_branch
        %430 = sbr.rel (%p428) target = $region28
      $region27: #{mvit_forward.5} parent=11 // pred_region
        _
      $region28: #{mvit_forward.5} parent=11 // pred_fallthru
        _
      // Predicated region
      $region29: #{mvit_forward.5} parent=11 // pred_check
        %p431 = pneg %p205
      $region30: #{mvit_forward.5} parent=11 // pred_check_branch
        %433 = sbr.rel (%p431) target = $region32
      $region31: #{mvit_forward.5} parent=11 // pred_region
        _
      $region32: #{mvit_forward.5} parent=11 // pred_fallthru
        _
      // Predicated region
      $region33: #{mvit_forward.5} parent=11 // pred_check
        %p434 = pneg %p226
      $region34: #{mvit_forward.5} parent=11 // pred_check_branch
        %436 = sbr.rel (%p434) target = $region36
      $region35: #{mvit_forward.5} parent=11 // pred_region
        _
      $region36: #{mvit_forward.5} parent=11 // pred_fallthru
        _
      // Predicated region
      $region37: #{mvit_forward.5} parent=11 // pred_check
        %p437 = pneg %p273
      $region38: #{mvit_forward.5} parent=11 // pred_check_branch
        %439 = sbr.rel (%p437) target = $region40
      $region39: #{mvit_forward.5} parent=11 // pred_region
        _
      $region40: #{mvit_forward.5} parent=11 // pred_fallthru
        _
      // Predicated region
      $region41: #{mvit_forward.5} parent=11 // pred_check
        %p440 = pneg %p294
      $region42: #{mvit_forward.5} parent=11 // pred_check_branch
        %442 = sbr.rel (%p440) target = $region44
      $region43: #{mvit_forward.5} parent=11 // pred_region
        _
      $region44: #{mvit_forward.5} parent=11 // pred_fallthru
        _
      // Predicated region
      $region45: #{mvit_forward.5} parent=11 // pred_check
        %p443 = pneg %p315
      $region46: #{mvit_forward.5} parent=11 // pred_check_branch
        %445 = sbr.rel (%p443) target = $region48
      $region47: #{mvit_forward.5} parent=11 // pred_region
        _
      $region48: #{mvit_forward.5} parent=11 // pred_fallthru
        _
      // Predicated region
      $region49: #{mvit_forward.5} parent=11 // pred_check
        %p446 = pneg %p336
      $region50: #{mvit_forward.5} parent=11 // pred_check_branch
        %448 = sbr.rel (%p446) target = $region52
      $region51: #{mvit_forward.5} parent=11 // pred_region
        _
      $region52: #{mvit_forward.5} parent=11 // pred_fallthru
        _
      // Predicated region
      $region53: #{mvit_forward.5} parent=11 // pred_check
        %p449 = pneg %p357
      $region54: #{mvit_forward.5} parent=11 // pred_check_branch
        %451 = sbr.rel (%p449) target = $region56
      $region55: #{mvit_forward.5} parent=11 // pred_region
        _
      $region56: #{mvit_forward.5} parent=11 // pred_fallthru
        _
      // Predicated region
      $region57: #{mvit_forward.5} parent=11 // pred_check
        %p452 = pneg %p378
      $region58: #{mvit_forward.5} parent=11 // pred_check_branch
        %454 = sbr.rel (%p452) target = $region60
      $region59: #{mvit_forward.5} parent=11 // pred_region
        _
      $region60: #{mvit_forward.5} parent=11 // pred_fallthru
        _
    $region12: #{mvit_forward.5} parent=5 // pred_fallthru
      _
    %p455 = scmp.lt.s32.totalorder %s22, 2
    // Predicated region
    $region61: #{mvit_forward.5} parent=5 // pred_check
      %p456 = pneg %p455
    $region62: #{mvit_forward.5} parent=5 // pred_check_branch
      %458 = sbr.rel (%p456) target = $region64
    $region63: #{mvit_forward.5} parent=5 // pred_region
      // Predicated region
      $region65: #{mvit_forward.5} parent=63 // pred_check
        %p459 = pneg %p42
      $region66: #{mvit_forward.5} parent=63 // pred_check_branch
        %461 = sbr.rel (%p459) target = $region68
      $region67: #{mvit_forward.5} parent=63 // pred_region
        %p462 = scmp.lt.s32.totalorder %s22, 1
        %s463 = scalar_select %p462, %s22, 1
        %s464 = smul.addr %s463, 10
        %s465 = smul.addr %s464, 8
        %s466 = scalar_lea.vmem %s0, %s465
      $region68: #{mvit_forward.5} parent=63 // pred_fallthru
        _
      // Predicated region
      $region69: #{mvit_forward.5} parent=63 // pred_check
        %p467 = pneg %p68
      $region70: #{mvit_forward.5} parent=63 // pred_check_branch
        %469 = sbr.rel (%p467) target = $region72
      $region71: #{mvit_forward.5} parent=63 // pred_region
        %p470 = scmp.lt.s32.totalorder %s22, 1
        %s471 = scalar_select %p470, %s22, 1
        %s472 = smul.addr %s471, 4
        %s473 = smul.addr %s472, 8
        %s474 = scalar_lea.vmem %s1, %s473
      $region72: #{mvit_forward.5} parent=63 // pred_fallthru
        _
      // Predicated region
      $region73: #{mvit_forward.5} parent=63 // pred_check
        %p475 = pneg %p94
      $region74: #{mvit_forward.5} parent=63 // pred_check_branch
        %477 = sbr.rel (%p475) target = $region76
      $region75: #{mvit_forward.5} parent=63 // pred_region
        %p478 = scmp.lt.s32.totalorder %s22, 1
        %s479 = scalar_select %p478, %s22, 1
        %s480 = smul.addr %s479, 4
        %s481 = smul.addr %s480, 8
        %s482 = scalar_lea.vmem %s2, %s481
      $region76: #{mvit_forward.5} parent=63 // pred_fallthru
        _
      // Predicated region
      $region77: #{mvit_forward.5} parent=63 // pred_check
        %p483 = pneg %p246
      $region78: #{mvit_forward.5} parent=63 // pred_check_branch
        %485 = sbr.rel (%p483) target = $region80
      $region79: #{mvit_forward.5} parent=63 // pred_region
        %p486 = scmp.lt.s32.totalorder %s22, 1
        %s487 = scalar_select %p486, %s22, 1
        %s488 = smul.addr %s487, 5
        %s489 = smul.addr %s488, 8
        %s490 = scalar_lea.vmem %s9, %s489
      $region80: #{mvit_forward.5} parent=63 // pred_fallthru
        _
    $region64: #{mvit_forward.5} parent=5 // pred_fallthru
      _
    %p491 = scmp.le.s32.totalorder 1, %s22
    %p492 = scmp.lt.s32.totalorder %s22, 3
    %p493 = pnand %p491, %p492
    %p494 = pneg %p493
    // Predicated region
    $region81: #{mvit_forward.5} parent=5 // pred_check
      _
    $region82: #{mvit_forward.5} parent=5 // pred_check_branch
      %496 = sbr.rel (%p493) target = $region84
    $region83: #{mvit_forward.5} parent=5 // pred_region
      %s497 = ssub.s32 %s22, 1
      %p498 = scmp.lt.s32.totalorder %s27, 1
      %s499 = scalar_select %p498, %s27, 1
      %s500 = smul.addr %s499, 10
      %s501 = smul.addr %s500, 8
      %s502 = scalar_lea.vmem %s0, %s501
      %p503 = pneg %p48
      %p504 = pneg %p45
      %p505 = scmp.lt.s32.totalorder %s27, 1
      %s506 = scalar_select %p505, %s27, 1
      %s507 = smul.addr %s506, 4
      %s508 = smul.addr %s507, 8
      %s509 = scalar_lea.vmem %s1, %s508
      %p510 = pneg %p74
      %p511 = pneg %p71
      %p512 = scmp.lt.s32.totalorder %s27, 1
      %s513 = scalar_select %p512, %s27, 1
      %s514 = smul.addr %s513, 4
      %s515 = smul.addr %s514, 8
      %s516 = scalar_lea.vmem %s2, %s515
      %p517 = pneg %p100
      %p518 = pneg %p97
      %p519 = pneg %p121
      %p520 = pneg %p118
      %p521 = pneg %p142
      %p522 = pneg %p139
      %p523 = pneg %p163
      %p524 = pneg %p160
      %p525 = pneg %p184
      %p526 = pneg %p181
      %p527 = pneg %p205
      %p528 = pneg %p202
      %p529 = pneg %p226
      %p530 = pneg %p223
      %p531 = scmp.lt.s32.totalorder %s27, 1
      %s532 = scalar_select %p531, %s27, 1
      %s533 = smul.addr %s532, 5
      %s534 = smul.addr %s533, 8
      %s535 = scalar_lea.vmem %s9, %s534
      %p536 = pneg %p252
      %p537 = pneg %p249
      %p538 = pneg %p273
      %p539 = pneg %p270
      %p540 = pneg %p294
      %p541 = pneg %p291
      %p542 = pneg %p315
      %p543 = pneg %p312
      %p544 = pneg %p336
      %p545 = pneg %p333
      %p546 = pneg %p357
      %p547 = pneg %p354
      %p548 = pneg %p378
      %p549 = pneg %p375
      %p550 = pneg %p404
      %p551 = pneg %p401
      %p552 = scmp.lt.s32.totalorder %s27, 1
      %s553 = scalar_select %p552, %s27, 1
      %s554 = smul.addr %s553, 5
      %s555 = smul.addr %s554, 8
      %s556 = scalar_lea.vmem %s16, %s555
      %p557 = scmp.lt.s32.totalorder %s27, 1
      %s558 = scalar_select %p557, %s27, 1
      %s559 = smul.addr %s558, 10
      %s560 = smul.addr %s559, 8
      %s561 = scalar_lea.vmem %s0, %s560
      %p562 = scmp.lt.s32.totalorder %s27, 1
      %s563 = scalar_select %p562, %s27, 1
      %s564 = smul.addr %s563, 4
      %s565 = smul.addr %s564, 8
      %s566 = scalar_lea.vmem %s1, %s565
      %p567 = scmp.lt.s32.totalorder %s27, 1
      %s568 = scalar_select %p567, %s27, 1
      %s569 = smul.addr %s568, 4
      %s570 = smul.addr %s569, 8
      %s571 = scalar_lea.vmem %s2, %s570
      %p572 = scmp.lt.s32.totalorder %s27, 1
      %s573 = scalar_select %p572, %s27, 1
      %s574 = smul.addr %s573, 5
      %s575 = smul.addr %s574, 8
      %s576 = scalar_lea.vmem %s9, %s575
      %p577 = scmp.lt.s32.totalorder %s27, 1
      %s578 = scalar_select %p577, %s27, 1
      %s579 = smul.addr %s578, 5
      %s580 = smul.addr %s579, 8
      %s581 = scalar_lea.vmem %s16, %s580
      %v583 = vld [vmem:[%s561] sm:$0xff]
      %v584 = vld [vmem:[%s561 + $0x8] sm:$0xff]
      %v585 = vld [vmem:[%s561 + $0x10] sm:$0xff]
      %v586 = vld [vmem:[%s561 + $0x18] sm:$0xff]
      %v587 = vld [vmem:[%s561 + $0x20] sm:$0x1]
      %v588 = vld [vmem:[%s561 + $0x28] sm:$0xff]
      %v589 = vld [vmem:[%s561 + $0x30] sm:$0xff]
      %v590 = vld [vmem:[%s561 + $0x38] sm:$0xff]
      %v591 = vld [vmem:[%s561 + $0x40] sm:$0xff]
      %v592 = vld [vmem:[%s561 + $0x48] sm:$0x1]
      %v593 = vld [vmem:[%s566] sm:$0xff]
      %v594 = vld [vmem:[%s566 + $0x8] sm:$0x1]
      %v595 = vld [vmem:[%s566 + $0x10] sm:$0xff]
      %v596 = vld [vmem:[%s566 + $0x18] sm:$0x1]
      %v597 = vld [vmem:[%s571] sm:$0xff]
      %v598 = vld [vmem:[%s571 + $0x8] sm:$0x1]
      %v599 = vld [vmem:[%s571 + $0x10] sm:$0xff]
      %v600 = vld [vmem:[%s571 + $0x18] sm:$0x1]
      %v601 = vld [vmem:[%s3] sm:$0x1]
      %v602 = vld [vmem:[%s4] sm:$0x1]
      %vm603 = vcmask 64512
      %v604 = vsel %vm603, %v593, 0.0
      %605 = vadd.xlane.f32.xlu0 %v604
      %v606 = vpop.xlane.xlu0 %605
      %vm607 = vcmask 57344
      %v608 = vsel %vm607, %v594, 0.0
      %609 = vadd.xlane.f32.xlu0 %v608
      %v610 = vpop.xlane.xlu0 %609
      %v611 = vsel %vm603, %v595, 0.0
      %612 = vadd.xlane.f32.xlu0 %v611
      %v613 = vpop.xlane.xlu0 %612
      %v614 = vsel %vm607, %v596, 0.0
      %615 = vadd.xlane.f32.xlu0 %v614
      %v616 = vpop.xlane.xlu0 %615
      %v617 = vrcp.pop 8.0
      %v618 = vmul.f32 %v606, %v617
      %v619 = vmul.f32 %v610, %v617
      %v620 = vmul.f32 %v613, %v617
      %v621 = vmul.f32 %v616, %v617
      %v622 = vsub.f32 %v593, %v618
      %v623 = vsub.f32 %v594, %v619
      %v624 = vsub.f32 %v595, %v620
      %v625 = vsub.f32 %v596, %v621
      %v626 = vmul.f32 %v622, %v622
      %v627 = vmul.f32 %v623, %v623
      %v628 = vmul.f32 %v624, %v624
      %v629 = vmul.f32 %v625, %v625
      %v630 = vsel %vm603, %v626, 0.0
      %631 = vadd.xlane.f32.xlu0 %v630
      %v632 = vpop.xlane.xlu0 %631
      %v633 = vsel %vm607, %v627, 0.0
      %634 = vadd.xlane.f32.xlu0 %v633
      %v635 = vpop.xlane.xlu0 %634
      %v636 = vsel %vm603, %v628, 0.0
      %637 = vadd.xlane.f32.xlu0 %v636
      %v638 = vpop.xlane.xlu0 %637
      %v639 = vsel %vm607, %v629, 0.0
      %640 = vadd.xlane.f32.xlu0 %v639
      %v641 = vpop.xlane.xlu0 %640
      %v642 = vmul.f32 %v632, %v617
      %v643 = vmul.f32 %v635, %v617
      %v644 = vmul.f32 %v638, %v617
      %v645 = vmul.f32 %v641, %v617
      %v646 = vadd.f32 %v642, 1e-06
      %v647 = vadd.f32 %v643, 1e-06
      %v648 = vadd.f32 %v644, 1e-06
      %v649 = vadd.f32 %v645, 1e-06
      %v650 = vrsqrt.pop %v646
      %v651 = vrsqrt.pop %v647
      %v652 = vrsqrt.pop %v648
      %v653 = vrsqrt.pop %v649
      %v654 = vmul.f32 %v622, %v650
      %v655 = vmul.f32 %v623, %v651
      %v656 = vmul.f32 %v624, %v652
      %v657 = vmul.f32 %v625, %v653
      %v659 = vlaneseq
      %v660 = vshrl.u32 %v659, 7
      %v661 = vsub.s32 0, %v660
      %v662 = vrot.slane %v601, %v661
      %v664 = vmul.f32 %v654, %v662
      %v665 = vmul.f32 %v655, %v662
      %v666 = vmul.f32 %v656, %v662
      %v667 = vmul.f32 %v657, %v662
      %v669 = vlaneseq
      %v670 = vshrl.u32 %v669, 7
      %v671 = vsub.s32 0, %v670
      %v672 = vrot.slane %v602, %v671
      %v674 = vadd.f32 %v664, %v672
      %v675 = vadd.f32 %v665, %v672
      %v676 = vadd.f32 %v666, %v672
      %v677 = vadd.f32 %v667, %v672
      %v678 = vld [vmem:[%s5] sm:$0x1]
      %v679 = vld [vmem:[%s6] sm:$0x1]
      %v680 = vsel %vm603, %v597, 0.0
      %681 = vadd.xlane.f32.xlu0 %v680
      %v682 = vpop.xlane.xlu0 %681
      %v683 = vsel %vm607, %v598, 0.0
      %684 = vadd.xlane.f32.xlu0 %v683
      %v685 = vpop.xlane.xlu0 %684
      %v686 = vsel %vm603, %v599, 0.0
      %687 = vadd.xlane.f32.xlu0 %v686
      %v688 = vpop.xlane.xlu0 %687
      %v689 = vsel %vm607, %v600, 0.0
      %690 = vadd.xlane.f32.xlu0 %v689
      %v691 = vpop.xlane.xlu0 %690
      %v692 = vmul.f32 %v682, %v617
      %v693 = vmul.f32 %v685, %v617
      %v694 = vmul.f32 %v688, %v617
      %v695 = vmul.f32 %v691, %v617
      %v696 = vsub.f32 %v597, %v692
      %v697 = vsub.f32 %v598, %v693
      %v698 = vsub.f32 %v599, %v694
      %v699 = vsub.f32 %v600, %v695
      %v700 = vmul.f32 %v696, %v696
      %v701 = vmul.f32 %v697, %v697
      %v702 = vmul.f32 %v698, %v698
      %v703 = vmul.f32 %v699, %v699
      %v704 = vsel %vm603, %v700, 0.0
      %705 = vadd.xlane.f32.xlu0 %v704
      %v706 = vpop.xlane.xlu0 %705
      %v707 = vsel %vm607, %v701, 0.0
      %708 = vadd.xlane.f32.xlu0 %v707
      %v709 = vpop.xlane.xlu0 %708
      %v710 = vsel %vm603, %v702, 0.0
      %711 = vadd.xlane.f32.xlu0 %v710
      %v712 = vpop.xlane.xlu0 %711
      %v713 = vsel %vm607, %v703, 0.0
      %714 = vadd.xlane.f32.xlu0 %v713
      %v715 = vpop.xlane.xlu0 %714
      %v716 = vmul.f32 %v706, %v617
      %v717 = vmul.f32 %v709, %v617
      %v718 = vmul.f32 %v712, %v617
      %v719 = vmul.f32 %v715, %v617
      %v720 = vadd.f32 %v716, 1e-06
      %v721 = vadd.f32 %v717, 1e-06
      %v722 = vadd.f32 %v718, 1e-06
      %v723 = vadd.f32 %v719, 1e-06
      %v724 = vrsqrt.pop %v720
      %v725 = vrsqrt.pop %v721
      %v726 = vrsqrt.pop %v722
      %v727 = vrsqrt.pop %v723
      %v728 = vmul.f32 %v696, %v724
      %v729 = vmul.f32 %v697, %v725
      %v730 = vmul.f32 %v698, %v726
      %v731 = vmul.f32 %v699, %v727
      %v733 = vlaneseq
      %v734 = vshrl.u32 %v733, 7
      %v735 = vsub.s32 0, %v734
      %v736 = vrot.slane %v678, %v735
      %v738 = vmul.f32 %v728, %v736
      %v739 = vmul.f32 %v729, %v736
      %v740 = vmul.f32 %v730, %v736
      %v741 = vmul.f32 %v731, %v736
      %v743 = vlaneseq
      %v744 = vshrl.u32 %v743, 7
      %v745 = vsub.s32 0, %v744
      %v746 = vrot.slane %v679, %v745
      %v748 = vadd.f32 %v738, %v746
      %v749 = vadd.f32 %v739, %v746
      %v750 = vadd.f32 %v740, %v746
      %v751 = vadd.f32 %v741, %v746
      %v752 = vmul.f32 %v583, 0.35355338
      %v753 = vmul.f32 %v584, 0.35355338
      %v754 = vmul.f32 %v585, 0.35355338
      %v755 = vmul.f32 %v586, 0.35355338
      %v756 = vmul.f32 %v587, 0.35355338
      %v757 = vmul.f32 %v588, 0.35355338
      %v758 = vmul.f32 %v589, 0.35355338
      %v759 = vmul.f32 %v590, 0.35355338
      %v760 = vmul.f32 %v591, 0.35355338
      %v761 = vmul.f32 %v592, 0.35355338
      %v762 = vpack.c.bf16 %v753, %v752
      %v763 = vpack.c.bf16 %v755, %v754
      %v764 = vpack.c.bf16 %v756, %v756
      %v765 = vpack.c.bf16 %v758, %v757
      %v766 = vpack.c.bf16 %v760, %v759
      %v767 = vpack.c.bf16 %v761, %v761
      %v768 = vpack.c.bf16 %v675, %v674
      %v769 = vpack.c.bf16 %v677, %v676
      %v771 = vsel %vm603, %v762, 0
      %v774 = vsel %vm603, %v763, 0
      %v777 = vsel %vm603, %v764, 0
      %v780 = vsel %vm603, %v768, 0
      %782 = vmatprep.subr.bf16.mxu0 0
      %783 = vmatpush1.bf16.xpose.msra.mxu0 0
      %784 = vmatprep.subr.bf16.mxu0 0
      %785 = vmatpush1.bf16.xpose.msra.mxu0 0
      %786 = vmatprep.subr.bf16.mxu0 0
      %787 = vmatpush1.bf16.xpose.msra.mxu0 0
      %788 = vmatprep.subr.bf16.mxu0 0
      %789 = vmatpush1.bf16.xpose.msra.mxu0 0
      %790 = vmatprep.subr.bf16.mxu0 0
      %791 = vmatpush1.bf16.xpose.msra.mxu0 0
      %792 = vmatprep.subr.bf16.mxu0 0
      %793 = vmatpush1.bf16.xpose.msra.mxu0 0
      %794 = vmatprep.subr.bf16.mxu0 0
      %795 = vmatpush1.bf16.xpose.msra.mxu0 0
      %796 = vmatprep.subr.bf16.mxu0 0
      %797 = vmatpush1.bf16.xpose.msra.mxu0 %v780
      %798 = vmatprep.subr.bf16.mxu0 0
      %799 = vmatpush2.bf16.xpose.msra.mxu0 0
      %800 = vmatprep.subr.bf16.mxu0 0
      %801 = vmatpush2.bf16.xpose.msra.mxu0 0
      %802 = vmatprep.subr.bf16.mxu0 0
      %803 = vmatpush2.bf16.xpose.msra.mxu0 0
      %804 = vmatprep.subr.bf16.mxu0 0
      %805 = vmatpush2.bf16.xpose.msra.mxu0 0
      %806 = vmatprep.subr.bf16.mxu0 0
      %807 = vmatpush2.bf16.xpose.msra.mxu0 0
      %808 = vmatprep.subr.bf16.mxu0 0
      %809 = vmatpush2.bf16.xpose.msra.mxu0 0
      %810 = vmatprep.subr.bf16.mxu0 0
      %811 = vmatpush2.bf16.xpose.msra.mxu0 0
      %812 = vmatprep.subr.bf16.mxu0 0
      %813 = vmatpush2.bf16.xpose.msra.mxu0 0
      %814 = vmatprep.mubr.bf16.mxu0 0
      %815 = vmatmul.mubr.bf16.gmra.mxu0 %v771
      %v816 = vpop.f32.mrf.mxu0
      %v817 = vadd.f32 0.0, %v816
      %v818 = vpop.f32.mrf.mxu0
      %v819 = vpop.f32.mrf.mxu0
      %v820 = vadd.f32 0.0, %v819
      %v821 = vpop.f32.mrf.mxu0
      %822 = vmatprep.mubr.bf16.mxu0 0
      %823 = vmatmul.mubr.bf16.gmra.mxu0 %v774
      %v824 = vpop.f32.mrf.mxu0
      %v825 = vadd.f32 0.0, %v824
      %v826 = vpop.f32.mrf.mxu0
      %v827 = vpop.f32.mrf.mxu0
      %v828 = vadd.f32 0.0, %v827
      %v829 = vpop.f32.mrf.mxu0
      %830 = vmatprep.mubr.bf16.mxu0 0
      %831 = vmatmul.mubr.bf16.gmra.mxu0 %v777
      %v832 = vpop.f32.mrf.mxu0
      %v833 = vadd.f32 0.0, %v832
      %v834 = vpop.f32.mrf.mxu0
      %v835 = vpop.f32.mrf.mxu0
      %v836 = vpop.f32.mrf.mxu0
      %837 = vdwg.mxu0
      %v839 = vsel %vm603, %v765, 0
      %v842 = vsel %vm603, %v766, 0
      %v845 = vsel %vm603, %v767, 0
      %v848 = vsel %vm603, %v769, 0
      %850 = vmatprep.subr.bf16.mxu0 0
      %851 = vmatpush1.bf16.xpose.msra.mxu0 0
      %852 = vmatprep.subr.bf16.mxu0 0
      %853 = vmatpush1.bf16.xpose.msra.mxu0 0
      %854 = vmatprep.subr.bf16.mxu0 0
      %855 = vmatpush1.bf16.xpose.msra.mxu0 0
      %856 = vmatprep.subr.bf16.mxu0 0
      %857 = vmatpush1.bf16.xpose.msra.mxu0 0
      %858 = vmatprep.subr.bf16.mxu0 0
      %859 = vmatpush1.bf16.xpose.msra.mxu0 0
      %860 = vmatprep.subr.bf16.mxu0 0
      %861 = vmatpush1.bf16.xpose.msra.mxu0 0
      %862 = vmatprep.subr.bf16.mxu0 0
      %863 = vmatpush1.bf16.xpose.msra.mxu0 0
      %864 = vmatprep.subr.bf16.mxu0 0
      %865 = vmatpush1.bf16.xpose.msra.mxu0 %v848
      %866 = vmatprep.subr.bf16.mxu0 0
      %867 = vmatpush2.bf16.xpose.msra.mxu0 0
      %868 = vmatprep.subr.bf16.mxu0 0
      %869 = vmatpush2.bf16.xpose.msra.mxu0 0
      %870 = vmatprep.subr.bf16.mxu0 0
      %871 = vmatpush2.bf16.xpose.msra.mxu0 0
      %872 = vmatprep.subr.bf16.mxu0 0
      %873 = vmatpush2.bf16.xpose.msra.mxu0 0
      %874 = vmatprep.subr.bf16.mxu0 0
      %875 = vmatpush2.bf16.xpose.msra.mxu0 0
      %876 = vmatprep.subr.bf16.mxu0 0
      %877 = vmatpush2.bf16.xpose.msra.mxu0 0
      %878 = vmatprep.subr.bf16.mxu0 0
      %879 = vmatpush2.bf16.xpose.msra.mxu0 0
      %880 = vmatprep.subr.bf16.mxu0 0
      %881 = vmatpush2.bf16.xpose.msra.mxu0 0
      %882 = vmatprep.mubr.bf16.mxu0 0
      %883 = vmatmul.mubr.bf16.gmra.mxu0 %v839
      %v884 = vpop.f32.mrf.mxu0
      %v885 = vadd.f32 0.0, %v884
      %v886 = vpop.f32.mrf.mxu0
      %v887 = vpop.f32.mrf.mxu0
      %v888 = vadd.f32 0.0, %v887
      %v889 = vpop.f32.mrf.mxu0
      %890 = vmatprep.mubr.bf16.mxu0 0
      %891 = vmatmul.mubr.bf16.gmra.mxu0 %v842
      %v892 = vpop.f32.mrf.mxu0
      %v893 = vadd.f32 0.0, %v892
      %v894 = vpop.f32.mrf.mxu0
      %v895 = vpop.f32.mrf.mxu0
      %v896 = vadd.f32 0.0, %v895
      %v897 = vpop.f32.mrf.mxu0
      %898 = vmatprep.mubr.bf16.mxu0 0
      %899 = vmatmul.mubr.bf16.gmra.mxu0 %v845
      %v900 = vpop.f32.mrf.mxu0
      %v901 = vadd.f32 0.0, %v900
      %v902 = vpop.f32.mrf.mxu0
      %v903 = vpop.f32.mrf.mxu0
      %v904 = vpop.f32.mrf.mxu0
      %905 = vdwg.mxu0
      %vm906 = vcmask 72704
      %v907 = vsel %vm906, %v817, -inf
      %908 = vmax.xlane.f32.xlu0 %v907
      %v909 = vpop.xlane.xlu0 %908
      %v910 = vsel %vm906, %v820, -inf
      %911 = vmax.xlane.f32.xlu0 %v910
      %v912 = vpop.xlane.xlu0 %911
      %v913 = vsel %vm906, %v825, -inf
      %914 = vmax.xlane.f32.xlu0 %v913
      %v915 = vpop.xlane.xlu0 %914
      %v916 = vsel %vm906, %v828, -inf
      %917 = vmax.xlane.f32.xlu0 %v916
      %v918 = vpop.xlane.xlu0 %917
      %vm919 = vcmask 65536
      %v920 = vsel %vm919, %v833, -inf
      %921 = vmax.xlane.f32.xlu0 %v920
      %v922 = vpop.xlane.xlu0 %921
      %v923 = vsel %vm906, %v885, -inf
      %924 = vmax.xlane.f32.xlu0 %v923
      %v925 = vpop.xlane.xlu0 %924
      %v926 = vsel %vm906, %v888, -inf
      %927 = vmax.xlane.f32.xlu0 %v926
      %v928 = vpop.xlane.xlu0 %927
      %v929 = vsel %vm906, %v893, -inf
      %930 = vmax.xlane.f32.xlu0 %v929
      %v931 = vpop.xlane.xlu0 %930
      %v932 = vsel %vm906, %v896, -inf
      %933 = vmax.xlane.f32.xlu0 %v932
      %v934 = vpop.xlane.xlu0 %933
      %v935 = vsel %vm919, %v901, -inf
      %936 = vmax.xlane.f32.xlu0 %v935
      %v937 = vpop.xlane.xlu0 %936
      %v938 = vsub.f32 %v817, %v909
      %v939 = vsub.f32 %v820, %v912
      %v940 = vsub.f32 %v825, %v915
      %v941 = vsub.f32 %v828, %v918
      %v942 = vsub.f32 %v833, %v922
      %v943 = vsub.f32 %v885, %v925
      %v944 = vsub.f32 %v888, %v928
      %v945 = vsub.f32 %v893, %v931
      %v946 = vsub.f32 %v896, %v934
      %v947 = vsub.f32 %v901, %v937
      %v948 = vmul.f32 %v938, 1.442695
      %v949 = vpow.pop %v948
      %v950 = vmul.f32 %v939, 1.442695
      %v951 = vpow.pop %v950
      %v952 = vmul.f32 %v940, 1.442695
      %v953 = vpow.pop %v952
      %v954 = vmul.f32 %v941, 1.442695
      %v955 = vpow.pop %v954
      %v956 = vmul.f32 %v942, 1.442695
      %v957 = vpow.pop %v956
      %v958 = vmul.f32 %v943, 1.442695
      %v959 = vpow.pop %v958
      %v960 = vmul.f32 %v944, 1.442695
      %v961 = vpow.pop %v960
      %v962 = vmul.f32 %v945, 1.442695
      %v963 = vpow.pop %v962
      %v964 = vmul.f32 %v946, 1.442695
      %v965 = vpow.pop %v964
      %v966 = vmul.f32 %v947, 1.442695
      %v967 = vpow.pop %v966
      %v968 = vsel %vm906, %v949, 0.0
      %969 = vadd.xlane.f32.xlu0 %v968
      %v970 = vpop.xlane.xlu0 %969
      %v971 = vsel %vm906, %v951, 0.0
      %972 = vadd.xlane.f32.xlu0 %v971
      %v973 = vpop.xlane.xlu0 %972
      %v974 = vsel %vm906, %v953, 0.0
      %975 = vadd.xlane.f32.xlu0 %v974
      %v976 = vpop.xlane.xlu0 %975
      %v977 = vsel %vm906, %v955, 0.0
      %978 = vadd.xlane.f32.xlu0 %v977
      %v979 = vpop.xlane.xlu0 %978
      %v980 = vsel %vm919, %v957, 0.0
      %981 = vadd.xlane.f32.xlu0 %v980
      %v982 = vpop.xlane.xlu0 %981
      %v983 = vsel %vm906, %v959, 0.0
      %984 = vadd.xlane.f32.xlu0 %v983
      %v985 = vpop.xlane.xlu0 %984
      %v986 = vsel %vm906, %v961, 0.0
      %987 = vadd.xlane.f32.xlu0 %v986
      %v988 = vpop.xlane.xlu0 %987
      %v989 = vsel %vm906, %v963, 0.0
      %990 = vadd.xlane.f32.xlu0 %v989
      %v991 = vpop.xlane.xlu0 %990
      %v992 = vsel %vm906, %v965, 0.0
      %993 = vadd.xlane.f32.xlu0 %v992
      %v994 = vpop.xlane.xlu0 %993
      %v995 = vsel %vm919, %v967, 0.0
      %996 = vadd.xlane.f32.xlu0 %v995
      %v997 = vpop.xlane.xlu0 %996
      %v998 = vrcp.pop %v970
      %v999 = vrcp.pop %v973
      %v1000 = vrcp.pop %v976
      %v1001 = vrcp.pop %v979
      %v1002 = vrcp.pop %v982
      %v1003 = vrcp.pop %v985
      %v1004 = vrcp.pop %v988
      %v1005 = vrcp.pop %v991
      %v1006 = vrcp.pop %v994
      %v1007 = vrcp.pop %v997
      %v1008 = vmul.f32 %v949, %v998
      %v1009 = vmul.f32 %v951, %v999
      %v1010 = vmul.f32 %v953, %v1000
      %v1011 = vmul.f32 %v955, %v1001
      %v1012 = vmul.f32 %v957, %v1002
      %v1013 = vmul.f32 %v959, %v1003
      %v1014 = vmul.f32 %v961, %v1004
      %v1015 = vmul.f32 %v963, %v1005
      %v1016 = vmul.f32 %v965, %v1006
      %v1017 = vmul.f32 %v967, %v1007
      %v1018 = vpack.c.bf16 %v1009, %v1008
      %v1019 = vpack.c.bf16 %v1011, %v1010
      %v1020 = vpack.c.bf16 %v1012, %v1012
      %v1021 = vpack.c.bf16 %v1014, %v1013
      %v1022 = vpack.c.bf16 %v1016, %v1015
      %v1023 = vpack.c.bf16 %v1017, %v1017
      %v1024 = vpack.c.bf16 %v749, %v748
      %v1025 = vpack.c.bf16 %v751, %v750
      %v1027 = vsel %vm906, %v1018, 0
      %v1030 = vsel %vm906, %v1019, 0
      %v1033 = vsel %vm906, %v1020, 0
      %vm1035 = vcmask 1043456
      %vm1036 = vcmask 1044480
      %v1037 = vsel %vm1035, 4294967295, 65535
      %v1038 = vsel %vm1036, %v1037, 0
      %v1040 = vand.u32 %v1024, %v1038
      %1042 = vmatprep.subr.bf16.mxu0 0
      %1043 = vmatpush1.bf16.msra.mxu0 0
      %1044 = vmatprep.subr.bf16.mxu0 0
      %1045 = vmatpush1.bf16.msra.mxu0 0
      %1046 = vmatprep.subr.bf16.mxu0 0
      %1047 = vmatpush1.bf16.msra.mxu0 0
      %1048 = vmatprep.subr.bf16.mxu0 0
      %1049 = vmatpush1.bf16.msra.mxu0 0
      %1050 = vmatprep.subr.bf16.mxu0 0
      %1051 = vmatpush1.bf16.msra.mxu0 0
      %1052 = vmatprep.subr.bf16.mxu0 0
      %1053 = vmatpush1.bf16.msra.mxu0 0
      %1054 = vmatprep.subr.bf16.mxu0 0
      %1055 = vmatpush1.bf16.msra.mxu0 0
      %1056 = vmatprep.subr.bf16.mxu0 0
      %1057 = vmatpush1.bf16.msra.mxu0 %v1040
      %1058 = vmatprep.subr.bf16.mxu0 0
      %1059 = vmatpush2.bf16.msra.mxu0 0
      %1060 = vmatprep.subr.bf16.mxu0 0
      %1061 = vmatpush2.bf16.msra.mxu0 0
      %1062 = vmatprep.subr.bf16.mxu0 0
      %1063 = vmatpush2.bf16.msra.mxu0 0
      %1064 = vmatprep.subr.bf16.mxu0 0
      %1065 = vmatpush2.bf16.msra.mxu0 0
      %1066 = vmatprep.subr.bf16.mxu0 0
      %1067 = vmatpush2.bf16.msra.mxu0 0
      %1068 = vmatprep.subr.bf16.mxu0 0
      %1069 = vmatpush2.bf16.msra.mxu0 0
      %1070 = vmatprep.subr.bf16.mxu0 0
      %1071 = vmatpush2.bf16.msra.mxu0 0
      %1072 = vmatprep.subr.bf16.mxu0 0
      %1073 = vmatpush2.bf16.msra.mxu0 0
      %1074 = vmatprep.mubr.bf16.mxu0 0
      %1075 = vmatmul.mubr.bf16.gmra.mxu0 %v1027
      %v1076 = vpop.f32.mrf.mxu0
      %v1077 = vadd.f32 %v583, %v1076
      %v1078 = vpop.f32.mrf.mxu0
      %v1079 = vpop.f32.mrf.mxu0
      %v1080 = vadd.f32 %v584, %v1079
      %v1081 = vpop.f32.mrf.mxu0
      %1082 = vmatprep.mubr.bf16.mxu0 0
      %1083 = vmatmul.mubr.bf16.gmra.mxu0 %v1030
      %v1084 = vpop.f32.mrf.mxu0
      %v1085 = vadd.f32 %v585, %v1084
      %v1086 = vpop.f32.mrf.mxu0
      %v1087 = vpop.f32.mrf.mxu0
      %v1088 = vadd.f32 %v586, %v1087
      %v1089 = vpop.f32.mrf.mxu0
      %1090 = vmatprep.mubr.bf16.mxu0 0
      %1091 = vmatmul.mubr.bf16.gmra.mxu0 %v1033
      %v1092 = vpop.f32.mrf.mxu0
      %v1093 = vadd.f32 %v587, %v1092
      %v1094 = vpop.f32.mrf.mxu0
      %v1095 = vpop.f32.mrf.mxu0
      %v1096 = vpop.f32.mrf.mxu0
      %1097 = vdwg.mxu0
      %v1099 = vsel %vm906, %v1021, 0
      %v1102 = vsel %vm906, %v1022, 0
      %v1105 = vsel %vm906, %v1023, 0
      %v1108 = vand.u32 %v1025, %v1038
      %1110 = vmatprep.subr.bf16.mxu0 0
      %1111 = vmatpush1.bf16.msra.mxu0 0
      %1112 = vmatprep.subr.bf16.mxu0 0
      %1113 = vmatpush1.bf16.msra.mxu0 0
      %1114 = vmatprep.subr.bf16.mxu0 0
      %1115 = vmatpush1.bf16.msra.mxu0 0
      %1116 = vmatprep.subr.bf16.mxu0 0
      %1117 = vmatpush1.bf16.msra.mxu0 0
      %1118 = vmatprep.subr.bf16.mxu0 0
      %1119 = vmatpush1.bf16.msra.mxu0 0
      %1120 = vmatprep.subr.bf16.mxu0 0
      %1121 = vmatpush1.bf16.msra.mxu0 0
      %1122 = vmatprep.subr.bf16.mxu0 0
      %1123 = vmatpush1.bf16.msra.mxu0 0
      %1124 = vmatprep.subr.bf16.mxu0 0
      %1125 = vmatpush1.bf16.msra.mxu0 %v1108
      %1126 = vmatprep.subr.bf16.mxu0 0
      %1127 = vmatpush2.bf16.msra.mxu0 0
      %1128 = vmatprep.subr.bf16.mxu0 0
      %1129 = vmatpush2.bf16.msra.mxu0 0
      %1130 = vmatprep.subr.bf16.mxu0 0
      %1131 = vmatpush2.bf16.msra.mxu0 0
      %1132 = vmatprep.subr.bf16.mxu0 0
      %1133 = vmatpush2.bf16.msra.mxu0 0
      %1134 = vmatprep.subr.bf16.mxu0 0
      %1135 = vmatpush2.bf16.msra.mxu0 0
      %1136 = vmatprep.subr.bf16.mxu0 0
      %1137 = vmatpush2.bf16.msra.mxu0 0
      %1138 = vmatprep.subr.bf16.mxu0 0
      %1139 = vmatpush2.bf16.msra.mxu0 0
      %1140 = vmatprep.subr.bf16.mxu0 0
      %1141 = vmatpush2.bf16.msra.mxu0 0
      %1142 = vmatprep.mubr.bf16.mxu0 0
      %1143 = vmatmul.mubr.bf16.gmra.mxu0 %v1099
      %v1144 = vpop.f32.mrf.mxu0
      %v1145 = vadd.f32 %v588, %v1144
      %v1146 = vpop.f32.mrf.mxu0
      %v1147 = vpop.f32.mrf.mxu0
      %v1148 = vadd.f32 %v589, %v1147
      %v1149 = vpop.f32.mrf.mxu0
      %1150 = vmatprep.mubr.bf16.mxu0 0
      %1151 = vmatmul.mubr.bf16.gmra.mxu0 %v1102
      %v1152 = vpop.f32.mrf.mxu0
      %v1153 = vadd.f32 %v590, %v1152
      %v1154 = vpop.f32.mrf.mxu0
      %v1155 = vpop.f32.mrf.mxu0
      %v1156 = vadd.f32 %v591, %v1155
      %v1157 = vpop.f32.mrf.mxu0
      %1158 = vmatprep.mubr.bf16.mxu0 0
      %1159 = vmatmul.mubr.bf16.gmra.mxu0 %v1105
      %v1160 = vpop.f32.mrf.mxu0
      %v1161 = vadd.f32 %v592, %v1160
      %v1162 = vpop.f32.mrf.mxu0
      %v1163 = vpop.f32.mrf.mxu0
      %v1164 = vpop.f32.mrf.mxu0
      %1165 = vdwg.mxu0
      %v1166 = vpack.c.bf16 %v1080, %v1077
      %v1167 = vpack.c.bf16 %v1088, %v1085
      %v1168 = vpack.c.bf16 %v1093, %v1093
      %v1169 = vld [vmem:[%s7] sm:$0xf]
      %v1170 = vpack.c.bf16 %v1148, %v1145
      %v1171 = vpack.c.bf16 %v1156, %v1153
      %v1172 = vpack.c.bf16 %v1161, %v1161
      %s1173 = scalar_lea.vmem %s7, 4
      %v1174 = vld [vmem:[%s1173] sm:$0xf]
      %v1176 = vsel %vm603, %v1170, 0
      %v1179 = vsel %vm603, %v1171, 0
      %v1182 = vsel %vm603, %v1172, 0
      %v1185 = vsel %vm1035, %v1174, 0
      %1187 = vmatprep.subr.bf16.mxu0 0
      %1188 = vmatpush1.bf16.msra.mxu0 0
      %1189 = vmatprep.subr.bf16.mxu0 0
      %1190 = vmatpush1.bf16.msra.mxu0 0
      %1191 = vmatprep.subr.bf16.mxu0 0
      %1192 = vmatpush1.bf16.msra.mxu0 0
      %1193 = vmatprep.subr.bf16.mxu0 0
      %1194 = vmatpush1.bf16.msra.mxu0 0
      %1195 = vmatprep.subr.bf16.mxu0 0
      %1196 = vmatpush1.bf16.msra.mxu0 0
      %1197 = vmatprep.subr.bf16.mxu0 0
      %1198 = vmatpush1.bf16.msra.mxu0 0
      %1199 = vmatprep.subr.bf16.mxu0 0
      %1200 = vmatpush1.bf16.msra.mxu0 0
      %1201 = vmatprep.subr.bf16.mxu0 0
      %1202 = vmatpush1.bf16.msra.mxu0 %v1185
      %1203 = vmatprep.subr.bf16.mxu0 0
      %1204 = vmatpush2.bf16.msra.mxu0 0
      %1205 = vmatprep.subr.bf16.mxu0 0
      %1206 = vmatpush2.bf16.msra.mxu0 0
      %1207 = vmatprep.subr.bf16.mxu0 0
      %1208 = vmatpush2.bf16.msra.mxu0 0
      %1209 = vmatprep.subr.bf16.mxu0 0
      %1210 = vmatpush2.bf16.msra.mxu0 0
      %1211 = vmatprep.subr.bf16.mxu0 0
      %1212 = vmatpush2.bf16.msra.mxu0 0
      %1213 = vmatprep.subr.bf16.mxu0 0
      %1214 = vmatpush2.bf16.msra.mxu0 0
      %1215 = vmatprep.subr.bf16.mxu0 0
      %1216 = vmatpush2.bf16.msra.mxu0 0
      %1217 = vmatprep.subr.bf16.mxu0 0
      %1218 = vmatpush2.bf16.msra.mxu0 0
      %1219 = vmatprep.mubr.bf16.mxu0 0
      %1220 = vmatmul.mubr.bf16.gmra.mxu0 %v1176
      %v1221 = vpop.f32.mrf.mxu0
      %v1222 = vadd.f32 0.0, %v1221
      %v1223 = vpop.f32.mrf.mxu0
      %v1224 = vpop.f32.mrf.mxu0
      %v1225 = vadd.f32 0.0, %v1224
      %v1226 = vpop.f32.mrf.mxu0
      %1227 = vmatprep.mubr.bf16.mxu0 0
      %1228 = vmatmul.mubr.bf16.gmra.mxu0 %v1179
      %v1229 = vpop.f32.mrf.mxu0
      %v1230 = vadd.f32 0.0, %v1229
      %v1231 = vpop.f32.mrf.mxu0
      %v1232 = vpop.f32.mrf.mxu0
      %v1233 = vadd.f32 0.0, %v1232
      %v1234 = vpop.f32.mrf.mxu0
      %1235 = vmatprep.mubr.bf16.mxu0 0
      %1236 = vmatmul.mubr.bf16.gmra.mxu0 %v1182
      %v1237 = vpop.f32.mrf.mxu0
      %v1238 = vadd.f32 0.0, %v1237
      %v1239 = vpop.f32.mrf.mxu0
      %v1240 = vpop.f32.mrf.mxu0
      %v1241 = vpop.f32.mrf.mxu0
      %1242 = vdwg.mxu0
      %v1244 = vsel %vm603, %v1166, 0
      %v1247 = vsel %vm603, %v1167, 0
      %v1250 = vsel %vm603, %v1168, 0
      %v1253 = vsel %vm1035, %v1169, 0
      %1255 = vmatprep.subr.bf16.mxu0 0
      %1256 = vmatpush1.bf16.msra.mxu0 0
      %1257 = vmatprep.subr.bf16.mxu0 0
      %1258 = vmatpush1.bf16.msra.mxu0 0
      %1259 = vmatprep.subr.bf16.mxu0 0
      %1260 = vmatpush1.bf16.msra.mxu0 0
      %1261 = vmatprep.subr.bf16.mxu0 0
      %1262 = vmatpush1.bf16.msra.mxu0 0
      %1263 = vmatprep.subr.bf16.mxu0 0
      %1264 = vmatpush1.bf16.msra.mxu0 0
      %1265 = vmatprep.subr.bf16.mxu0 0
      %1266 = vmatpush1.bf16.msra.mxu0 0
      %1267 = vmatprep.subr.bf16.mxu0 0
      %1268 = vmatpush1.bf16.msra.mxu0 0
      %1269 = vmatprep.subr.bf16.mxu0 0
      %1270 = vmatpush1.bf16.msra.mxu0 %v1253
      %1271 = vmatprep.subr.bf16.mxu0 0
      %1272 = vmatpush2.bf16.msra.mxu0 0
      %1273 = vmatprep.subr.bf16.mxu0 0
      %1274 = vmatpush2.bf16.msra.mxu0 0
      %1275 = vmatprep.subr.bf16.mxu0 0
      %1276 = vmatpush2.bf16.msra.mxu0 0
      %1277 = vmatprep.subr.bf16.mxu0 0
      %1278 = vmatpush2.bf16.msra.mxu0 0
      %1279 = vmatprep.subr.bf16.mxu0 0
      %1280 = vmatpush2.bf16.msra.mxu0 0
      %1281 = vmatprep.subr.bf16.mxu0 0
      %1282 = vmatpush2.bf16.msra.mxu0 0
      %1283 = vmatprep.subr.bf16.mxu0 0
      %1284 = vmatpush2.bf16.msra.mxu0 0
      %1285 = vmatprep.subr.bf16.mxu0 0
      %1286 = vmatpush2.bf16.msra.mxu0 0
      %1287 = vmatprep.mubr.bf16.mxu0 0
      %1288 = vmatmul.mubr.bf16.gmra.mxu0 %v1244
      %v1289 = vpop.f32.mrf.mxu0
      %v1290 = vadd.f32 %v1222, %v1289
      %v1291 = vpop.f32.mrf.mxu0
      %v1292 = vpop.f32.mrf.mxu0
      %v1293 = vadd.f32 %v1225, %v1292
      %v1294 = vpop.f32.mrf.mxu0
      %1295 = vmatprep.mubr.bf16.mxu0 0
      %1296 = vmatmul.mubr.bf16.gmra.mxu0 %v1247
      %v1297 = vpop.f32.mrf.mxu0
      %v1298 = vadd.f32 %v1230, %v1297
      %v1299 = vpop.f32.mrf.mxu0
      %v1300 = vpop.f32.mrf.mxu0
      %v1301 = vadd.f32 %v1233, %v1300
      %v1302 = vpop.f32.mrf.mxu0
      %1303 = vmatprep.mubr.bf16.mxu0 0
      %1304 = vmatmul.mubr.bf16.gmra.mxu0 %v1250
      %v1305 = vpop.f32.mrf.mxu0
      %v1306 = vadd.f32 %v1238, %v1305
      %v1307 = vpop.f32.mrf.mxu0
      %v1308 = vpop.f32.mrf.mxu0
      %v1309 = vpop.f32.mrf.mxu0
      %1310 = vdwg.mxu0
      %v1311 = vld [vmem:[%s8] sm:$0x1]
      %v1313 = vlaneseq
      %v1314 = vshrl.u32 %v1313, 7
      %v1315 = vsub.s32 0, %v1314
      %v1316 = vrot.slane %v1311, %v1315
      %v1318 = vadd.f32 %v1290, %v1316
      %v1319 = vadd.f32 %v1293, %v1316
      %v1320 = vadd.f32 %v1298, %v1316
      %v1321 = vadd.f32 %v1301, %v1316
      %v1322 = vadd.f32 %v1306, %v1316
      %v1323 = vld [vmem:[%s576] sm:$0xff]
      %v1324 = vld [vmem:[%s576 + $0x8] sm:$0xff]
      %v1325 = vld [vmem:[%s576 + $0x10] sm:$0xff]
      %v1326 = vld [vmem:[%s576 + $0x18] sm:$0xff]
      %v1327 = vld [vmem:[%s576 + $0x20] sm:$0x1]
      %v1328 = vadd.f32 %v1318, %v1323
      %v1329 = vadd.f32 %v1319, %v1324
      %v1330 = vadd.f32 %v1320, %v1325
      %v1331 = vadd.f32 %v1321, %v1326
      %v1332 = vadd.f32 %v1322, %v1327
      %v1333 = vld [vmem:[%s10] sm:$0x1]
      %v1334 = vld [vmem:[%s11] sm:$0x1]
      %vm1335 = vcmask 130048
      %v1336 = vsel %vm1335, %v1328, 0.0
      %1337 = vadd.xlane.f32.xlu0 %v1336
      %v1338 = vpop.xlane.xlu0 %1337
      %v1339 = vsel %vm1335, %v1329, 0.0
      %1340 = vadd.xlane.f32.xlu0 %v1339
      %v1341 = vpop.xlane.xlu0 %1340
      %v1342 = vsel %vm1335, %v1330, 0.0
      %1343 = vadd.xlane.f32.xlu0 %v1342
      %v1344 = vpop.xlane.xlu0 %1343
      %v1345 = vsel %vm1335, %v1331, 0.0
      %1346 = vadd.xlane.f32.xlu0 %v1345
      %v1347 = vpop.xlane.xlu0 %1346
      %vm1348 = vcmask 122880
      %v1349 = vsel %vm1348, %v1332, 0.0
      %1350 = vadd.xlane.f32.xlu0 %v1349
      %v1351 = vpop.xlane.xlu0 %1350
      %v1352 = vrcp.pop 16.0
      %v1353 = vmul.f32 %v1338, %v1352
      %v1354 = vmul.f32 %v1341, %v1352
      %v1355 = vmul.f32 %v1344, %v1352
      %v1356 = vmul.f32 %v1347, %v1352
      %v1357 = vmul.f32 %v1351, %v1352
      %v1358 = vsub.f32 %v1328, %v1353
      %v1359 = vsub.f32 %v1329, %v1354
      %v1360 = vsub.f32 %v1330, %v1355
      %v1361 = vsub.f32 %v1331, %v1356
      %v1362 = vsub.f32 %v1332, %v1357
      %v1363 = vmul.f32 %v1358, %v1358
      %v1364 = vmul.f32 %v1359, %v1359
      %v1365 = vmul.f32 %v1360, %v1360
      %v1366 = vmul.f32 %v1361, %v1361
      %v1367 = vmul.f32 %v1362, %v1362
      %v1368 = vsel %vm1335, %v1363, 0.0
      %1369 = vadd.xlane.f32.xlu0 %v1368
      %v1370 = vpop.xlane.xlu0 %1369
      %v1371 = vsel %vm1335, %v1364, 0.0
      %1372 = vadd.xlane.f32.xlu0 %v1371
      %v1373 = vpop.xlane.xlu0 %1372
      %v1374 = vsel %vm1335, %v1365, 0.0
      %1375 = vadd.xlane.f32.xlu0 %v1374
      %v1376 = vpop.xlane.xlu0 %1375
      %v1377 = vsel %vm1335, %v1366, 0.0
      %1378 = vadd.xlane.f32.xlu0 %v1377
      %v1379 = vpop.xlane.xlu0 %1378
      %v1380 = vsel %vm1348, %v1367, 0.0
      %1381 = vadd.xlane.f32.xlu0 %v1380
      %v1382 = vpop.xlane.xlu0 %1381
      %v1383 = vmul.f32 %v1370, %v1352
      %v1384 = vmul.f32 %v1373, %v1352
      %v1385 = vmul.f32 %v1376, %v1352
      %v1386 = vmul.f32 %v1379, %v1352
      %v1387 = vmul.f32 %v1382, %v1352
      %v1388 = vadd.f32 %v1383, 1e-06
      %v1389 = vadd.f32 %v1384, 1e-06
      %v1390 = vadd.f32 %v1385, 1e-06
      %v1391 = vadd.f32 %v1386, 1e-06
      %v1392 = vadd.f32 %v1387, 1e-06
      %v1393 = vrsqrt.pop %v1388
      %v1394 = vrsqrt.pop %v1389
      %v1395 = vrsqrt.pop %v1390
      %v1396 = vrsqrt.pop %v1391
      %v1397 = vrsqrt.pop %v1392
      %v1398 = vmul.f32 %v1358, %v1393
      %v1399 = vmul.f32 %v1359, %v1394
      %v1400 = vmul.f32 %v1360, %v1395
      %v1401 = vmul.f32 %v1361, %v1396
      %v1402 = vmul.f32 %v1362, %v1397
      %v1404 = vlaneseq
      %v1405 = vshrl.u32 %v1404, 7
      %v1406 = vsub.s32 0, %v1405
      %v1407 = vrot.slane %v1333, %v1406
      %v1409 = vmul.f32 %v1398, %v1407
      %v1410 = vmul.f32 %v1399, %v1407
      %v1411 = vmul.f32 %v1400, %v1407
      %v1412 = vmul.f32 %v1401, %v1407
      %v1413 = vmul.f32 %v1402, %v1407
      %v1415 = vlaneseq
      %v1416 = vshrl.u32 %v1415, 7
      %v1417 = vsub.s32 0, %v1416
      %v1418 = vrot.slane %v1334, %v1417
      %v1420 = vadd.f32 %v1409, %v1418
      %v1421 = vadd.f32 %v1410, %v1418
      %v1422 = vadd.f32 %v1411, %v1418
      %v1423 = vadd.f32 %v1412, %v1418
      %v1424 = vadd.f32 %v1413, %v1418
      %v1425 = vpack.c.bf16 %v1421, %v1420
      %v1426 = vpack.c.bf16 %v1423, %v1422
      %v1427 = vpack.c.bf16 %v1424, %v1424
      %v1428 = vld [vmem:[%s12] sm:$0xf]
      %v1429 = vld [vmem:[%s12 + $0x4] sm:$0xf]
      %v1430 = vld [vmem:[%s13] sm:$0x1]
      %v1432 = vlaneseq
      %v1433 = vshrl.u32 %v1432, 7
      %v1434 = vsub.s32 0, %v1433
      %v1435 = vrot.slane %v1430, %v1434
      %v1439 = vunpack.c.l.b16 %v1428
      %v1440 = vunpack.c.l.b16 %v1429
      %v1441 = vpack.c.b16 %v1440, %v1439
      %v1444 = vsel %vm1335, %v1425, 0
      %v1447 = vsel %vm1335, %v1426, 0
      %v1450 = vsel %vm1335, %v1427, 0
      %1452 = vmatprep.subr.bf16.mxu0 0
      %1453 = vmatpush1.bf16.msra.mxu0 0
      %1454 = vmatprep.subr.bf16.mxu0 0
      %1455 = vmatpush1.bf16.msra.mxu0 0
      %1456 = vmatprep.subr.bf16.mxu0 0
      %1457 = vmatpush1.bf16.msra.mxu0 0
      %1458 = vmatprep.subr.bf16.mxu0 0
      %1459 = vmatpush1.bf16.msra.mxu0 0
      %1460 = vmatprep.subr.bf16.mxu0 0
      %1461 = vmatpush1.bf16.msra.mxu0 0
      %1462 = vmatprep.subr.bf16.mxu0 0
      %1463 = vmatpush1.bf16.msra.mxu0 0
      %1464 = vmatprep.subr.bf16.mxu0 0
      %1465 = vmatpush1.bf16.msra.mxu0 0
      %1466 = vmatprep.subr.bf16.mxu0 0
      %1467 = vmatpush1.bf16.msra.mxu0 %v1441
      %1468 = vmatprep.subr.bf16.mxu0 0
      %1469 = vmatpush2.bf16.msra.mxu0 0
      %1470 = vmatprep.subr.bf16.mxu0 0
      %1471 = vmatpush2.bf16.msra.mxu0 0
      %1472 = vmatprep.subr.bf16.mxu0 0
      %1473 = vmatpush2.bf16.msra.mxu0 0
      %1474 = vmatprep.subr.bf16.mxu0 0
      %1475 = vmatpush2.bf16.msra.mxu0 0
      %1476 = vmatprep.subr.bf16.mxu0 0
      %1477 = vmatpush2.bf16.msra.mxu0 0
      %1478 = vmatprep.subr.bf16.mxu0 0
      %1479 = vmatpush2.bf16.msra.mxu0 0
      %1480 = vmatprep.subr.bf16.mxu0 0
      %1481 = vmatpush2.bf16.msra.mxu0 0
      %1482 = vmatprep.subr.bf16.mxu0 0
      %1483 = vmatpush2.bf16.msra.mxu0 0
      %1484 = vmatprep.mubr.bf16.mxu0 0
      %1485 = vmatmul.mubr.bf16.gmra.mxu0 %v1444
      %v1486 = vpop.f32.mrf.mxu0
      %v1487 = vadd.f32 %v1435, %v1486
      %v1488 = vpop.f32.mrf.mxu0
      %v1489 = vpop.f32.mrf.mxu0
      %v1490 = vadd.f32 %v1435, %v1489
      %v1491 = vpop.f32.mrf.mxu0
      %1492 = vmatprep.mubr.bf16.mxu0 0
      %1493 = vmatmul.mubr.bf16.gmra.mxu0 %v1447
      %v1494 = vpop.f32.mrf.mxu0
      %v1495 = vadd.f32 %v1435, %v1494
      %v1496 = vpop.f32.mrf.mxu0
      %v1497 = vpop.f32.mrf.mxu0
      %v1498 = vadd.f32 %v1435, %v1497
      %v1499 = vpop.f32.mrf.mxu0
      %1500 = vmatprep.mubr.bf16.mxu0 0
      %1501 = vmatmul.mubr.bf16.gmra.mxu0 %v1450
      %v1502 = vpop.f32.mrf.mxu0
      %v1503 = vadd.f32 %v1435, %v1502
      %v1504 = vpop.f32.mrf.mxu0
      %v1505 = vpop.f32.mrf.mxu0
      %v1506 = vpop.f32.mrf.mxu0
      %1507 = vdwg.mxu0
      %v1508 = vmul.f32 %v1487, 0.5
      %v1509 = vmul.f32 %v1490, 0.5
      %v1510 = vmul.f32 %v1495, 0.5
      %v1511 = vmul.f32 %v1498, 0.5
      %v1512 = vmul.f32 %v1503, 0.5
      %v1513 = vmul.f32 %v1487, 0.70710677
      %v1514 = vmul.f32 %v1490, 0.70710677
      %v1515 = vmul.f32 %v1495, 0.70710677
      %v1516 = vmul.f32 %v1498, 0.70710677
      %v1517 = vmul.f32 %v1503, 0.70710677
      %v1518 = vand.u32 2147483647, %v1513
      %v1519 = vand.u32 2147483647, %v1514
      %v1520 = vand.u32 2147483647, %v1515
      %v1521 = vand.u32 2147483647, %v1516
      %v1522 = vand.u32 2147483647, %v1517
      %v1523 = vmul.f32 %v1518, 0.3275911
      %v1524 = vmul.f32 %v1519, 0.3275911
      %v1525 = vmul.f32 %v1520, 0.3275911
      %v1526 = vmul.f32 %v1521, 0.3275911
      %v1527 = vmul.f32 %v1522, 0.3275911
      %v1528 = vadd.f32 %v1523, 1.0
      %v1529 = vadd.f32 %v1524, 1.0
      %v1530 = vadd.f32 %v1525, 1.0
      %v1531 = vadd.f32 %v1526, 1.0
      %v1532 = vadd.f32 %v1527, 1.0
      %v1533 = vrcp.pop %v1528
      %v1534 = vrcp.pop %v1529
      %v1535 = vrcp.pop %v1530
      %v1536 = vrcp.pop %v1531
      %v1537 = vrcp.pop %v1532
      %v1538 = vmul.f32 %v1533, 1.0614054
      %v1539 = vmul.f32 %v1534, 1.0614054
      %v1540 = vmul.f32 %v1535, 1.0614054
      %v1541 = vmul.f32 %v1536, 1.0614054
      %v1542 = vmul.f32 %v1537, 1.0614054
      %v1543 = vadd.f32 %v1538, -1.4531521
      %v1544 = vadd.f32 %v1539, -1.4531521
      %v1545 = vadd.f32 %v1540, -1.4531521
      %v1546 = vadd.f32 %v1541, -1.4531521
      %v1547 = vadd.f32 %v1542, -1.4531521
      %v1548 = vmul.f32 %v1543, %v1533
      %v1549 = vmul.f32 %v1544, %v1534
      %v1550 = vmul.f32 %v1545, %v1535
      %v1551 = vmul.f32 %v1546, %v1536
      %v1552 = vmul.f32 %v1547, %v1537
      %v1553 = vadd.f32 %v1548, 1.4214138
      %v1554 = vadd.f32 %v1549, 1.4214138
      %v1555 = vadd.f32 %v1550, 1.4214138
      %v1556 = vadd.f32 %v1551, 1.4214138
      %v1557 = vadd.f32 %v1552, 1.4214138
      %v1558 = vmul.f32 %v1553, %v1533
      %v1559 = vmul.f32 %v1554, %v1534
      %v1560 = vmul.f32 %v1555, %v1535
      %v1561 = vmul.f32 %v1556, %v1536
      %v1562 = vmul.f32 %v1557, %v1537
      %v1563 = vadd.f32 %v1558, -0.28449672
      %v1564 = vadd.f32 %v1559, -0.28449672
      %v1565 = vadd.f32 %v1560, -0.28449672
      %v1566 = vadd.f32 %v1561, -0.28449672
      %v1567 = vadd.f32 %v1562, -0.28449672
      %v1568 = vmul.f32 %v1563, %v1533
      %v1569 = vmul.f32 %v1564, %v1534
      %v1570 = vmul.f32 %v1565, %v1535
      %v1571 = vmul.f32 %v1566, %v1536
      %v1572 = vmul.f32 %v1567, %v1537
      %v1573 = vadd.f32 %v1568, 0.2548296
      %v1574 = vadd.f32 %v1569, 0.2548296
      %v1575 = vadd.f32 %v1570, 0.2548296
      %v1576 = vadd.f32 %v1571, 0.2548296
      %v1577 = vadd.f32 %v1572, 0.2548296
      %v1578 = vmul.f32 %v1573, %v1533
      %v1579 = vmul.f32 %v1574, %v1534
      %v1580 = vmul.f32 %v1575, %v1535
      %v1581 = vmul.f32 %v1576, %v1536
      %v1582 = vmul.f32 %v1577, %v1537
      %v1583 = vsub.f32 0.0, %v1518
      %v1584 = vsub.f32 0.0, %v1519
      %v1585 = vsub.f32 0.0, %v1520
      %v1586 = vsub.f32 0.0, %v1521
      %v1587 = vsub.f32 0.0, %v1522
      %v1588 = vmul.f32 %v1583, %v1518
      %v1589 = vmul.f32 %v1584, %v1519
      %v1590 = vmul.f32 %v1585, %v1520
      %v1591 = vmul.f32 %v1586, %v1521
      %v1592 = vmul.f32 %v1587, %v1522
      %v1593 = vmul.f32 %v1588, 1.442695
      %v1594 = vpow.pop %v1593
      %v1595 = vmul.f32 %v1589, 1.442695
      %v1596 = vpow.pop %v1595
      %v1597 = vmul.f32 %v1590, 1.442695
      %v1598 = vpow.pop %v1597
      %v1599 = vmul.f32 %v1591, 1.442695
      %v1600 = vpow.pop %v1599
      %v1601 = vmul.f32 %v1592, 1.442695
      %v1602 = vpow.pop %v1601
      %v1603 = vmul.f32 %v1578, %v1594
      %v1604 = vmul.f32 %v1579, %v1596
      %v1605 = vmul.f32 %v1580, %v1598
      %v1606 = vmul.f32 %v1581, %v1600
      %v1607 = vmul.f32 %v1582, %v1602
      %v1608 = vsub.f32 1.0, %v1603
      %v1609 = vsub.f32 1.0, %v1604
      %v1610 = vsub.f32 1.0, %v1605
      %v1611 = vsub.f32 1.0, %v1606
      %v1612 = vsub.f32 1.0, %v1607
      %vm1613 = vcmp.lt.f32.partialorder %v1513, 0.0
      %vm1614 = vcmp.lt.f32.partialorder %v1514, 0.0
      %vm1615 = vcmp.lt.f32.partialorder %v1515, 0.0
      %vm1616 = vcmp.lt.f32.partialorder %v1516, 0.0
      %vm1617 = vcmp.lt.f32.partialorder %v1517, 0.0
      %v1618 = vsub.f32 0.0, %v1608
      %v1619 = vsub.f32 0.0, %v1609
      %v1620 = vsub.f32 0.0, %v1610
      %v1621 = vsub.f32 0.0, %v1611
      %v1622 = vsub.f32 0.0, %v1612
      %v1623 = vsel %vm1613, %v1618, %v1608
      %v1624 = vsel %vm1614, %v1619, %v1609
      %v1625 = vsel %vm1615, %v1620, %v1610
      %v1626 = vsel %vm1616, %v1621, %v1611
      %v1627 = vsel %vm1617, %v1622, %v1612
      %v1628 = vadd.f32 %v1623, 1.0
      %v1629 = vadd.f32 %v1624, 1.0
      %v1630 = vadd.f32 %v1625, 1.0
      %v1631 = vadd.f32 %v1626, 1.0
      %v1632 = vadd.f32 %v1627, 1.0
      %v1633 = vmul.f32 %v1508, %v1628
      %v1634 = vmul.f32 %v1509, %v1629
      %v1635 = vmul.f32 %v1510, %v1630
      %v1636 = vmul.f32 %v1511, %v1631
      %v1637 = vmul.f32 %v1512, %v1632
      %v1638 = vpack.c.bf16 %v1634, %v1633
      %v1639 = vpack.c.bf16 %v1636, %v1635
      %v1640 = vpack.c.bf16 %v1637, %v1637
      %v1641 = vld [vmem:[%s14] sm:$0xf]
      %v1642 = vld [vmem:[%s14 + $0x4] sm:$0xf]
      %v1643 = vld [vmem:[%s14 + $0x8] sm:$0xf]
      %v1644 = vld [vmem:[%s14 + $0xc] sm:$0xf]
      %v1645 = vld [vmem:[%s14 + $0x10] sm:$0xf]
      %v1646 = vld [vmem:[%s14 + $0x14] sm:$0xf]
      %v1647 = vld [vmem:[%s14 + $0x18] sm:$0xf]
      %v1648 = vld [vmem:[%s14 + $0x1c] sm:$0xf]
      %v1649 = vld [vmem:[%s15] sm:$0x1]
      %v1651 = vlaneseq
      %v1652 = vshrl.u32 %v1651, 7
      %v1653 = vsub.s32 0, %v1652
      %v1654 = vrot.slane %v1649, %v1653
      %v1664 = vunpack.c.l.b16 %v1641
      %v1665 = vunpack.c.l.b16 %v1642
      %v1666 = vunpack.c.l.b16 %v1643
      %v1667 = vunpack.c.l.b16 %v1644
      %v1668 = vunpack.c.l.b16 %v1645
      %v1669 = vunpack.c.l.b16 %v1646
      %v1670 = vunpack.c.l.b16 %v1647
      %v1671 = vunpack.c.l.b16 %v1648
      %v1672 = vpack.c.b16 %v1665, %v1664
      %v1673 = vpack.c.b16 %v1667, %v1666
      %v1674 = vpack.c.b16 %v1669, %v1668
      %v1675 = vpack.c.b16 %v1671, %v1670
      %vm1680 = vcmask 523264
      %v1682 = vsel %vm1680, %v1638, 0
      %v1685 = vsel %vm1680, %v1639, 0
      %v1688 = vsel %vm1680, %v1640, 0
      %1690 = vmatprep.subr.bf16.mxu0 0
      %1691 = vmatpush1.bf16.msra.mxu0 0
      %1692 = vmatprep.subr.bf16.mxu0 0
      %1693 = vmatpush1.bf16.msra.mxu0 0
      %1694 = vmatprep.subr.bf16.mxu0 0
      %1695 = vmatpush1.bf16.msra.mxu0 0
      %1696 = vmatprep.subr.bf16.mxu0 0
      %1697 = vmatpush1.bf16.msra.mxu0 0
      %1698 = vmatprep.subr.bf16.mxu0 0
      %1699 = vmatpush1.bf16.msra.mxu0 %v1675
      %1700 = vmatprep.subr.bf16.mxu0 0
      %1701 = vmatpush1.bf16.msra.mxu0 %v1674
      %1702 = vmatprep.subr.bf16.mxu0 0
      %1703 = vmatpush1.bf16.msra.mxu0 %v1673
      %1704 = vmatprep.subr.bf16.mxu0 0
      %1705 = vmatpush1.bf16.msra.mxu0 %v1672
      %1706 = vmatprep.subr.bf16.mxu0 0
      %1707 = vmatpush2.bf16.msra.mxu0 0
      %1708 = vmatprep.subr.bf16.mxu0 0
      %1709 = vmatpush2.bf16.msra.mxu0 0
      %1710 = vmatprep.subr.bf16.mxu0 0
      %1711 = vmatpush2.bf16.msra.mxu0 0
      %1712 = vmatprep.subr.bf16.mxu0 0
      %1713 = vmatpush2.bf16.msra.mxu0 0
      %1714 = vmatprep.subr.bf16.mxu0 0
      %1715 = vmatpush2.bf16.msra.mxu0 0
      %1716 = vmatprep.subr.bf16.mxu0 0
      %1717 = vmatpush2.bf16.msra.mxu0 0
      %1718 = vmatprep.subr.bf16.mxu0 0
      %1719 = vmatpush2.bf16.msra.mxu0 0
      %1720 = vmatprep.subr.bf16.mxu0 0
      %1721 = vmatpush2.bf16.msra.mxu0 0
      %1722 = vmatprep.mubr.bf16.mxu0 0
      %1723 = vmatmul.mubr.bf16.gmra.mxu0 %v1682
      %v1724 = vpop.f32.mrf.mxu0
      %v1725 = vadd.f32 %v1654, %v1724
      %v1726 = vpop.f32.mrf.mxu0
      %v1727 = vpop.f32.mrf.mxu0
      %v1728 = vadd.f32 %v1654, %v1727
      %v1729 = vpop.f32.mrf.mxu0
      %1730 = vmatprep.mubr.bf16.mxu0 0
      %1731 = vmatmul.mubr.bf16.gmra.mxu0 %v1685
      %v1732 = vpop.f32.mrf.mxu0
      %v1733 = vadd.f32 %v1654, %v1732
      %v1734 = vpop.f32.mrf.mxu0
      %v1735 = vpop.f32.mrf.mxu0
      %v1736 = vadd.f32 %v1654, %v1735
      %v1737 = vpop.f32.mrf.mxu0
      %1738 = vmatprep.mubr.bf16.mxu0 0
      %1739 = vmatmul.mubr.bf16.gmra.mxu0 %v1688
      %v1740 = vpop.f32.mrf.mxu0
      %v1741 = vadd.f32 %v1654, %v1740
      %v1742 = vpop.f32.mrf.mxu0
      %v1743 = vpop.f32.mrf.mxu0
      %v1744 = vpop.f32.mrf.mxu0
      %1745 = vdwg.mxu0
      %v1746 = vadd.f32 %v1725, %v1328
      %v1747 = vadd.f32 %v1728, %v1329
      %v1748 = vadd.f32 %v1733, %v1330
      %v1749 = vadd.f32 %v1736, %v1331
      %v1750 = vadd.f32 %v1741, %v1332
      %1751 = vst.msk [vmem:[%s581] sm:$0xff] %vm1335, %v1746
      %1752 = vst.msk [vmem:[%s581 + $0x8] sm:$0xff] %vm1335, %v1747
      %1753 = vst.msk [vmem:[%s581 + $0x10] sm:$0xff] %vm1335, %v1748
      %1754 = vst.msk [vmem:[%s581 + $0x18] sm:$0xff] %vm1335, %v1749
      %1755 = vst.msk [vmem:[%s581 + $0x20] sm:$0x1] %vm1348, %v1750
      %p1756 = scmp.lt.s32.totalorder %s27, 1
      %s1757 = scalar_select %p1756, %s27, 1
      %s1758 = smul.addr %s1757, 5
      %s1759 = smul.addr %s1758, 8
      %s1760 = scalar_lea.vmem %s16, %s1759
      // Predicated region
      $region85: #{mvit_forward.5} parent=83 // pred_check
        %p1761 = pneg %p401
      $region86: #{mvit_forward.5} parent=83 // pred_check_branch
        %1763 = sbr.rel (%p1761) target = $region88
      $region87: #{mvit_forward.5} parent=83 // pred_region
        _
      $region88: #{mvit_forward.5} parent=83 // pred_fallthru
        _
    $region84: #{mvit_forward.5} parent=5 // pred_fallthru
      _
    %p1764 = scmp.le.s32.totalorder 2, %s22
    // Predicated region
    $region89: #{mvit_forward.5} parent=5 // pred_check
      %p1765 = pneg %p1764
    $region90: #{mvit_forward.5} parent=5 // pred_check_branch
      %1767 = sbr.rel (%p1765) target = $region92
    $region91: #{mvit_forward.5} parent=5 // pred_region
      %s1768 = ssub.s32 %s22, 2
      // Predicated region
      $region93: #{mvit_forward.5} parent=91 // pred_check
        %p1769 = pneg %p407
      $region94: #{mvit_forward.5} parent=91 // pred_check_branch
        %1771 = sbr.rel (%p1769) target = $region96
      $region95: #{mvit_forward.5} parent=91 // pred_region
        %p1772 = scmp.lt.s32.totalorder %s28, 1
        %s1773 = scalar_select %p1772, %s28, 1
        %s1774 = smul.addr %s1773, 5
        %s1775 = smul.addr %s1774, 8
        %s1776 = scalar_lea.vmem %s16, %s1775
      $region96: #{mvit_forward.5} parent=91 // pred_fallthru
        _
    $region92: #{mvit_forward.5} parent=5 // pred_fallthru
      _
  $region6: #{mvit_forward.5} parent=0 // loop_footer
    %s26 = sadd.s32 1, %s22
  $region7: #{mvit_forward.5} parent=0 // loop_footer_branch
    %21 = sbr.rel target = $region3
  $region8: #{mvit_forward.5} parent=0 // loop_exit
    _

// kernel: mvit_forward.7
$region0: #{mvit_forward.7}
  #allocation0 [shape = 'u32[]', space=smem, size = 0x4, offset = 0x4, fixed_abs, tag = 'smem constant byte address 0x4 - core index']
  #allocation1 [shape = 'u32[144,128]{1,0:T(1,128)}', space=vmem, size = 0x12000, scoped, tag = 'internal scratch']
  %s0 = inlined_call_operand.vmem [shape: f32[2,2,9,8], index: 0, kind: input, shape index: {}]
  %s1 = inlined_call_operand.vmem [shape: f32[2,2,33,8], index: 1, kind: input, shape index: {}]
  %s2 = inlined_call_operand.vmem [shape: f32[2,2,33,8], index: 2, kind: input, shape index: {}]
  %s3 = inlined_call_operand.vmem [shape: f32[1,8], index: 3, kind: input, shape index: {}]
  %s4 = inlined_call_operand.vmem [shape: f32[1,8], index: 4, kind: input, shape index: {}]
  %s5 = inlined_call_operand.vmem [shape: f32[1,8], index: 5, kind: input, shape index: {}]
  %s6 = inlined_call_operand.vmem [shape: f32[1,8], index: 6, kind: input, shape index: {}]
  %s7 = inlined_call_operand.vmem [shape: f32[1,8], index: 7, kind: input, shape index: {}]
  %s8 = inlined_call_operand.vmem [shape: f32[1,8], index: 8, kind: input, shape index: {}]
  %s9 = inlined_call_operand.vmem [shape: bf16[2,8,16], index: 9, kind: input, shape index: {}]
  %s10 = inlined_call_operand.vmem [shape: f32[1,16], index: 10, kind: input, shape index: {}]
  %s11 = inlined_call_operand.vmem [shape: f32[2,9,16], index: 11, kind: input, shape index: {}]
  %s12 = inlined_call_operand.vmem [shape: f32[1,16], index: 12, kind: input, shape index: {}]
  %s13 = inlined_call_operand.vmem [shape: f32[1,16], index: 13, kind: input, shape index: {}]
  %s14 = inlined_call_operand.vmem [shape: bf16[16,64], index: 14, kind: input, shape index: {}]
  %s15 = inlined_call_operand.vmem [shape: f32[1,64], index: 15, kind: input, shape index: {}]
  %s16 = inlined_call_operand.vmem [shape: bf16[64,32], index: 16, kind: input, shape index: {}]
  %s17 = inlined_call_operand.vmem [shape: f32[1,32], index: 17, kind: input, shape index: {}]
  %s18 = inlined_call_operand.vmem [shape: bf16[16,32], index: 18, kind: input, shape index: {}]
  %s19 = inlined_call_operand.vmem [shape: f32[1,32], index: 19, kind: input, shape index: {}]
  %s20 = inlined_call_operand.vmem [shape: f32[1,32], index: 20, kind: input, shape index: {}]
  %s21 = inlined_call_operand.vmem [shape: f32[1,32], index: 21, kind: input, shape index: {}]
  %s22 = inlined_call_operand.vmem [shape: bf16[32,128], index: 22, kind: input, shape index: {}]
  %s23 = inlined_call_operand.vmem [shape: f32[1,128], index: 23, kind: input, shape index: {}]
  %s24 = inlined_call_operand.hbm [shape: f32[2,1,128], index: 24, kind: output, shape index: {}]
  %s25 = sld [smem:[#allocation0]]
  $region129: #{mvit_forward.7} parent=0
    _
  %s27 = ssub.s32 1, %s25
  %s28 = scalar_select 0, %s27, %s25
  $region1: #{mvit_forward.7} parent=0
    #allocation2 [shape = 'u8[1024]{0}', space=vmem, size = 0x400, scoped, tag = 'output window, operand 0']
    #allocation3 [shape = 's32[2]{0}', space=sflag, size = 0x8, scoped, tag = 'scoped memory for mvit_forward.7']
    %29 = vsyncpa [#allocation3], 0
    %s30 = scalar_lea.sflag [#allocation3], 1
    %31 = vsyncpa %s30, 0
    loop: start=0, step=1, limit=4
    $region2: #{mvit_forward.7} parent=1 // loop_pre_header
      _
    $region3: #{mvit_forward.7} parent=1 // loop_header
      %s33 = sphi 0, %s37
      %p34 = scmp.ge.s32.totalorder %s33, 4
      %s43 = sphi 0, %s45
      %s46 = sphi 0, %s43
      %s47 = sphi 0, %s46
      %s63 = sphi 0, %s47
      %s69 = sphi 0, %s71
      %s72 = sphi 0, %s69
      %s73 = sphi 0, %s72
      %s89 = sphi 0, %s73
      %s95 = sphi 0, %s97
      %s98 = sphi 0, %s95
      %s99 = sphi 0, %s98
      %s115 = sphi 0, %s99
      %s119 = sphi 0, %s119
      %s121 = sphi 0, %s119
      %s122 = sphi 0, %s121
      %s136 = sphi 0, %s122
      %s140 = sphi 0, %s140
      %s142 = sphi 0, %s140
      %s143 = sphi 0, %s142
      %s157 = sphi 0, %s143
      %s161 = sphi 0, %s161
      %s163 = sphi 0, %s161
      %s164 = sphi 0, %s163
      %s178 = sphi 0, %s164
      %s182 = sphi 0, %s182
      %s184 = sphi 0, %s182
      %s185 = sphi 0, %s184
      %s199 = sphi 0, %s185
      %s203 = sphi 0, %s203
      %s205 = sphi 0, %s203
      %s206 = sphi 0, %s205
      %s220 = sphi 0, %s206
      %s224 = sphi 0, %s224
      %s226 = sphi 0, %s224
      %s227 = sphi 0, %s226
      %s241 = sphi 0, %s227
      %s245 = sphi 0, %s245
      %s247 = sphi 0, %s245
      %s248 = sphi 0, %s247
      %s262 = sphi 0, %s248
      %s266 = sphi 0, %s266
      %s268 = sphi 0, %s266
      %s269 = sphi 0, %s268
      %s283 = sphi 0, %s269
      %s289 = sphi 0, %s291
      %s292 = sphi 0, %s289
      %s293 = sphi 0, %s292
      %s309 = sphi 0, %s293
      %s313 = sphi 0, %s313
      %s315 = sphi 0, %s313
      %s316 = sphi 0, %s315
      %s330 = sphi 0, %s316
      %s334 = sphi 0, %s334
      %s336 = sphi 0, %s334
      %s337 = sphi 0, %s336
      %s351 = sphi 0, %s337
      %s355 = sphi 0, %s355
      %s357 = sphi 0, %s355
      %s358 = sphi 0, %s357
      %s372 = sphi 0, %s358
      %s376 = sphi 0, %s376
      %s378 = sphi 0, %s376
      %s379 = sphi 0, %s378
      %s393 = sphi 0, %s379
      %s397 = sphi 0, %s397
      %s399 = sphi 0, %s397
      %s400 = sphi 0, %s399
      %s414 = sphi 0, %s400
      %s418 = sphi 0, %s418
      %s420 = sphi 0, %s418
      %s421 = sphi 0, %s420
      %s435 = sphi 0, %s421
      %s439 = sphi 0, %s439
      %s441 = sphi 0, %s439
      %s442 = sphi 0, %s441
      %s456 = sphi 0, %s442
      %s460 = sphi 0, %s460
      %s462 = sphi 0, %s460
      %s463 = sphi 0, %s462
      %s477 = sphi 0, %s463
      %s481 = sphi 0, %s481
      %s483 = sphi 0, %s481
      %s484 = sphi 0, %s483
      %s498 = sphi 0, %s484
      %s502 = sphi 0, %s502
      %s504 = sphi 0, %s502
      %s505 = sphi 0, %s504
      %s519 = sphi 0, %s505
      %s523 = sphi 0, %s523
      %s525 = sphi 0, %s523
      %s526 = sphi 0, %s525
      %s540 = sphi 0, %s526
      %s544 = sphi 0, %s544
      %s546 = sphi 0, %s544
      %s547 = sphi 0, %s546
      %s561 = sphi 0, %s547
      %s567 = sphi 0, %s569
      %s570 = sphi 0, %s567
      %s571 = sphi 0, %s570
      %s587 = sphi 0, %s571
    $region4: #{mvit_forward.7} parent=1 // loop_header_branch
      %36 = sbr.rel (%p34) target = $region8
    $region5: #{mvit_forward.7} parent=1 // loop_body
      %s38 = ssub.s32 %s33, 1
      %s39 = ssub.s32 %s33, 2
      %s40 = sadd.s32 %s33, 1
      %s41 = ssub.s32 %s33, %s40
      %p42 = scmp.eq.s32.totalorder %s41, 0
      %s44 = sadd.s32 %s43, 1
      %s45 = scalar_select %p42, %s43, %s44
      %p48 = pneg %p42
      %p49 = scmp.eq.s32.totalorder %s33, 1
      %p50 = por %p48, %p49
      %p51 = scmp.ne.s32.totalorder %s43, %s46
      %p52 = scmp.eq.s32.totalorder %s33, 0
      %p53 = por %p51, %p52
      %p54 = scmp.ne.s32.totalorder %s43, %s46
      %p55 = scmp.eq.s32.totalorder %s38, 1
      %p56 = por %p54, %p55
      %p57 = scmp.ne.s32.totalorder %s46, %s47
      %p58 = scmp.eq.s32.totalorder %s38, 0
      %p59 = por %p57, %p58
      %p60 = scmp.ne.s32.totalorder %s46, %s47
      %p61 = scmp.eq.s32.totalorder %s39, 1
      %p62 = por %p60, %p61
      %p64 = scmp.ne.s32.totalorder %s47, %s63
      %p65 = scmp.eq.s32.totalorder %s39, 0
      %p66 = por %p64, %p65
      %s67 = ssub.s32 %s33, %s40
      %p68 = scmp.eq.s32.totalorder %s67, 0
      %s70 = sadd.s32 %s69, 1
      %s71 = scalar_select %p68, %s69, %s70
      %p74 = pneg %p68
      %p75 = scmp.eq.s32.totalorder %s33, 1
      %p76 = por %p74, %p75
      %p77 = scmp.ne.s32.totalorder %s69, %s72
      %p78 = scmp.eq.s32.totalorder %s33, 0
      %p79 = por %p77, %p78
      %p80 = scmp.ne.s32.totalorder %s69, %s72
      %p81 = scmp.eq.s32.totalorder %s38, 1
      %p82 = por %p80, %p81
      %p83 = scmp.ne.s32.totalorder %s72, %s73
      %p84 = scmp.eq.s32.totalorder %s38, 0
      %p85 = por %p83, %p84
      %p86 = scmp.ne.s32.totalorder %s72, %s73
      %p87 = scmp.eq.s32.totalorder %s39, 1
      %p88 = por %p86, %p87
      %p90 = scmp.ne.s32.totalorder %s73, %s89
      %p91 = scmp.eq.s32.totalorder %s39, 0
      %p92 = por %p90, %p91
      %s93 = ssub.s32 %s33, %s40
      %p94 = scmp.eq.s32.totalorder %s93, 0
      %s96 = sadd.s32 %s95, 1
      %s97 = scalar_select %p94, %s95, %s96
      %p100 = pneg %p94
      %p101 = scmp.eq.s32.totalorder %s33, 1
      %p102 = por %p100, %p101
      %p103 = scmp.ne.s32.totalorder %s95, %s98
      %p104 = scmp.eq.s32.totalorder %s33, 0
      %p105 = por %p103, %p104
      %p106 = scmp.ne.s32.totalorder %s95, %s98
      %p107 = scmp.eq.s32.totalorder %s38, 1
      %p108 = por %p106, %p107
      %p109 = scmp.ne.s32.totalorder %s98, %s99
      %p110 = scmp.eq.s32.totalorder %s38, 0
      %p111 = por %p109, %p110
      %p112 = scmp.ne.s32.totalorder %s98, %s99
      %p113 = scmp.eq.s32.totalorder %s39, 1
      %p114 = por %p112, %p113
      %p116 = scmp.ne.s32.totalorder %s99, %s115
      %p117 = scmp.eq.s32.totalorder %s39, 0
      %p118 = por %p116, %p117
      %s120 = sadd.s32 %s119, 1
      %p123 = scmp.eq.s32.totalorder %s33, 1
      %p124 = scmp.ne.s32.totalorder %s119, %s121
      %p125 = scmp.eq.s32.totalorder %s33, 0
      %p126 = por %p124, %p125
      %p127 = scmp.ne.s32.totalorder %s119, %s121
      %p128 = scmp.eq.s32.totalorder %s38, 1
      %p129 = por %p127, %p128
      %p130 = scmp.ne.s32.totalorder %s121, %s122
      %p131 = scmp.eq.s32.totalorder %s38, 0
      %p132 = por %p130, %p131
      %p133 = scmp.ne.s32.totalorder %s121, %s122
      %p134 = scmp.eq.s32.totalorder %s39, 1
      %p135 = por %p133, %p134
      %p137 = scmp.ne.s32.totalorder %s122, %s136
      %p138 = scmp.eq.s32.totalorder %s39, 0
      %p139 = por %p137, %p138
      %s141 = sadd.s32 %s140, 1
      %p144 = scmp.eq.s32.totalorder %s33, 1
      %p145 = scmp.ne.s32.totalorder %s140, %s142
      %p146 = scmp.eq.s32.totalorder %s33, 0
      %p147 = por %p145, %p146
      %p148 = scmp.ne.s32.totalorder %s140, %s142
      %p149 = scmp.eq.s32.totalorder %s38, 1
      %p150 = por %p148, %p149
      %p151 = scmp.ne.s32.totalorder %s142, %s143
      %p152 = scmp.eq.s32.totalorder %s38, 0
      %p153 = por %p151, %p152
      %p154 = scmp.ne.s32.totalorder %s142, %s143
      %p155 = scmp.eq.s32.totalorder %s39, 1
      %p156 = por %p154, %p155
      %p158 = scmp.ne.s32.totalorder %s143, %s157
      %p159 = scmp.eq.s32.totalorder %s39, 0
      %p160 = por %p158, %p159
      %s162 = sadd.s32 %s161, 1
      %p165 = scmp.eq.s32.totalorder %s33, 1
      %p166 = scmp.ne.s32.totalorder %s161, %s163
      %p167 = scmp.eq.s32.totalorder %s33, 0
      %p168 = por %p166, %p167
      %p169 = scmp.ne.s32.totalorder %s161, %s163
      %p170 = scmp.eq.s32.totalorder %s38, 1
      %p171 = por %p169, %p170
      %p172 = scmp.ne.s32.totalorder %s163, %s164
      %p173 = scmp.eq.s32.totalorder %s38, 0
      %p174 = por %p172, %p173
      %p175 = scmp.ne.s32.totalorder %s163, %s164
      %p176 = scmp.eq.s32.totalorder %s39, 1
      %p177 = por %p175, %p176
      %p179 = scmp.ne.s32.totalorder %s164, %s178
      %p180 = scmp.eq.s32.totalorder %s39, 0
      %p181 = por %p179, %p180
      %s183 = sadd.s32 %s182, 1
      %p186 = scmp.eq.s32.totalorder %s33, 1
      %p187 = scmp.ne.s32.totalorder %s182, %s184
      %p188 = scmp.eq.s32.totalorder %s33, 0
      %p189 = por %p187, %p188
      %p190 = scmp.ne.s32.totalorder %s182, %s184
      %p191 = scmp.eq.s32.totalorder %s38, 1
      %p192 = por %p190, %p191
      %p193 = scmp.ne.s32.totalorder %s184, %s185
      %p194 = scmp.eq.s32.totalorder %s38, 0
      %p195 = por %p193, %p194
      %p196 = scmp.ne.s32.totalorder %s184, %s185
      %p197 = scmp.eq.s32.totalorder %s39, 1
      %p198 = por %p196, %p197
      %p200 = scmp.ne.s32.totalorder %s185, %s199
      %p201 = scmp.eq.s32.totalorder %s39, 0
      %p202 = por %p200, %p201
      %s204 = sadd.s32 %s203, 1
      %p207 = scmp.eq.s32.totalorder %s33, 1
      %p208 = scmp.ne.s32.totalorder %s203, %s205
      %p209 = scmp.eq.s32.totalorder %s33, 0
      %p210 = por %p208, %p209
      %p211 = scmp.ne.s32.totalorder %s203, %s205
      %p212 = scmp.eq.s32.totalorder %s38, 1
      %p213 = por %p211, %p212
      %p214 = scmp.ne.s32.totalorder %s205, %s206
      %p215 = scmp.eq.s32.totalorder %s38, 0
      %p216 = por %p214, %p215
      %p217 = scmp.ne.s32.totalorder %s205, %s206
      %p218 = scmp.eq.s32.totalorder %s39, 1
      %p219 = por %p217, %p218
      %p221 = scmp.ne.s32.totalorder %s206, %s220
      %p222 = scmp.eq.s32.totalorder %s39, 0
      %p223 = por %p221, %p222
      %s225 = sadd.s32 %s224, 1
      %p228 = scmp.eq.s32.totalorder %s33, 1
      %p229 = scmp.ne.s32.totalorder %s224, %s226
      %p230 = scmp.eq.s32.totalorder %s33, 0
      %p231 = por %p229, %p230
      %p232 = scmp.ne.s32.totalorder %s224, %s226
      %p233 = scmp.eq.s32.totalorder %s38, 1
      %p234 = por %p232, %p233
      %p235 = scmp.ne.s32.totalorder %s226, %s227
      %p236 = scmp.eq.s32.totalorder %s38, 0
      %p237 = por %p235, %p236
      %p238 = scmp.ne.s32.totalorder %s226, %s227
      %p239 = scmp.eq.s32.totalorder %s39, 1
      %p240 = por %p238, %p239
      %p242 = scmp.ne.s32.totalorder %s227, %s241
      %p243 = scmp.eq.s32.totalorder %s39, 0
      %p244 = por %p242, %p243
      %s246 = sadd.s32 %s245, 1
      %p249 = scmp.eq.s32.totalorder %s33, 1
      %p250 = scmp.ne.s32.totalorder %s245, %s247
      %p251 = scmp.eq.s32.totalorder %s33, 0
      %p252 = por %p250, %p251
      %p253 = scmp.ne.s32.totalorder %s245, %s247
      %p254 = scmp.eq.s32.totalorder %s38, 1
      %p255 = por %p253, %p254
      %p256 = scmp.ne.s32.totalorder %s247, %s248
      %p257 = scmp.eq.s32.totalorder %s38, 0
      %p258 = por %p256, %p257
      %p259 = scmp.ne.s32.totalorder %s247, %s248
      %p260 = scmp.eq.s32.totalorder %s39, 1
      %p261 = por %p259, %p260
      %p263 = scmp.ne.s32.totalorder %s248, %s262
      %p264 = scmp.eq.s32.totalorder %s39, 0
      %p265 = por %p263, %p264
      %s267 = sadd.s32 %s266, 1
      %p270 = scmp.eq.s32.totalorder %s33, 1
      %p271 = scmp.ne.s32.totalorder %s266, %s268
      %p272 = scmp.eq.s32.totalorder %s33, 0
      %p273 = por %p271, %p272
      %p274 = scmp.ne.s32.totalorder %s266, %s268
      %p275 = scmp.eq.s32.totalorder %s38, 1
      %p276 = por %p274, %p275
      %p277 = scmp.ne.s32.totalorder %s268, %s269
      %p278 = scmp.eq.s32.totalorder %s38, 0
      %p279 = por %p277, %p278
      %p280 = scmp.ne.s32.totalorder %s268, %s269
      %p281 = scmp.eq.s32.totalorder %s39, 1
      %p282 = por %p280, %p281
      %p284 = scmp.ne.s32.totalorder %s269, %s283
      %p285 = scmp.eq.s32.totalorder %s39, 0
      %p286 = por %p284, %p285
      %s287 = ssub.s32 %s33, %s40
      %p288 = scmp.eq.s32.totalorder %s287, 0
      %s290 = sadd.s32 %s289, 1
      %s291 = scalar_select %p288, %s289, %s290
      %p294 = pneg %p288
      %p295 = scmp.eq.s32.totalorder %s33, 1
      %p296 = por %p294, %p295
      %p297 = scmp.ne.s32.totalorder %s289, %s292
      %p298 = scmp.eq.s32.totalorder %s33, 0
      %p299 = por %p297, %p298
      %p300 = scmp.ne.s32.totalorder %s289, %s292
      %p301 = scmp.eq.s32.totalorder %s38, 1
      %p302 = por %p300, %p301
      %p303 = scmp.ne.s32.totalorder %s292, %s293
      %p304 = scmp.eq.s32.totalorder %s38, 0
      %p305 = por %p303, %p304
      %p306 = scmp.ne.s32.totalorder %s292, %s293
      %p307 = scmp.eq.s32.totalorder %s39, 1
      %p308 = por %p306, %p307
      %p310 = scmp.ne.s32.totalorder %s293, %s309
      %p311 = scmp.eq.s32.totalorder %s39, 0
      %p312 = por %p310, %p311
      %s314 = sadd.s32 %s313, 1
      %p317 = scmp.eq.s32.totalorder %s33, 1
      %p318 = scmp.ne.s32.totalorder %s313, %s315
      %p319 = scmp.eq.s32.totalorder %s33, 0
      %p320 = por %p318, %p319
      %p321 = scmp.ne.s32.totalorder %s313, %s315
      %p322 = scmp.eq.s32.totalorder %s38, 1
      %p323 = por %p321, %p322
      %p324 = scmp.ne.s32.totalorder %s315, %s316
      %p325 = scmp.eq.s32.totalorder %s38, 0
      %p326 = por %p324, %p325
      %p327 = scmp.ne.s32.totalorder %s315, %s316
      %p328 = scmp.eq.s32.totalorder %s39, 1
      %p329 = por %p327, %p328
      %p331 = scmp.ne.s32.totalorder %s316, %s330
      %p332 = scmp.eq.s32.totalorder %s39, 0
      %p333 = por %p331, %p332
      %s335 = sadd.s32 %s334, 1
      %p338 = scmp.eq.s32.totalorder %s33, 1
      %p339 = scmp.ne.s32.totalorder %s334, %s336
      %p340 = scmp.eq.s32.totalorder %s33, 0
      %p341 = por %p339, %p340
      %p342 = scmp.ne.s32.totalorder %s334, %s336
      %p343 = scmp.eq.s32.totalorder %s38, 1
      %p344 = por %p342, %p343
      %p345 = scmp.ne.s32.totalorder %s336, %s337
      %p346 = scmp.eq.s32.totalorder %s38, 0
      %p347 = por %p345, %p346
      %p348 = scmp.ne.s32.totalorder %s336, %s337
      %p349 = scmp.eq.s32.totalorder %s39, 1
      %p350 = por %p348, %p349
      %p352 = scmp.ne.s32.totalorder %s337, %s351
      %p353 = scmp.eq.s32.totalorder %s39, 0
      %p354 = por %p352, %p353
      %s356 = sadd.s32 %s355, 1
      %p359 = scmp.eq.s32.totalorder %s33, 1
      %p360 = scmp.ne.s32.totalorder %s355, %s357
      %p361 = scmp.eq.s32.totalorder %s33, 0
      %p362 = por %p360, %p361
      %p363 = scmp.ne.s32.totalorder %s355, %s357
      %p364 = scmp.eq.s32.totalorder %s38, 1
      %p365 = por %p363, %p364
      %p366 = scmp.ne.s32.totalorder %s357, %s358
      %p367 = scmp.eq.s32.totalorder %s38, 0
      %p368 = por %p366, %p367
      %p369 = scmp.ne.s32.totalorder %s357, %s358
      %p370 = scmp.eq.s32.totalorder %s39, 1
      %p371 = por %p369, %p370
      %p373 = scmp.ne.s32.totalorder %s358, %s372
      %p374 = scmp.eq.s32.totalorder %s39, 0
      %p375 = por %p373, %p374
      %s377 = sadd.s32 %s376, 1
      %p380 = scmp.eq.s32.totalorder %s33, 1
      %p381 = scmp.ne.s32.totalorder %s376, %s378
      %p382 = scmp.eq.s32.totalorder %s33, 0
      %p383 = por %p381, %p382
      %p384 = scmp.ne.s32.totalorder %s376, %s378
      %p385 = scmp.eq.s32.totalorder %s38, 1
      %p386 = por %p384, %p385
      %p387 = scmp.ne.s32.totalorder %s378, %s379
      %p388 = scmp.eq.s32.totalorder %s38, 0
      %p389 = por %p387, %p388
      %p390 = scmp.ne.s32.totalorder %s378, %s379
      %p391 = scmp.eq.s32.totalorder %s39, 1
      %p392 = por %p390, %p391
      %p394 = scmp.ne.s32.totalorder %s379, %s393
      %p395 = scmp.eq.s32.totalorder %s39, 0
      %p396 = por %p394, %p395
      %s398 = sadd.s32 %s397, 1
      %p401 = scmp.eq.s32.totalorder %s33, 1
      %p402 = scmp.ne.s32.totalorder %s397, %s399
      %p403 = scmp.eq.s32.totalorder %s33, 0
      %p404 = por %p402, %p403
      %p405 = scmp.ne.s32.totalorder %s397, %s399
      %p406 = scmp.eq.s32.totalorder %s38, 1
      %p407 = por %p405, %p406
      %p408 = scmp.ne.s32.totalorder %s399, %s400
      %p409 = scmp.eq.s32.totalorder %s38, 0
      %p410 = por %p408, %p409
      %p411 = scmp.ne.s32.totalorder %s399, %s400
      %p412 = scmp.eq.s32.totalorder %s39, 1
      %p413 = por %p411, %p412
      %p415 = scmp.ne.s32.totalorder %s400, %s414
      %p416 = scmp.eq.s32.totalorder %s39, 0
      %p417 = por %p415, %p416
      %s419 = sadd.s32 %s418, 1
      %p422 = scmp.eq.s32.totalorder %s33, 1
      %p423 = scmp.ne.s32.totalorder %s418, %s420
      %p424 = scmp.eq.s32.totalorder %s33, 0
      %p425 = por %p423, %p424
      %p426 = scmp.ne.s32.totalorder %s418, %s420
      %p427 = scmp.eq.s32.totalorder %s38, 1
      %p428 = por %p426, %p427
      %p429 = scmp.ne.s32.totalorder %s420, %s421
      %p430 = scmp.eq.s32.totalorder %s38, 0
      %p431 = por %p429, %p430
      %p432 = scmp.ne.s32.totalorder %s420, %s421
      %p433 = scmp.eq.s32.totalorder %s39, 1
      %p434 = por %p432, %p433
      %p436 = scmp.ne.s32.totalorder %s421, %s435
      %p437 = scmp.eq.s32.totalorder %s39, 0
      %p438 = por %p436, %p437
      %s440 = sadd.s32 %s439, 1
      %p443 = scmp.eq.s32.totalorder %s33, 1
      %p444 = scmp.ne.s32.totalorder %s439, %s441
      %p445 = scmp.eq.s32.totalorder %s33, 0
      %p446 = por %p444, %p445
      %p447 = scmp.ne.s32.totalorder %s439, %s441
      %p448 = scmp.eq.s32.totalorder %s38, 1
      %p449 = por %p447, %p448
      %p450 = scmp.ne.s32.totalorder %s441, %s442
      %p451 = scmp.eq.s32.totalorder %s38, 0
      %p452 = por %p450, %p451
      %p453 = scmp.ne.s32.totalorder %s441, %s442
      %p454 = scmp.eq.s32.totalorder %s39, 1
      %p455 = por %p453, %p454
      %p457 = scmp.ne.s32.totalorder %s442, %s456
      %p458 = scmp.eq.s32.totalorder %s39, 0
      %p459 = por %p457, %p458
      %s461 = sadd.s32 %s460, 1
      %p464 = scmp.eq.s32.totalorder %s33, 1
      %p465 = scmp.ne.s32.totalorder %s460, %s462
      %p466 = scmp.eq.s32.totalorder %s33, 0
      %p467 = por %p465, %p466
      %p468 = scmp.ne.s32.totalorder %s460, %s462
      %p469 = scmp.eq.s32.totalorder %s38, 1
      %p470 = por %p468, %p469
      %p471 = scmp.ne.s32.totalorder %s462, %s463
      %p472 = scmp.eq.s32.totalorder %s38, 0
      %p473 = por %p471, %p472
      %p474 = scmp.ne.s32.totalorder %s462, %s463
      %p475 = scmp.eq.s32.totalorder %s39, 1
      %p476 = por %p474, %p475
      %p478 = scmp.ne.s32.totalorder %s463, %s477
      %p479 = scmp.eq.s32.totalorder %s39, 0
      %p480 = por %p478, %p479
      %s482 = sadd.s32 %s481, 1
      %p485 = scmp.eq.s32.totalorder %s33, 1
      %p486 = scmp.ne.s32.totalorder %s481, %s483
      %p487 = scmp.eq.s32.totalorder %s33, 0
      %p488 = por %p486, %p487
      %p489 = scmp.ne.s32.totalorder %s481, %s483
      %p490 = scmp.eq.s32.totalorder %s38, 1
      %p491 = por %p489, %p490
      %p492 = scmp.ne.s32.totalorder %s483, %s484
      %p493 = scmp.eq.s32.totalorder %s38, 0
      %p494 = por %p492, %p493
      %p495 = scmp.ne.s32.totalorder %s483, %s484
      %p496 = scmp.eq.s32.totalorder %s39, 1
      %p497 = por %p495, %p496
      %p499 = scmp.ne.s32.totalorder %s484, %s498
      %p500 = scmp.eq.s32.totalorder %s39, 0
      %p501 = por %p499, %p500
      %s503 = sadd.s32 %s502, 1
      %p506 = scmp.eq.s32.totalorder %s33, 1
      %p507 = scmp.ne.s32.totalorder %s502, %s504
      %p508 = scmp.eq.s32.totalorder %s33, 0
      %p509 = por %p507, %p508
      %p510 = scmp.ne.s32.totalorder %s502, %s504
      %p511 = scmp.eq.s32.totalorder %s38, 1
      %p512 = por %p510, %p511
      %p513 = scmp.ne.s32.totalorder %s504, %s505
      %p514 = scmp.eq.s32.totalorder %s38, 0
      %p515 = por %p513, %p514
      %p516 = scmp.ne.s32.totalorder %s504, %s505
      %p517 = scmp.eq.s32.totalorder %s39, 1
      %p518 = por %p516, %p517
      %p520 = scmp.ne.s32.totalorder %s505, %s519
      %p521 = scmp.eq.s32.totalorder %s39, 0
      %p522 = por %p520, %p521
      %s524 = sadd.s32 %s523, 1
      %p527 = scmp.eq.s32.totalorder %s33, 1
      %p528 = scmp.ne.s32.totalorder %s523, %s525
      %p529 = scmp.eq.s32.totalorder %s33, 0
      %p530 = por %p528, %p529
      %p531 = scmp.ne.s32.totalorder %s523, %s525
      %p532 = scmp.eq.s32.totalorder %s38, 1
      %p533 = por %p531, %p532
      %p534 = scmp.ne.s32.totalorder %s525, %s526
      %p535 = scmp.eq.s32.totalorder %s38, 0
      %p536 = por %p534, %p535
      %p537 = scmp.ne.s32.totalorder %s525, %s526
      %p538 = scmp.eq.s32.totalorder %s39, 1
      %p539 = por %p537, %p538
      %p541 = scmp.ne.s32.totalorder %s526, %s540
      %p542 = scmp.eq.s32.totalorder %s39, 0
      %p543 = por %p541, %p542
      %s545 = sadd.s32 %s544, 1
      %p548 = scmp.eq.s32.totalorder %s33, 1
      %p549 = scmp.ne.s32.totalorder %s544, %s546
      %p550 = scmp.eq.s32.totalorder %s33, 0
      %p551 = por %p549, %p550
      %p552 = scmp.ne.s32.totalorder %s544, %s546
      %p553 = scmp.eq.s32.totalorder %s38, 1
      %p554 = por %p552, %p553
      %p555 = scmp.ne.s32.totalorder %s546, %s547
      %p556 = scmp.eq.s32.totalorder %s38, 0
      %p557 = por %p555, %p556
      %p558 = scmp.ne.s32.totalorder %s546, %s547
      %p559 = scmp.eq.s32.totalorder %s39, 1
      %p560 = por %p558, %p559
      %p562 = scmp.ne.s32.totalorder %s547, %s561
      %p563 = scmp.eq.s32.totalorder %s39, 0
      %p564 = por %p562, %p563
      %s565 = ssub.s32 %s33, %s40
      %p566 = scmp.eq.s32.totalorder %s565, 0
      %s568 = sadd.s32 %s567, 1
      %s569 = scalar_select %p566, %s567, %s568
      %p572 = pneg %p566
      %p573 = scmp.eq.s32.totalorder %s33, 1
      %p574 = por %p572, %p573
      %p575 = scmp.ne.s32.totalorder %s567, %s570
      %p576 = scmp.eq.s32.totalorder %s33, 0
      %p577 = por %p575, %p576
      %p578 = scmp.ne.s32.totalorder %s567, %s570
      %p579 = scmp.eq.s32.totalorder %s38, 1
      %p580 = por %p578, %p579
      %p581 = scmp.ne.s32.totalorder %s570, %s571
      %p582 = scmp.eq.s32.totalorder %s38, 0
      %p583 = por %p581, %p582
      %p584 = scmp.ne.s32.totalorder %s570, %s571
      %p585 = scmp.eq.s32.totalorder %s39, 1
      %p586 = por %p584, %p585
      %p588 = scmp.ne.s32.totalorder %s571, %s587
      %p589 = scmp.eq.s32.totalorder %s39, 0
      %p590 = por %p588, %p589
      %p591 = scmp.le.s32.totalorder 1, %s33
      %p592 = scmp.lt.s32.totalorder %s33, 3
      %p593 = pnand %p591, %p592
      %p594 = pneg %p593
      // Predicated region
      $region9: #{mvit_forward.7} parent=5 // pred_check
        _
      $region10: #{mvit_forward.7} parent=5 // pred_check_branch
        %596 = sbr.rel (%p593) target = $region12
      $region11: #{mvit_forward.7} parent=5 // pred_region
        %s597 = ssub.s32 %s33, 1
        // Predicated region
        $region13: #{mvit_forward.7} parent=11 // pred_check
          %p598 = pneg %p132
        $region14: #{mvit_forward.7} parent=11 // pred_check_branch
          %600 = sbr.rel (%p598) target = $region16
        $region15: #{mvit_forward.7} parent=11 // pred_region
          _
        $region16: #{mvit_forward.7} parent=11 // pred_fallthru
          _
        // Predicated region
        $region17: #{mvit_forward.7} parent=11 // pred_check
          %p601 = pneg %p153
        $region18: #{mvit_forward.7} parent=11 // pred_check_branch
          %603 = sbr.rel (%p601) target = $region20
        $region19: #{mvit_forward.7} parent=11 // pred_region
          _
        $region20: #{mvit_forward.7} parent=11 // pred_fallthru
          _
        // Predicated region
        $region21: #{mvit_forward.7} parent=11 // pred_check
          %p604 = pneg %p174
        $region22: #{mvit_forward.7} parent=11 // pred_check_branch
          %606 = sbr.rel (%p604) target = $region24
        $region23: #{mvit_forward.7} parent=11 // pred_region
          _
        $region24: #{mvit_forward.7} parent=11 // pred_fallthru
          _
        // Predicated region
        $region25: #{mvit_forward.7} parent=11 // pred_check
          %p607 = pneg %p195
        $region26: #{mvit_forward.7} parent=11 // pred_check_branch
          %609 = sbr.rel (%p607) target = $region28
        $region27: #{mvit_forward.7} parent=11 // pred_region
          _
        $region28: #{mvit_forward.7} parent=11 // pred_fallthru
          _
        // Predicated region
        $region29: #{mvit_forward.7} parent=11 // pred_check
          %p610 = pneg %p216
        $region30: #{mvit_forward.7} parent=11 // pred_check_branch
          %612 = sbr.rel (%p610) target = $region32
        $region31: #{mvit_forward.7} parent=11 // pred_region
          _
        $region32: #{mvit_forward.7} parent=11 // pred_fallthru
          _
        // Predicated region
        $region33: #{mvit_forward.7} parent=11 // pred_check
          %p613 = pneg %p237
        $region34: #{mvit_forward.7} parent=11 // pred_check_branch
          %615 = sbr.rel (%p613) target = $region36
        $region35: #{mvit_forward.7} parent=11 // pred_region
          _
        $region36: #{mvit_forward.7} parent=11 // pred_fallthru
          _
        // Predicated region
        $region37: #{mvit_forward.7} parent=11 // pred_check
          %p616 = pneg %p258
        $region38: #{mvit_forward.7} parent=11 // pred_check_branch
          %618 = sbr.rel (%p616) target = $region40
        $region39: #{mvit_forward.7} parent=11 // pred_region
          _
        $region40: #{mvit_forward.7} parent=11 // pred_fallthru
          _
        // Predicated region
        $region41: #{mvit_forward.7} parent=11 // pred_check
          %p619 = pneg %p279
        $region42: #{mvit_forward.7} parent=11 // pred_check_branch
          %621 = sbr.rel (%p619) target = $region44
        $region43: #{mvit_forward.7} parent=11 // pred_region
          _
        $region44: #{mvit_forward.7} parent=11 // pred_fallthru
          _
        // Predicated region
        $region45: #{mvit_forward.7} parent=11 // pred_check
          %p622 = pneg %p326
        $region46: #{mvit_forward.7} parent=11 // pred_check_branch
          %624 = sbr.rel (%p622) target = $region48
        $region47: #{mvit_forward.7} parent=11 // pred_region
          _
        $region48: #{mvit_forward.7} parent=11 // pred_fallthru
          _
        // Predicated region
        $region49: #{mvit_forward.7} parent=11 // pred_check
          %p625 = pneg %p347
        $region50: #{mvit_forward.7} parent=11 // pred_check_branch
          %627 = sbr.rel (%p625) target = $region52
        $region51: #{mvit_forward.7} parent=11 // pred_region
          _
        $region52: #{mvit_forward.7} parent=11 // pred_fallthru
          _
        // Predicated region
        $region53: #{mvit_forward.7} parent=11 // pred_check
          %p628 = pneg %p368
        $region54: #{mvit_forward.7} parent=11 // pred_check_branch
          %630 = sbr.rel (%p628) target = $region56
        $region55: #{mvit_forward.7} parent=11 // pred_region
          _
        $region56: #{mvit_forward.7} parent=11 // pred_fallthru
          _
        // Predicated region
        $region57: #{mvit_forward.7} parent=11 // pred_check
          %p631 = pneg %p389
        $region58: #{mvit_forward.7} parent=11 // pred_check_branch
          %633 = sbr.rel (%p631) target = $region60
        $region59: #{mvit_forward.7} parent=11 // pred_region
          _
        $region60: #{mvit_forward.7} parent=11 // pred_fallthru
          _
        // Predicated region
        $region61: #{mvit_forward.7} parent=11 // pred_check
          %p634 = pneg %p410
        $region62: #{mvit_forward.7} parent=11 // pred_check_branch
          %636 = sbr.rel (%p634) target = $region64
        $region63: #{mvit_forward.7} parent=11 // pred_region
          _
        $region64: #{mvit_forward.7} parent=11 // pred_fallthru
          _
        // Predicated region
        $region65: #{mvit_forward.7} parent=11 // pred_check
          %p637 = pneg %p431
        $region66: #{mvit_forward.7} parent=11 // pred_check_branch
          %639 = sbr.rel (%p637) target = $region68
        $region67: #{mvit_forward.7} parent=11 // pred_region
          _
        $region68: #{mvit_forward.7} parent=11 // pred_fallthru
          _
        // Predicated region
        $region69: #{mvit_forward.7} parent=11 // pred_check
          %p640 = pneg %p452
        $region70: #{mvit_forward.7} parent=11 // pred_check_branch
          %642 = sbr.rel (%p640) target = $region72
        $region71: #{mvit_forward.7} parent=11 // pred_region
          _
        $region72: #{mvit_forward.7} parent=11 // pred_fallthru
          _
        // Predicated region
        $region73: #{mvit_forward.7} parent=11 // pred_check
          %p643 = pneg %p473
        $region74: #{mvit_forward.7} parent=11 // pred_check_branch
          %645 = sbr.rel (%p643) target = $region76
        $region75: #{mvit_forward.7} parent=11 // pred_region
          _
        $region76: #{mvit_forward.7} parent=11 // pred_fallthru
          _
        // Predicated region
        $region77: #{mvit_forward.7} parent=11 // pred_check
          %p646 = pneg %p494
        $region78: #{mvit_forward.7} parent=11 // pred_check_branch
          %648 = sbr.rel (%p646) target = $region80
        $region79: #{mvit_forward.7} parent=11 // pred_region
          _
        $region80: #{mvit_forward.7} parent=11 // pred_fallthru
          _
        // Predicated region
        $region81: #{mvit_forward.7} parent=11 // pred_check
          %p649 = pneg %p515
        $region82: #{mvit_forward.7} parent=11 // pred_check_branch
          %651 = sbr.rel (%p649) target = $region84
        $region83: #{mvit_forward.7} parent=11 // pred_region
          _
        $region84: #{mvit_forward.7} parent=11 // pred_fallthru
          _
        // Predicated region
        $region85: #{mvit_forward.7} parent=11 // pred_check
          %p652 = pneg %p536
        $region86: #{mvit_forward.7} parent=11 // pred_check_branch
          %654 = sbr.rel (%p652) target = $region88
        $region87: #{mvit_forward.7} parent=11 // pred_region
          _
        $region88: #{mvit_forward.7} parent=11 // pred_fallthru
          _
        // Predicated region
        $region89: #{mvit_forward.7} parent=11 // pred_check
          %p655 = pneg %p557
        $region90: #{mvit_forward.7} parent=11 // pred_check_branch
          %657 = sbr.rel (%p655) target = $region92
        $region91: #{mvit_forward.7} parent=11 // pred_region
          _
        $region92: #{mvit_forward.7} parent=11 // pred_fallthru
          _
      $region12: #{mvit_forward.7} parent=5 // pred_fallthru
        _
      %p658 = scmp.lt.s32.totalorder %s33, 2
      // Predicated region
      $region93: #{mvit_forward.7} parent=5 // pred_check
        %p659 = pneg %p658
      $region94: #{mvit_forward.7} parent=5 // pred_check_branch
        %661 = sbr.rel (%p659) target = $region96
      $region95: #{mvit_forward.7} parent=5 // pred_region
        // Predicated region
        $region97: #{mvit_forward.7} parent=95 // pred_check
          %p662 = pneg %p53
        $region98: #{mvit_forward.7} parent=95 // pred_check_branch
          %664 = sbr.rel (%p662) target = $region100
        $region99: #{mvit_forward.7} parent=95 // pred_region
          %p665 = scmp.lt.s32.totalorder %s33, 1
          %s666 = scalar_select %p665, %s33, 1
          %s667 = smul.addr %s666, 4
          %s668 = smul.addr %s667, 8
          %s669 = scalar_lea.vmem %s0, %s668
        $region100: #{mvit_forward.7} parent=95 // pred_fallthru
          _
        // Predicated region
        $region101: #{mvit_forward.7} parent=95 // pred_check
          %p670 = pneg %p79
        $region102: #{mvit_forward.7} parent=95 // pred_check_branch
          %672 = sbr.rel (%p670) target = $region104
        $region103: #{mvit_forward.7} parent=95 // pred_region
          %p673 = scmp.lt.s32.totalorder %s33, 1
          %s674 = scalar_select %p673, %s33, 1
          %s675 = smul.addr %s674, 10
          %s676 = smul.addr %s675, 8
          %s677 = scalar_lea.vmem %s1, %s676
        $region104: #{mvit_forward.7} parent=95 // pred_fallthru
          _
        // Predicated region
        $region105: #{mvit_forward.7} parent=95 // pred_check
          %p678 = pneg %p105
        $region106: #{mvit_forward.7} parent=95 // pred_check_branch
          %680 = sbr.rel (%p678) target = $region108
        $region107: #{mvit_forward.7} parent=95 // pred_region
          %p681 = scmp.lt.s32.totalorder %s33, 1
          %s682 = scalar_select %p681, %s33, 1
          %s683 = smul.addr %s682, 10
          %s684 = smul.addr %s683, 8
          %s685 = scalar_lea.vmem %s2, %s684
        $region108: #{mvit_forward.7} parent=95 // pred_fallthru
          _
        // Predicated region
        $region109: #{mvit_forward.7} parent=95 // pred_check
          %p686 = pneg %p299
        $region110: #{mvit_forward.7} parent=95 // pred_check_branch
          %688 = sbr.rel (%p686) target = $region112
        $region111: #{mvit_forward.7} parent=95 // pred_region
          %p689 = scmp.lt.s32.totalorder %s33, 1
          %s690 = scalar_select %p689, %s33, 1
          %s691 = smul.addr %s690, 2
          %s692 = smul.addr %s691, 8
          %s693 = scalar_lea.vmem %s11, %s692
        $region112: #{mvit_forward.7} parent=95 // pred_fallthru
          _
      $region96: #{mvit_forward.7} parent=5 // pred_fallthru
        _
      %p694 = scmp.le.s32.totalorder 1, %s33
      %p695 = scmp.lt.s32.totalorder %s33, 3
      %p696 = pnand %p694, %p695
      %p697 = pneg %p696
      // Predicated region
      $region113: #{mvit_forward.7} parent=5 // pred_check
        _
      $region114: #{mvit_forward.7} parent=5 // pred_check_branch
        %699 = sbr.rel (%p696) target = $region116
      $region115: #{mvit_forward.7} parent=5 // pred_region
        %s700 = ssub.s32 %s33, 1
        %p701 = scmp.lt.s32.totalorder %s38, 1
        %s702 = scalar_select %p701, %s38, 1
        %s703 = smul.addr %s702, 4
        %s704 = smul.addr %s703, 8
        %s705 = scalar_lea.vmem %s0, %s704
        %p706 = pneg %p59
        %p707 = pneg %p56
        %p708 = scmp.lt.s32.totalorder %s38, 1
        %s709 = scalar_select %p708, %s38, 1
        %s710 = smul.addr %s709, 10
        %s711 = smul.addr %s710, 8
        %s712 = scalar_lea.vmem %s1, %s711
        %p713 = pneg %p85
        %p714 = pneg %p82
        %p715 = scmp.lt.s32.totalorder %s38, 1
        %s716 = scalar_select %p715, %s38, 1
        %s717 = smul.addr %s716, 10
        %s718 = smul.addr %s717, 8
        %s719 = scalar_lea.vmem %s2, %s718
        %p720 = pneg %p111
        %p721 = pneg %p108
        %p722 = pneg %p132
        %p723 = pneg %p129
        %p724 = pneg %p153
        %p725 = pneg %p150
        %p726 = pneg %p174
        %p727 = pneg %p171
        %p728 = pneg %p195
        %p729 = pneg %p192
        %p730 = pneg %p216
        %p731 = pneg %p213
        %p732 = pneg %p237
        %p733 = pneg %p234
        %p734 = pneg %p258
        %p735 = pneg %p255
        %p736 = pneg %p279
        %p737 = pneg %p276
        %p738 = scmp.lt.s32.totalorder %s38, 1
        %s739 = scalar_select %p738, %s38, 1
        %s740 = smul.addr %s739, 2
        %s741 = smul.addr %s740, 8
        %s742 = scalar_lea.vmem %s11, %s741
        %p743 = pneg %p305
        %p744 = pneg %p302
        %p745 = pneg %p326
        %p746 = pneg %p323
        %p747 = pneg %p347
        %p748 = pneg %p344
        %p749 = pneg %p368
        %p750 = pneg %p365
        %p751 = pneg %p389
        %p752 = pneg %p386
        %p753 = pneg %p410
        %p754 = pneg %p407
        %p755 = pneg %p431
        %p756 = pneg %p428
        %p757 = pneg %p452
        %p758 = pneg %p449
        %p759 = pneg %p473
        %p760 = pneg %p470
        %p761 = pneg %p494
        %p762 = pneg %p491
        %p763 = pneg %p515
        %p764 = pneg %p512
        %p765 = pneg %p536
        %p766 = pneg %p533
        %p767 = pneg %p557
        %p768 = pneg %p554
        %p769 = pneg %p583
        %p770 = pneg %p580
        %s771 = sand.u32 %s570, 1
        %s772 = scalar_lea.sflag [#allocation3], %s771
        %s773 = sand.u32 %s570, 1
        %s774 = scalar_lea.vmem [#allocation2], %s773
        %p775 = scmp.lt.s32.totalorder %s38, 1
        %s776 = scalar_select %p775, %s38, 1
        %s777 = smul.addr %s776, 4
        %s778 = smul.addr %s777, 8
        %s779 = scalar_lea.vmem %s0, %s778
        %p780 = scmp.lt.s32.totalorder %s38, 1
        %s781 = scalar_select %p780, %s38, 1
        %s782 = smul.addr %s781, 10
        %s783 = smul.addr %s782, 8
        %s784 = scalar_lea.vmem %s1, %s783
        %p785 = scmp.lt.s32.totalorder %s38, 1
        %s786 = scalar_select %p785, %s38, 1
        %s787 = smul.addr %s786, 10
        %s788 = smul.addr %s787, 8
        %s789 = scalar_lea.vmem %s2, %s788
        %p790 = scmp.lt.s32.totalorder %s38, 1
        %s791 = scalar_select %p790, %s38, 1
        %s792 = smul.addr %s791, 2
        %s793 = smul.addr %s792, 8
        %s794 = scalar_lea.vmem %s11, %s793
        %v796 = vld [vmem:[%s779] sm:$0xff]
        %v797 = vld [vmem:[%s779 + $0x8] sm:$0x1]
        %v798 = vld [vmem:[%s779 + $0x10] sm:$0xff]
        %v799 = vld [vmem:[%s779 + $0x18] sm:$0x1]
        %v800 = vld [vmem:[%s784] sm:$0xff]
        %v801 = vld [vmem:[%s784 + $0x8] sm:$0xff]
        %v802 = vld [vmem:[%s784 + $0x10] sm:$0xff]
        %v803 = vld [vmem:[%s784 + $0x18] sm:$0xff]
        %v804 = vld [vmem:[%s784 + $0x20] sm:$0x1]
        %v805 = vld [vmem:[%s784 + $0x28] sm:$0xff]
        %v806 = vld [vmem:[%s784 + $0x30] sm:$0xff]
        %v807 = vld [vmem:[%s784 + $0x38] sm:$0xff]
        %v808 = vld [vmem:[%s784 + $0x40] sm:$0xff]
        %v809 = vld [vmem:[%s784 + $0x48] sm:$0x1]
        %v810 = vld [vmem:[%s789] sm:$0xff]
        %v811 = vld [vmem:[%s789 + $0x8] sm:$0xff]
        %v812 = vld [vmem:[%s789 + $0x10] sm:$0xff]
        %v813 = vld [vmem:[%s789 + $0x18] sm:$0xff]
        %v814 = vld [vmem:[%s789 + $0x20] sm:$0x1]
        %v815 = vld [vmem:[%s789 + $0x28] sm:$0xff]
        %v816 = vld [vmem:[%s789 + $0x30] sm:$0xff]
        %v817 = vld [vmem:[%s789 + $0x38] sm:$0xff]
        %v818 = vld [vmem:[%s789 + $0x40] sm:$0xff]
        %v819 = vld [vmem:[%s789 + $0x48] sm:$0x1]
        %v820 = vld [vmem:[%s3] sm:$0x1]
        %v821 = vld [vmem:[%s4] sm:$0x1]
        %vm822 = vcmask 64512
        %v823 = vsel %vm822, %v796, 0.0
        %824 = vadd.xlane.f32.xlu0 %v823
        %v825 = vpop.xlane.xlu0 %824
        %vm826 = vcmask 57344
        %v827 = vsel %vm826, %v797, 0.0
        %828 = vadd.xlane.f32.xlu0 %v827
        %v829 = vpop.xlane.xlu0 %828
        %v830 = vsel %vm822, %v798, 0.0
        %831 = vadd.xlane.f32.xlu0 %v830
        %v832 = vpop.xlane.xlu0 %831
        %v833 = vsel %vm826, %v799, 0.0
        %834 = vadd.xlane.f32.xlu0 %v833
        %v835 = vpop.xlane.xlu0 %834
        %v836 = vrcp.pop 8.0
        %v837 = vmul.f32 %v825, %v836
        %v838 = vmul.f32 %v829, %v836
        %v839 = vmul.f32 %v832, %v836
        %v840 = vmul.f32 %v835, %v836
        %v841 = vsub.f32 %v796, %v837
        %v842 = vsub.f32 %v797, %v838
        %v843 = vsub.f32 %v798, %v839
        %v844 = vsub.f32 %v799, %v840
        %v845 = vmul.f32 %v841, %v841
        %v846 = vmul.f32 %v842, %v842
        %v847 = vmul.f32 %v843, %v843
        %v848 = vmul.f32 %v844, %v844
        %v849 = vsel %vm822, %v845, 0.0
        %850 = vadd.xlane.f32.xlu0 %v849
        %v851 = vpop.xlane.xlu0 %850
        %v852 = vsel %vm826, %v846, 0.0
        %853 = vadd.xlane.f32.xlu0 %v852
        %v854 = vpop.xlane.xlu0 %853
        %v855 = vsel %vm822, %v847, 0.0
        %856 = vadd.xlane.f32.xlu0 %v855
        %v857 = vpop.xlane.xlu0 %856
        %v858 = vsel %vm826, %v848, 0.0
        %859 = vadd.xlane.f32.xlu0 %v858
        %v860 = vpop.xlane.xlu0 %859
        %v861 = vmul.f32 %v851, %v836
        %v862 = vmul.f32 %v854, %v836
        %v863 = vmul.f32 %v857, %v836
        %v864 = vmul.f32 %v860, %v836
        %v865 = vadd.f32 %v861, 1e-06
        %v866 = vadd.f32 %v862, 1e-06
        %v867 = vadd.f32 %v863, 1e-06
        %v868 = vadd.f32 %v864, 1e-06
        %v869 = vrsqrt.pop %v865
        %v870 = vrsqrt.pop %v866
        %v871 = vrsqrt.pop %v867
        %v872 = vrsqrt.pop %v868
        %v873 = vmul.f32 %v841, %v869
        %v874 = vmul.f32 %v842, %v870
        %v875 = vmul.f32 %v843, %v871
        %v876 = vmul.f32 %v844, %v872
        %v878 = vlaneseq
        %v879 = vshrl.u32 %v878, 7
        %v880 = vsub.s32 0, %v879
        %v881 = vrot.slane %v820, %v880
        %v883 = vmul.f32 %v873, %v881
        %v884 = vmul.f32 %v874, %v881
        %v885 = vmul.f32 %v875, %v881
        %v886 = vmul.f32 %v876, %v881
        %v888 = vlaneseq
        %v889 = vshrl.u32 %v888, 7
        %v890 = vsub.s32 0, %v889
        %v891 = vrot.slane %v821, %v890
        %v893 = vadd.f32 %v883, %v891
        %v894 = vadd.f32 %v884, %v891
        %v895 = vadd.f32 %v885, %v891
        %v896 = vadd.f32 %v886, %v891
        %v897 = vld [vmem:[%s5] sm:$0x1]
        %v898 = vld [vmem:[%s6] sm:$0x1]
        %v899 = vsel %vm822, %v800, 0.0
        %900 = vadd.xlane.f32.xlu0 %v899
        %v901 = vpop.xlane.xlu0 %900
        %v902 = vsel %vm822, %v801, 0.0
        %903 = vadd.xlane.f32.xlu0 %v902
        %v904 = vpop.xlane.xlu0 %903
        %v905 = vsel %vm822, %v802, 0.0
        %906 = vadd.xlane.f32.xlu0 %v905
        %v907 = vpop.xlane.xlu0 %906
        %v908 = vsel %vm822, %v803, 0.0
        %909 = vadd.xlane.f32.xlu0 %v908
        %v910 = vpop.xlane.xlu0 %909
        %v911 = vsel %vm826, %v804, 0.0
        %912 = vadd.xlane.f32.xlu0 %v911
        %v913 = vpop.xlane.xlu0 %912
        %v914 = vsel %vm822, %v805, 0.0
        %915 = vadd.xlane.f32.xlu0 %v914
        %v916 = vpop.xlane.xlu0 %915
        %v917 = vsel %vm822, %v806, 0.0
        %918 = vadd.xlane.f32.xlu0 %v917
        %v919 = vpop.xlane.xlu0 %918
        %v920 = vsel %vm822, %v807, 0.0
        %921 = vadd.xlane.f32.xlu0 %v920
        %v922 = vpop.xlane.xlu0 %921
        %v923 = vsel %vm822, %v808, 0.0
        %924 = vadd.xlane.f32.xlu0 %v923
        %v925 = vpop.xlane.xlu0 %924
        %v926 = vsel %vm826, %v809, 0.0
        %927 = vadd.xlane.f32.xlu0 %v926
        %v928 = vpop.xlane.xlu0 %927
        %v929 = vmul.f32 %v901, %v836
        %v930 = vmul.f32 %v904, %v836
        %v931 = vmul.f32 %v907, %v836
        %v932 = vmul.f32 %v910, %v836
        %v933 = vmul.f32 %v913, %v836
        %v934 = vmul.f32 %v916, %v836
        %v935 = vmul.f32 %v919, %v836
        %v936 = vmul.f32 %v922, %v836
        %v937 = vmul.f32 %v925, %v836
        %v938 = vmul.f32 %v928, %v836
        %v939 = vsub.f32 %v800, %v929
        %v940 = vsub.f32 %v801, %v930
        %v941 = vsub.f32 %v802, %v931
        %v942 = vsub.f32 %v803, %v932
        %v943 = vsub.f32 %v804, %v933
        %v944 = vsub.f32 %v805, %v934
        %v945 = vsub.f32 %v806, %v935
        %v946 = vsub.f32 %v807, %v936
        %v947 = vsub.f32 %v808, %v937
        %v948 = vsub.f32 %v809, %v938
        %v949 = vmul.f32 %v939, %v939
        %v950 = vmul.f32 %v940, %v940
        %v951 = vmul.f32 %v941, %v941
        %v952 = vmul.f32 %v942, %v942
        %v953 = vmul.f32 %v943, %v943
        %v954 = vmul.f32 %v944, %v944
        %v955 = vmul.f32 %v945, %v945
        %v956 = vmul.f32 %v946, %v946
        %v957 = vmul.f32 %v947, %v947
        %v958 = vmul.f32 %v948, %v948
        %v959 = vsel %vm822, %v949, 0.0
        %960 = vadd.xlane.f32.xlu0 %v959
        %v961 = vpop.xlane.xlu0 %960
        %v962 = vsel %vm822, %v950, 0.0
        %963 = vadd.xlane.f32.xlu0 %v962
        %v964 = vpop.xlane.xlu0 %963
        %v965 = vsel %vm822, %v951, 0.0
        %966 = vadd.xlane.f32.xlu0 %v965
        %v967 = vpop.xlane.xlu0 %966
        %v968 = vsel %vm822, %v952, 0.0
        %969 = vadd.xlane.f32.xlu0 %v968
        %v970 = vpop.xlane.xlu0 %969
        %v971 = vsel %vm826, %v953, 0.0
        %972 = vadd.xlane.f32.xlu0 %v971
        %v973 = vpop.xlane.xlu0 %972
        %v974 = vsel %vm822, %v954, 0.0
        %975 = vadd.xlane.f32.xlu0 %v974
        %v976 = vpop.xlane.xlu0 %975
        %v977 = vsel %vm822, %v955, 0.0
        %978 = vadd.xlane.f32.xlu0 %v977
        %v979 = vpop.xlane.xlu0 %978
        %v980 = vsel %vm822, %v956, 0.0
        %981 = vadd.xlane.f32.xlu0 %v980
        %v982 = vpop.xlane.xlu0 %981
        %v983 = vsel %vm822, %v957, 0.0
        %984 = vadd.xlane.f32.xlu0 %v983
        %v985 = vpop.xlane.xlu0 %984
        %v986 = vsel %vm826, %v958, 0.0
        %987 = vadd.xlane.f32.xlu0 %v986
        %v988 = vpop.xlane.xlu0 %987
        %v989 = vmul.f32 %v961, %v836
        %v990 = vmul.f32 %v964, %v836
        %v991 = vmul.f32 %v967, %v836
        %v992 = vmul.f32 %v970, %v836
        %v993 = vmul.f32 %v973, %v836
        %v994 = vmul.f32 %v976, %v836
        %v995 = vmul.f32 %v979, %v836
        %v996 = vmul.f32 %v982, %v836
        %v997 = vmul.f32 %v985, %v836
        %v998 = vmul.f32 %v988, %v836
        %v999 = vadd.f32 %v989, 1e-06
        %v1000 = vadd.f32 %v990, 1e-06
        %v1001 = vadd.f32 %v991, 1e-06
        %v1002 = vadd.f32 %v992, 1e-06
        %v1003 = vadd.f32 %v993, 1e-06
        %v1004 = vadd.f32 %v994, 1e-06
        %v1005 = vadd.f32 %v995, 1e-06
        %v1006 = vadd.f32 %v996, 1e-06
        %v1007 = vadd.f32 %v997, 1e-06
        %v1008 = vadd.f32 %v998, 1e-06
        %v1009 = vrsqrt.pop %v999
        %v1010 = vrsqrt.pop %v1000
        %v1011 = vrsqrt.pop %v1001
        %v1012 = vrsqrt.pop %v1002
        %v1013 = vrsqrt.pop %v1003
        %v1014 = vrsqrt.pop %v1004
        %v1015 = vrsqrt.pop %v1005
        %v1016 = vrsqrt.pop %v1006
        %v1017 = vrsqrt.pop %v1007
        %v1018 = vrsqrt.pop %v1008
        %v1019 = vmul.f32 %v939, %v1009
        %v1020 = vmul.f32 %v940, %v1010
        %v1021 = vmul.f32 %v941, %v1011
        %v1022 = vmul.f32 %v942, %v1012
        %v1023 = vmul.f32 %v943, %v1013
        %v1024 = vmul.f32 %v944, %v1014
        %v1025 = vmul.f32 %v945, %v1015
        %v1026 = vmul.f32 %v946, %v1016
        %v1027 = vmul.f32 %v947, %v1017
        %v1028 = vmul.f32 %v948, %v1018
        %v1030 = vlaneseq
        %v1031 = vshrl.u32 %v1030, 7
        %v1032 = vsub.s32 0, %v1031
        %v1033 = vrot.slane %v897, %v1032
        %v1035 = vmul.f32 %v1019, %v1033
        %v1036 = vmul.f32 %v1020, %v1033
        %v1037 = vmul.f32 %v1021, %v1033
        %v1038 = vmul.f32 %v1022, %v1033
        %v1039 = vmul.f32 %v1023, %v1033
        %v1040 = vmul.f32 %v1024, %v1033
        %v1041 = vmul.f32 %v1025, %v1033
        %v1042 = vmul.f32 %v1026, %v1033
        %v1043 = vmul.f32 %v1027, %v1033
        %v1044 = vmul.f32 %v1028, %v1033
        %v1046 = vlaneseq
        %v1047 = vshrl.u32 %v1046, 7
        %v1048 = vsub.s32 0, %v1047
        %v1049 = vrot.slane %v898, %v1048
        %v1051 = vadd.f32 %v1035, %v1049
        %v1052 = vadd.f32 %v1036, %v1049
        %v1053 = vadd.f32 %v1037, %v1049
        %v1054 = vadd.f32 %v1038, %v1049
        %v1055 = vadd.f32 %v1039, %v1049
        %v1056 = vadd.f32 %v1040, %v1049
        %v1057 = vadd.f32 %v1041, %v1049
        %v1058 = vadd.f32 %v1042, %v1049
        %v1059 = vadd.f32 %v1043, %v1049
        %v1060 = vadd.f32 %v1044, %v1049
        %v1061 = vld [vmem:[%s7] sm:$0x1]
        %v1062 = vld [vmem:[%s8] sm:$0x1]
        %v1063 = vsel %vm822, %v810, 0.0
        %1064 = vadd.xlane.f32.xlu0 %v1063
        %v1065 = vpop.xlane.xlu0 %1064
        %v1066 = vsel %vm822, %v811, 0.0
        %1067 = vadd.xlane.f32.xlu0 %v1066
        %v1068 = vpop.xlane.xlu0 %1067
        %v1069 = vsel %vm822, %v812, 0.0
        %1070 = vadd.xlane.f32.xlu0 %v1069
        %v1071 = vpop.xlane.xlu0 %1070
        %v1072 = vsel %vm822, %v813, 0.0
        %1073 = vadd.xlane.f32.xlu0 %v1072
        %v1074 = vpop.xlane.xlu0 %1073
        %v1075 = vsel %vm826, %v814, 0.0
        %1076 = vadd.xlane.f32.xlu0 %v1075
        %v1077 = vpop.xlane.xlu0 %1076
        %v1078 = vsel %vm822, %v815, 0.0
        %1079 = vadd.xlane.f32.xlu0 %v1078
        %v1080 = vpop.xlane.xlu0 %1079
        %v1081 = vsel %vm822, %v816, 0.0
        %1082 = vadd.xlane.f32.xlu0 %v1081
        %v1083 = vpop.xlane.xlu0 %1082
        %v1084 = vsel %vm822, %v817, 0.0
        %1085 = vadd.xlane.f32.xlu0 %v1084
        %v1086 = vpop.xlane.xlu0 %1085
        %v1087 = vsel %vm822, %v818, 0.0
        %1088 = vadd.xlane.f32.xlu0 %v1087
        %v1089 = vpop.xlane.xlu0 %1088
        %v1090 = vsel %vm826, %v819, 0.0
        %1091 = vadd.xlane.f32.xlu0 %v1090
        %v1092 = vpop.xlane.xlu0 %1091
        %v1093 = vmul.f32 %v1065, %v836
        %v1094 = vmul.f32 %v1068, %v836
        %v1095 = vmul.f32 %v1071, %v836
        %v1096 = vmul.f32 %v1074, %v836
        %v1097 = vmul.f32 %v1077, %v836
        %v1098 = vmul.f32 %v1080, %v836
        %v1099 = vmul.f32 %v1083, %v836
        %v1100 = vmul.f32 %v1086, %v836
        %v1101 = vmul.f32 %v1089, %v836
        %v1102 = vmul.f32 %v1092, %v836
        %v1103 = vsub.f32 %v810, %v1093
        %v1104 = vsub.f32 %v811, %v1094
        %v1105 = vsub.f32 %v812, %v1095
        %v1106 = vsub.f32 %v813, %v1096
        %v1107 = vsub.f32 %v814, %v1097
        %v1108 = vsub.f32 %v815, %v1098
        %v1109 = vsub.f32 %v816, %v1099
        %v1110 = vsub.f32 %v817, %v1100
        %v1111 = vsub.f32 %v818, %v1101
        %v1112 = vsub.f32 %v819, %v1102
        %v1113 = vmul.f32 %v1103, %v1103
        %v1114 = vmul.f32 %v1104, %v1104
        %v1115 = vmul.f32 %v1105, %v1105
        %v1116 = vmul.f32 %v1106, %v1106
        %v1117 = vmul.f32 %v1107, %v1107
        %v1118 = vmul.f32 %v1108, %v1108
        %v1119 = vmul.f32 %v1109, %v1109
        %v1120 = vmul.f32 %v1110, %v1110
        %v1121 = vmul.f32 %v1111, %v1111
        %v1122 = vmul.f32 %v1112, %v1112
        %v1123 = vsel %vm822, %v1113, 0.0
        %1124 = vadd.xlane.f32.xlu0 %v1123
        %v1125 = vpop.xlane.xlu0 %1124
        %v1126 = vsel %vm822, %v1114, 0.0
        %1127 = vadd.xlane.f32.xlu0 %v1126
        %v1128 = vpop.xlane.xlu0 %1127
        %v1129 = vsel %vm822, %v1115, 0.0
        %1130 = vadd.xlane.f32.xlu0 %v1129
        %v1131 = vpop.xlane.xlu0 %1130
        %v1132 = vsel %vm822, %v1116, 0.0
        %1133 = vadd.xlane.f32.xlu0 %v1132
        %v1134 = vpop.xlane.xlu0 %1133
        %v1135 = vsel %vm826, %v1117, 0.0
        %1136 = vadd.xlane.f32.xlu0 %v1135
        %v1137 = vpop.xlane.xlu0 %1136
        %v1138 = vsel %vm822, %v1118, 0.0
        %1139 = vadd.xlane.f32.xlu0 %v1138
        %v1140 = vpop.xlane.xlu0 %1139
        %v1141 = vsel %vm822, %v1119, 0.0
        %1142 = vadd.xlane.f32.xlu0 %v1141
        %v1143 = vpop.xlane.xlu0 %1142
        %v1144 = vsel %vm822, %v1120, 0.0
        %1145 = vadd.xlane.f32.xlu0 %v1144
        %v1146 = vpop.xlane.xlu0 %1145
        %v1147 = vsel %vm822, %v1121, 0.0
        %1148 = vadd.xlane.f32.xlu0 %v1147
        %v1149 = vpop.xlane.xlu0 %1148
        %v1150 = vsel %vm826, %v1122, 0.0
        %1151 = vadd.xlane.f32.xlu0 %v1150
        %v1152 = vpop.xlane.xlu0 %1151
        %v1153 = vmul.f32 %v1125, %v836
        %v1154 = vmul.f32 %v1128, %v836
        %v1155 = vmul.f32 %v1131, %v836
        %v1156 = vmul.f32 %v1134, %v836
        %v1157 = vmul.f32 %v1137, %v836
        %v1158 = vmul.f32 %v1140, %v836
        %v1159 = vmul.f32 %v1143, %v836
        %v1160 = vmul.f32 %v1146, %v836
        %v1161 = vmul.f32 %v1149, %v836
        %v1162 = vmul.f32 %v1152, %v836
        %v1163 = vadd.f32 %v1153, 1e-06
        %v1164 = vadd.f32 %v1154, 1e-06
        %v1165 = vadd.f32 %v1155, 1e-06
        %v1166 = vadd.f32 %v1156, 1e-06
        %v1167 = vadd.f32 %v1157, 1e-06
        %v1168 = vadd.f32 %v1158, 1e-06
        %v1169 = vadd.f32 %v1159, 1e-06
        %v1170 = vadd.f32 %v1160, 1e-06
        %v1171 = vadd.f32 %v1161, 1e-06
        %v1172 = vadd.f32 %v1162, 1e-06
        %v1173 = vrsqrt.pop %v1163
        %v1174 = vrsqrt.pop %v1164
        %v1175 = vrsqrt.pop %v1165
        %v1176 = vrsqrt.pop %v1166
        %v1177 = vrsqrt.pop %v1167
        %v1178 = vrsqrt.pop %v1168
        %v1179 = vrsqrt.pop %v1169
        %v1180 = vrsqrt.pop %v1170
        %v1181 = vrsqrt.pop %v1171
        %v1182 = vrsqrt.pop %v1172
        %v1183 = vmul.f32 %v1103, %v1173
        %v1184 = vmul.f32 %v1104, %v1174
        %v1185 = vmul.f32 %v1105, %v1175
        %v1186 = vmul.f32 %v1106, %v1176
        %v1187 = vmul.f32 %v1107, %v1177
        %v1188 = vmul.f32 %v1108, %v1178
        %v1189 = vmul.f32 %v1109, %v1179
        %v1190 = vmul.f32 %v1110, %v1180
        %v1191 = vmul.f32 %v1111, %v1181
        %v1192 = vmul.f32 %v1112, %v1182
        %v1194 = vlaneseq
        %v1195 = vshrl.u32 %v1194, 7
        %v1196 = vsub.s32 0, %v1195
        %v1197 = vrot.slane %v1061, %v1196
        %v1199 = vmul.f32 %v1183, %v1197
        %v1200 = vmul.f32 %v1184, %v1197
        %v1201 = vmul.f32 %v1185, %v1197
        %v1202 = vmul.f32 %v1186, %v1197
        %v1203 = vmul.f32 %v1187, %v1197
        %v1204 = vmul.f32 %v1188, %v1197
        %v1205 = vmul.f32 %v1189, %v1197
        %v1206 = vmul.f32 %v1190, %v1197
        %v1207 = vmul.f32 %v1191, %v1197
        %v1208 = vmul.f32 %v1192, %v1197
        %v1210 = vlaneseq
        %v1211 = vshrl.u32 %v1210, 7
        %v1212 = vsub.s32 0, %v1211
        %v1213 = vrot.slane %v1062, %v1212
        %v1215 = vadd.f32 %v1199, %v1213
        %v1216 = vadd.f32 %v1200, %v1213
        %v1217 = vadd.f32 %v1201, %v1213
        %v1218 = vadd.f32 %v1202, %v1213
        %v1219 = vadd.f32 %v1203, %v1213
        %v1220 = vadd.f32 %v1204, %v1213
        %v1221 = vadd.f32 %v1205, %v1213
        %v1222 = vadd.f32 %v1206, %v1213
        %v1223 = vadd.f32 %v1207, %v1213
        %v1224 = vadd.f32 %v1208, %v1213
        %v1225 = vmul.f32 %v893, 0.35355338
        %v1226 = vmul.f32 %v894, 0.35355338
        %v1227 = vmul.f32 %v895, 0.35355338
        %v1228 = vmul.f32 %v896, 0.35355338
        %v1229 = vpack.c.bf16 %v1226, %v1225
        %v1230 = vpack.c.bf16 %v1228, %v1227
        %v1231 = vpack.c.bf16 %v1052, %v1051
        %v1232 = vpack.c.bf16 %v1054, %v1053
        %v1233 = vpack.c.bf16 %v1055, %v1055
        %v1234 = vpack.c.bf16 %v1057, %v1056
        %v1235 = vpack.c.bf16 %v1059, %v1058
        %v1236 = vpack.c.bf16 %v1060, %v1060
        %v1238 = vsel %vm822, %v1229, 0
        %v1241 = vsel %vm822, %v1231, 0
        %v1244 = vsel %vm822, %v1232, 0
        %v1247 = vsel %vm822, %v1233, 0
        %1249 = vmatprep.subr.bf16.mxu0 0
        %1250 = vmatpush1.bf16.xpose.msra.mxu0 0
        %1251 = vmatprep.subr.bf16.mxu0 0
        %1252 = vmatpush1.bf16.xpose.msra.mxu0 0
        %1253 = vmatprep.subr.bf16.mxu0 0
        %1254 = vmatpush1.bf16.xpose.msra.mxu0 0
        %1255 = vmatprep.subr.bf16.mxu0 0
        %1256 = vmatpush1.bf16.xpose.msra.mxu0 0
        %1257 = vmatprep.subr.bf16.mxu0 0
        %1258 = vmatpush1.bf16.xpose.msra.mxu0 0
        %1259 = vmatprep.subr.bf16.mxu0 0
        %1260 = vmatpush1.bf16.xpose.msra.mxu0 %v1247
        %1261 = vmatprep.subr.bf16.mxu0 0
        %1262 = vmatpush1.bf16.xpose.msra.mxu0 %v1244
        %1263 = vmatprep.subr.bf16.mxu0 0
        %1264 = vmatpush1.bf16.xpose.msra.mxu0 %v1241
        %1265 = vmatprep.subr.bf16.mxu0 0
        %1266 = vmatpush2.bf16.xpose.msra.mxu0 0
        %1267 = vmatprep.subr.bf16.mxu0 0
        %1268 = vmatpush2.bf16.xpose.msra.mxu0 0
        %1269 = vmatprep.subr.bf16.mxu0 0
        %1270 = vmatpush2.bf16.xpose.msra.mxu0 0
        %1271 = vmatprep.subr.bf16.mxu0 0
        %1272 = vmatpush2.bf16.xpose.msra.mxu0 0
        %1273 = vmatprep.subr.bf16.mxu0 0
        %1274 = vmatpush2.bf16.xpose.msra.mxu0 0
        %1275 = vmatprep.subr.bf16.mxu0 0
        %1276 = vmatpush2.bf16.xpose.msra.mxu0 0
        %1277 = vmatprep.subr.bf16.mxu0 0
        %1278 = vmatpush2.bf16.xpose.msra.mxu0 0
        %1279 = vmatprep.subr.bf16.mxu0 0
        %1280 = vmatpush2.bf16.xpose.msra.mxu0 0
        %1281 = vmatprep.mubr.bf16.mxu0 0
        %1282 = vmatmul.mubr.bf16.gmra.mxu0 %v1238
        %v1283 = vpop.f32.mrf.mxu0
        %v1284 = vadd.f32 0.0, %v1283
        %v1285 = vpop.f32.mrf.mxu0
        %v1286 = vpop.f32.mrf.mxu0
        %v1287 = vadd.f32 0.0, %v1286
        %v1288 = vpop.f32.mrf.mxu0
        %1289 = vdwg.mxu0
        %v1291 = vsel %vm822, %v1230, 0
        %v1294 = vsel %vm822, %v1234, 0
        %v1297 = vsel %vm822, %v1235, 0
        %v1300 = vsel %vm822, %v1236, 0
        %1302 = vmatprep.subr.bf16.mxu0 0
        %1303 = vmatpush1.bf16.xpose.msra.mxu0 0
        %1304 = vmatprep.subr.bf16.mxu0 0
        %1305 = vmatpush1.bf16.xpose.msra.mxu0 0
        %1306 = vmatprep.subr.bf16.mxu0 0
        %1307 = vmatpush1.bf16.xpose.msra.mxu0 0
        %1308 = vmatprep.subr.bf16.mxu0 0
        %1309 = vmatpush1.bf16.xpose.msra.mxu0 0
        %1310 = vmatprep.subr.bf16.mxu0 0
        %1311 = vmatpush1.bf16.xpose.msra.mxu0 0
        %1312 = vmatprep.subr.bf16.mxu0 0
        %1313 = vmatpush1.bf16.xpose.msra.mxu0 %v1300
        %1314 = vmatprep.subr.bf16.mxu0 0
        %1315 = vmatpush1.bf16.xpose.msra.mxu0 %v1297
        %1316 = vmatprep.subr.bf16.mxu0 0
        %1317 = vmatpush1.bf16.xpose.msra.mxu0 %v1294
        %1318 = vmatprep.subr.bf16.mxu0 0
        %1319 = vmatpush2.bf16.xpose.msra.mxu0 0
        %1320 = vmatprep.subr.bf16.mxu0 0
        %1321 = vmatpush2.bf16.xpose.msra.mxu0 0
        %1322 = vmatprep.subr.bf16.mxu0 0
        %1323 = vmatpush2.bf16.xpose.msra.mxu0 0
        %1324 = vmatprep.subr.bf16.mxu0 0
        %1325 = vmatpush2.bf16.xpose.msra.mxu0 0
        %1326 = vmatprep.subr.bf16.mxu0 0
        %1327 = vmatpush2.bf16.xpose.msra.mxu0 0
        %1328 = vmatprep.subr.bf16.mxu0 0
        %1329 = vmatpush2.bf16.xpose.msra.mxu0 0
        %1330 = vmatprep.subr.bf16.mxu0 0
        %1331 = vmatpush2.bf16.xpose.msra.mxu0 0
        %1332 = vmatprep.subr.bf16.mxu0 0
        %1333 = vmatpush2.bf16.xpose.msra.mxu0 0
        %1334 = vmatprep.mubr.bf16.mxu0 0
        %1335 = vmatmul.mubr.bf16.gmra.mxu0 %v1291
        %v1336 = vpop.f32.mrf.mxu0
        %v1337 = vadd.f32 0.0, %v1336
        %v1338 = vpop.f32.mrf.mxu0
        %v1339 = vpop.f32.mrf.mxu0
        %v1340 = vadd.f32 0.0, %v1339
        %v1341 = vpop.f32.mrf.mxu0
        %1342 = vdwg.mxu0
        %vm1343 = vcmask 269312
        %v1344 = vsel %vm1343, %v1284, -inf
        %1345 = vmax.xlane.f32.xlu0 %v1344
        %v1346 = vpop.xlane.xlu0 %1345
        %vm1347 = vcmask 262144
        %v1348 = vsel %vm1347, %v1287, -inf
        %1349 = vmax.xlane.f32.xlu0 %v1348
        %v1350 = vpop.xlane.xlu0 %1349
        %v1351 = vsel %vm1343, %v1337, -inf
        %1352 = vmax.xlane.f32.xlu0 %v1351
        %v1353 = vpop.xlane.xlu0 %1352
        %v1354 = vsel %vm1347, %v1340, -inf
        %1355 = vmax.xlane.f32.xlu0 %v1354
        %v1356 = vpop.xlane.xlu0 %1355
        %v1357 = vsub.f32 %v1284, %v1346
        %v1358 = vsub.f32 %v1287, %v1350
        %v1359 = vsub.f32 %v1337, %v1353
        %v1360 = vsub.f32 %v1340, %v1356
        %v1361 = vmul.f32 %v1357, 1.442695
        %v1362 = vpow.pop %v1361
        %v1363 = vmul.f32 %v1358, 1.442695
        %v1364 = vpow.pop %v1363
        %v1365 = vmul.f32 %v1359, 1.442695
        %v1366 = vpow.pop %v1365
        %v1367 = vmul.f32 %v1360, 1.442695
        %v1368 = vpow.pop %v1367
        %v1369 = vsel %vm1343, %v1362, 0.0
        %1370 = vadd.xlane.f32.xlu0 %v1369
        %v1371 = vpop.xlane.xlu0 %1370
        %v1372 = vsel %vm1347, %v1364, 0.0
        %1373 = vadd.xlane.f32.xlu0 %v1372
        %v1374 = vpop.xlane.xlu0 %1373
        %v1375 = vsel %vm1343, %v1366, 0.0
        %1376 = vadd.xlane.f32.xlu0 %v1375
        %v1377 = vpop.xlane.xlu0 %1376
        %v1378 = vsel %vm1347, %v1368, 0.0
        %1379 = vadd.xlane.f32.xlu0 %v1378
        %v1380 = vpop.xlane.xlu0 %1379
        %v1381 = vrcp.pop %v1371
        %v1382 = vrcp.pop %v1374
        %v1383 = vrcp.pop %v1377
        %v1384 = vrcp.pop %v1380
        %v1385 = vmul.f32 %v1362, %v1381
        %v1386 = vmul.f32 %v1364, %v1382
        %v1387 = vmul.f32 %v1366, %v1383
        %v1388 = vmul.f32 %v1368, %v1384
        %v1389 = vpack.c.bf16 %v1386, %v1385
        %v1390 = vpack.c.bf16 %v1388, %v1387
        %v1391 = vpack.c.bf16 %v1216, %v1215
        %v1392 = vpack.c.bf16 %v1218, %v1217
        %v1393 = vpack.c.bf16 %v1219, %v1219
        %v1394 = vpack.c.bf16 %v1221, %v1220
        %v1395 = vpack.c.bf16 %v1223, %v1222
        %v1396 = vpack.c.bf16 %v1224, %v1224
        %v1398 = vsel %vm1343, %v1389, 0
        %vm1400 = vcmask 1040384
        %v1401 = vsel 0, 4294967295, 65535
        %v1402 = vsel %vm1400, %v1401, 0
        %v1404 = vand.u32 %v1393, %v1402
        %1406 = vmatprep.subr.bf16.mxu0 0
        %1407 = vmatpush1.bf16.msra.mxu0 0
        %1408 = vmatprep.subr.bf16.mxu0 0
        %1409 = vmatpush1.bf16.msra.mxu0 0
        %1410 = vmatprep.subr.bf16.mxu0 0
        %1411 = vmatpush1.bf16.msra.mxu0 0
        %1412 = vmatprep.subr.bf16.mxu0 0
        %1413 = vmatpush1.bf16.msra.mxu0 0
        %1414 = vmatprep.subr.bf16.mxu0 0
        %1415 = vmatpush1.bf16.msra.mxu0 0
        %1416 = vmatprep.subr.bf16.mxu0 0
        %1417 = vmatpush1.bf16.msra.mxu0 %v1404
        %1418 = vmatprep.subr.bf16.mxu0 0
        %1419 = vmatpush1.bf16.msra.mxu0 %v1392
        %1420 = vmatprep.subr.bf16.mxu0 0
        %1421 = vmatpush1.bf16.msra.mxu0 %v1391
        %1422 = vmatprep.subr.bf16.mxu0 0
        %1423 = vmatpush2.bf16.msra.mxu0 0
        %1424 = vmatprep.subr.bf16.mxu0 0
        %1425 = vmatpush2.bf16.msra.mxu0 0
        %1426 = vmatprep.subr.bf16.mxu0 0
        %1427 = vmatpush2.bf16.msra.mxu0 0
        %1428 = vmatprep.subr.bf16.mxu0 0
        %1429 = vmatpush2.bf16.msra.mxu0 0
        %1430 = vmatprep.subr.bf16.mxu0 0
        %1431 = vmatpush2.bf16.msra.mxu0 0
        %1432 = vmatprep.subr.bf16.mxu0 0
        %1433 = vmatpush2.bf16.msra.mxu0 0
        %1434 = vmatprep.subr.bf16.mxu0 0
        %1435 = vmatpush2.bf16.msra.mxu0 0
        %1436 = vmatprep.subr.bf16.mxu0 0
        %1437 = vmatpush2.bf16.msra.mxu0 0
        %1438 = vmatprep.mubr.bf16.mxu0 0
        %1439 = vmatmul.mubr.bf16.gmra.mxu0 %v1398
        %v1440 = vpop.f32.mrf.mxu0
        %v1441 = vadd.f32 %v893, %v1440
        %v1442 = vpop.f32.mrf.mxu0
        %v1443 = vpop.f32.mrf.mxu0
        %v1444 = vadd.f32 %v894, %v1443
        %v1445 = vpop.f32.mrf.mxu0
        %1446 = vdwg.mxu0
        %v1448 = vsel %vm1343, %v1390, 0
        %v1451 = vand.u32 %v1396, %v1402
        %1453 = vmatprep.subr.bf16.mxu0 0
        %1454 = vmatpush1.bf16.msra.mxu0 0
        %1455 = vmatprep.subr.bf16.mxu0 0
        %1456 = vmatpush1.bf16.msra.mxu0 0
        %1457 = vmatprep.subr.bf16.mxu0 0
        %1458 = vmatpush1.bf16.msra.mxu0 0
        %1459 = vmatprep.subr.bf16.mxu0 0
        %1460 = vmatpush1.bf16.msra.mxu0 0
        %1461 = vmatprep.subr.bf16.mxu0 0
        %1462 = vmatpush1.bf16.msra.mxu0 0
        %1463 = vmatprep.subr.bf16.mxu0 0
        %1464 = vmatpush1.bf16.msra.mxu0 %v1451
        %1465 = vmatprep.subr.bf16.mxu0 0
        %1466 = vmatpush1.bf16.msra.mxu0 %v1395
        %1467 = vmatprep.subr.bf16.mxu0 0
        %1468 = vmatpush1.bf16.msra.mxu0 %v1394
        %1469 = vmatprep.subr.bf16.mxu0 0
        %1470 = vmatpush2.bf16.msra.mxu0 0
        %1471 = vmatprep.subr.bf16.mxu0 0
        %1472 = vmatpush2.bf16.msra.mxu0 0
        %1473 = vmatprep.subr.bf16.mxu0 0
        %1474 = vmatpush2.bf16.msra.mxu0 0
        %1475 = vmatprep.subr.bf16.mxu0 0
        %1476 = vmatpush2.bf16.msra.mxu0 0
        %1477 = vmatprep.subr.bf16.mxu0 0
        %1478 = vmatpush2.bf16.msra.mxu0 0
        %1479 = vmatprep.subr.bf16.mxu0 0
        %1480 = vmatpush2.bf16.msra.mxu0 0
        %1481 = vmatprep.subr.bf16.mxu0 0
        %1482 = vmatpush2.bf16.msra.mxu0 0
        %1483 = vmatprep.subr.bf16.mxu0 0
        %1484 = vmatpush2.bf16.msra.mxu0 0
        %1485 = vmatprep.mubr.bf16.mxu0 0
        %1486 = vmatmul.mubr.bf16.gmra.mxu0 %v1448
        %v1487 = vpop.f32.mrf.mxu0
        %v1488 = vadd.f32 %v895, %v1487
        %v1489 = vpop.f32.mrf.mxu0
        %v1490 = vpop.f32.mrf.mxu0
        %v1491 = vadd.f32 %v896, %v1490
        %v1492 = vpop.f32.mrf.mxu0
        %1493 = vdwg.mxu0
        %v1494 = vpack.c.bf16 %v1444, %v1441
        %v1495 = vld [vmem:[%s9] sm:$0xf]
        %v1496 = vpack.c.bf16 %v1491, %v1488
        %s1497 = scalar_lea.vmem %s9, 4
        %v1498 = vld [vmem:[%s1497] sm:$0xf]
        %v1500 = vsel %vm822, %v1496, 0
        %vm1502 = vcmask 1043456
        %v1504 = vsel %vm1502, %v1498, 0
        %1506 = vmatprep.subr.bf16.mxu0 0
        %1507 = vmatpush1.bf16.msra.mxu0 0
        %1508 = vmatprep.subr.bf16.mxu0 0
        %1509 = vmatpush1.bf16.msra.mxu0 0
        %1510 = vmatprep.subr.bf16.mxu0 0
        %1511 = vmatpush1.bf16.msra.mxu0 0
        %1512 = vmatprep.subr.bf16.mxu0 0
        %1513 = vmatpush1.bf16.msra.mxu0 0
        %1514 = vmatprep.subr.bf16.mxu0 0
        %1515 = vmatpush1.bf16.msra.mxu0 0
        %1516 = vmatprep.subr.bf16.mxu0 0
        %1517 = vmatpush1.bf16.msra.mxu0 0
        %1518 = vmatprep.subr.bf16.mxu0 0
        %1519 = vmatpush1.bf16.msra.mxu0 0
        %1520 = vmatprep.subr.bf16.mxu0 0
        %1521 = vmatpush1.bf16.msra.mxu0 %v1504
        %1522 = vmatprep.subr.bf16.mxu0 0
        %1523 = vmatpush2.bf16.msra.mxu0 0
        %1524 = vmatprep.subr.bf16.mxu0 0
        %1525 = vmatpush2.bf16.msra.mxu0 0
        %1526 = vmatprep.subr.bf16.mxu0 0
        %1527 = vmatpush2.bf16.msra.mxu0 0
        %1528 = vmatprep.subr.bf16.mxu0 0
        %1529 = vmatpush2.bf16.msra.mxu0 0
        %1530 = vmatprep.subr.bf16.mxu0 0
        %1531 = vmatpush2.bf16.msra.mxu0 0
        %1532 = vmatprep.subr.bf16.mxu0 0
        %1533 = vmatpush2.bf16.msra.mxu0 0
        %1534 = vmatprep.subr.bf16.mxu0 0
        %1535 = vmatpush2.bf16.msra.mxu0 0
        %1536 = vmatprep.subr.bf16.mxu0 0
        %1537 = vmatpush2.bf16.msra.mxu0 0
        %1538 = vmatprep.mubr.bf16.mxu0 0
        %1539 = vmatmul.mubr.bf16.gmra.mxu0 %v1500
        %v1540 = vpop.f32.mrf.mxu0
        %v1541 = vadd.f32 0.0, %v1540
        %v1542 = vpop.f32.mrf.mxu0
        %v1543 = vpop.f32.mrf.mxu0
        %v1544 = vadd.f32 0.0, %v1543
        %v1545 = vpop.f32.mrf.mxu0
        %1546 = vdwg.mxu0
        %v1548 = vsel %vm822, %v1494, 0
        %v1551 = vsel %vm1502, %v1495, 0
        %1553 = vmatprep.subr.bf16.mxu0 0
        %1554 = vmatpush1.bf16.msra.mxu0 0
        %1555 = vmatprep.subr.bf16.mxu0 0
        %1556 = vmatpush1.bf16.msra.mxu0 0
        %1557 = vmatprep.subr.bf16.mxu0 0
        %1558 = vmatpush1.bf16.msra.mxu0 0
        %1559 = vmatprep.subr.bf16.mxu0 0
        %1560 = vmatpush1.bf16.msra.mxu0 0
        %1561 = vmatprep.subr.bf16.mxu0 0
        %1562 = vmatpush1.bf16.msra.mxu0 0
        %1563 = vmatprep.subr.bf16.mxu0 0
        %1564 = vmatpush1.bf16.msra.mxu0 0
        %1565 = vmatprep.subr.bf16.mxu0 0
        %1566 = vmatpush1.bf16.msra.mxu0 0
        %1567 = vmatprep.subr.bf16.mxu0 0
        %1568 = vmatpush1.bf16.msra.mxu0 %v1551
        %1569 = vmatprep.subr.bf16.mxu0 0
        %1570 = vmatpush2.bf16.msra.mxu0 0
        %1571 = vmatprep.subr.bf16.mxu0 0
        %1572 = vmatpush2.bf16.msra.mxu0 0
        %1573 = vmatprep.subr.bf16.mxu0 0
        %1574 = vmatpush2.bf16.msra.mxu0 0
        %1575 = vmatprep.subr.bf16.mxu0 0
        %1576 = vmatpush2.bf16.msra.mxu0 0
        %1577 = vmatprep.subr.bf16.mxu0 0
        %1578 = vmatpush2.bf16.msra.mxu0 0
        %1579 = vmatprep.subr.bf16.mxu0 0
        %1580 = vmatpush2.bf16.msra.mxu0 0
        %1581 = vmatprep.subr.bf16.mxu0 0
        %1582 = vmatpush2.bf16.msra.mxu0 0
        %1583 = vmatprep.subr.bf16.mxu0 0
        %1584 = vmatpush2.bf16.msra.mxu0 0
        %1585 = vmatprep.mubr.bf16.mxu0 0
        %1586 = vmatmul.mubr.bf16.gmra.mxu0 %v1548
        %v1587 = vpop.f32.mrf.mxu0
        %v1588 = vadd.f32 %v1541, %v1587
        %v1589 = vpop.f32.mrf.mxu0
        %v1590 = vpop.f32.mrf.mxu0
        %v1591 = vadd.f32 %v1544, %v1590
        %v1592 = vpop.f32.mrf.mxu0
        %1593 = vdwg.mxu0
        %v1594 = vld [vmem:[%s10] sm:$0x1]
        %v1596 = vlaneseq
        %v1597 = vshrl.u32 %v1596, 7
        %v1598 = vsub.s32 0, %v1597
        %v1599 = vrot.slane %v1594, %v1598
        %v1601 = vadd.f32 %v1588, %v1599
        %v1602 = vadd.f32 %v1591, %v1599
        %v1603 = vld [vmem:[%s794] sm:$0xff]
        %v1604 = vld [vmem:[%s794 + $0x8] sm:$0x1]
        %v1605 = vadd.f32 %v1601, %v1603
        %v1606 = vadd.f32 %v1602, %v1604
        %v1607 = vld [vmem:[%s12] sm:$0x1]
        %v1608 = vld [vmem:[%s13] sm:$0x1]
        %vm1609 = vcmask 130048
        %v1610 = vsel %vm1609, %v1605, 0.0
        %1611 = vadd.xlane.f32.xlu0 %v1610
        %v1612 = vpop.xlane.xlu0 %1611
        %vm1613 = vcmask 122880
        %v1614 = vsel %vm1613, %v1606, 0.0
        %1615 = vadd.xlane.f32.xlu0 %v1614
        %v1616 = vpop.xlane.xlu0 %1615
        %v1617 = vrcp.pop 16.0
        %v1618 = vmul.f32 %v1612, %v1617
        %v1619 = vmul.f32 %v1616, %v1617
        %v1620 = vsub.f32 %v1605, %v1618
        %v1621 = vsub.f32 %v1606, %v1619
        %v1622 = vmul.f32 %v1620, %v1620
        %v1623 = vmul.f32 %v1621, %v1621
        %v1624 = vsel %vm1609, %v1622, 0.0
        %1625 = vadd.xlane.f32.xlu0 %v1624
        %v1626 = vpop.xlane.xlu0 %1625
        %v1627 = vsel %vm1613, %v1623, 0.0
        %1628 = vadd.xlane.f32.xlu0 %v1627
        %v1629 = vpop.xlane.xlu0 %1628
        %v1630 = vmul.f32 %v1626, %v1617
        %v1631 = vmul.f32 %v1629, %v1617
        %v1632 = vadd.f32 %v1630, 1e-06
        %v1633 = vadd.f32 %v1631, 1e-06
        %v1634 = vrsqrt.pop %v1632
        %v1635 = vrsqrt.pop %v1633
        %v1636 = vmul.f32 %v1620, %v1634
        %v1637 = vmul.f32 %v1621, %v1635
        %v1639 = vlaneseq
        %v1640 = vshrl.u32 %v1639, 7
        %v1641 = vsub.s32 0, %v1640
        %v1642 = vrot.slane %v1607, %v1641
        %v1644 = vmul.f32 %v1636, %v1642
        %v1645 = vmul.f32 %v1637, %v1642
        %v1647 = vlaneseq
        %v1648 = vshrl.u32 %v1647, 7
        %v1649 = vsub.s32 0, %v1648
        %v1650 = vrot.slane %v1608, %v1649
        %v1652 = vadd.f32 %v1644, %v1650
        %v1653 = vadd.f32 %v1645, %v1650
        %v1654 = vpack.c.bf16 %v1653, %v1652
        %v1655 = vld [vmem:[%s14] sm:$0xf]
        %v1656 = vld [vmem:[%s14 + $0x4] sm:$0xf]
        %v1657 = vld [vmem:[%s15] sm:$0x1]
        %v1659 = vlaneseq
        %v1660 = vshrl.u32 %v1659, 7
        %v1661 = vsub.s32 0, %v1660
        %v1662 = vrot.slane %v1657, %v1661
        %v1666 = vunpack.c.l.b16 %v1655
        %v1667 = vunpack.c.l.b16 %v1656
        %v1668 = vpack.c.b16 %v1667, %v1666
        %v1671 = vsel %vm1609, %v1654, 0
        %1673 = vmatprep.subr.bf16.mxu0 0
        %1674 = vmatpush1.bf16.msra.mxu0 0
        %1675 = vmatprep.subr.bf16.mxu0 0
        %1676 = vmatpush1.bf16.msra.mxu0 0
        %1677 = vmatprep.subr.bf16.mxu0 0
        %1678 = vmatpush1.bf16.msra.mxu0 0
        %1679 = vmatprep.subr.bf16.mxu0 0
        %1680 = vmatpush1.bf16.msra.mxu0 0
        %1681 = vmatprep.subr.bf16.mxu0 0
        %1682 = vmatpush1.bf16.msra.mxu0 0
        %1683 = vmatprep.subr.bf16.mxu0 0
        %1684 = vmatpush1.bf16.msra.mxu0 0
        %1685 = vmatprep.subr.bf16.mxu0 0
        %1686 = vmatpush1.bf16.msra.mxu0 0
        %1687 = vmatprep.subr.bf16.mxu0 0
        %1688 = vmatpush1.bf16.msra.mxu0 %v1668
        %1689 = vmatprep.subr.bf16.mxu0 0
        %1690 = vmatpush2.bf16.msra.mxu0 0
        %1691 = vmatprep.subr.bf16.mxu0 0
        %1692 = vmatpush2.bf16.msra.mxu0 0
        %1693 = vmatprep.subr.bf16.mxu0 0
        %1694 = vmatpush2.bf16.msra.mxu0 0
        %1695 = vmatprep.subr.bf16.mxu0 0
        %1696 = vmatpush2.bf16.msra.mxu0 0
        %1697 = vmatprep.subr.bf16.mxu0 0
        %1698 = vmatpush2.bf16.msra.mxu0 0
        %1699 = vmatprep.subr.bf16.mxu0 0
        %1700 = vmatpush2.bf16.msra.mxu0 0
        %1701 = vmatprep.subr.bf16.mxu0 0
        %1702 = vmatpush2.bf16.msra.mxu0 0
        %1703 = vmatprep.subr.bf16.mxu0 0
        %1704 = vmatpush2.bf16.msra.mxu0 0
        %1705 = vmatprep.mubr.bf16.mxu0 0
        %1706 = vmatmul.mubr.bf16.gmra.mxu0 %v1671
        %v1707 = vpop.f32.mrf.mxu0
        %v1708 = vadd.f32 %v1662, %v1707
        %v1709 = vpop.f32.mrf.mxu0
        %v1710 = vpop.f32.mrf.mxu0
        %v1711 = vadd.f32 %v1662, %v1710
        %v1712 = vpop.f32.mrf.mxu0
        %1713 = vdwg.mxu0
        %v1714 = vmul.f32 %v1708, 0.5
        %v1715 = vmul.f32 %v1711, 0.5
        %v1716 = vmul.f32 %v1708, 0.70710677
        %v1717 = vmul.f32 %v1711, 0.70710677
        %v1718 = vand.u32 2147483647, %v1716
        %v1719 = vand.u32 2147483647, %v1717
        %v1720 = vmul.f32 %v1718, 0.3275911
        %v1721 = vmul.f32 %v1719, 0.3275911
        %v1722 = vadd.f32 %v1720, 1.0
        %v1723 = vadd.f32 %v1721, 1.0
        %v1724 = vrcp.pop %v1722
        %v1725 = vrcp.pop %v1723
        %v1726 = vmul.f32 %v1724, 1.0614054
        %v1727 = vmul.f32 %v1725, 1.0614054
        %v1728 = vadd.f32 %v1726, -1.4531521
        %v1729 = vadd.f32 %v1727, -1.4531521
        %v1730 = vmul.f32 %v1728, %v1724
        %v1731 = vmul.f32 %v1729, %v1725
        %v1732 = vadd.f32 %v1730, 1.4214138
        %v1733 = vadd.f32 %v1731, 1.4214138
        %v1734 = vmul.f32 %v1732, %v1724
        %v1735 = vmul.f32 %v1733, %v1725
        %v1736 = vadd.f32 %v1734, -0.28449672
        %v1737 = vadd.f32 %v1735, -0.28449672
        %v1738 = vmul.f32 %v1736, %v1724
        %v1739 = vmul.f32 %v1737, %v1725
        %v1740 = vadd.f32 %v1738, 0.2548296
        %v1741 = vadd.f32 %v1739, 0.2548296
        %v1742 = vmul.f32 %v1740, %v1724
        %v1743 = vmul.f32 %v1741, %v1725
        %v1744 = vsub.f32 0.0, %v1718
        %v1745 = vsub.f32 0.0, %v1719
        %v1746 = vmul.f32 %v1744, %v1718
        %v1747 = vmul.f32 %v1745, %v1719
        %v1748 = vmul.f32 %v1746, 1.442695
        %v1749 = vpow.pop %v1748
        %v1750 = vmul.f32 %v1747, 1.442695
        %v1751 = vpow.pop %v1750
        %v1752 = vmul.f32 %v1742, %v1749
        %v1753 = vmul.f32 %v1743, %v1751
        %v1754 = vsub.f32 1.0, %v1752
        %v1755 = vsub.f32 1.0, %v1753
        %vm1756 = vcmp.lt.f32.partialorder %v1716, 0.0
        %vm1757 = vcmp.lt.f32.partialorder %v1717, 0.0
        %v1758 = vsub.f32 0.0, %v1754
        %v1759 = vsub.f32 0.0, %v1755
        %v1760 = vsel %vm1756, %v1758, %v1754
        %v1761 = vsel %vm1757, %v1759, %v1755
        %v1762 = vadd.f32 %v1760, 1.0
        %v1763 = vadd.f32 %v1761, 1.0
        %v1764 = vmul.f32 %v1714, %v1762
        %v1765 = vmul.f32 %v1715, %v1763
        %v1766 = vpack.c.bf16 %v1765, %v1764
        %v1767 = vld [vmem:[%s16] sm:$0xf]
        %v1768 = vld [vmem:[%s16 + $0x4] sm:$0xf]
        %v1769 = vld [vmem:[%s16 + $0x8] sm:$0xf]
        %v1770 = vld [vmem:[%s16 + $0xc] sm:$0xf]
        %v1771 = vld [vmem:[%s16 + $0x10] sm:$0xf]
        %v1772 = vld [vmem:[%s16 + $0x14] sm:$0xf]
        %v1773 = vld [vmem:[%s16 + $0x18] sm:$0xf]
        %v1774 = vld [vmem:[%s16 + $0x1c] sm:$0xf]
        %v1775 = vld [vmem:[%s17] sm:$0x1]
        %v1777 = vlaneseq
        %v1778 = vshrl.u32 %v1777, 7
        %v1779 = vsub.s32 0, %v1778
        %v1780 = vrot.slane %v1775, %v1779
        %v1790 = vunpack.c.l.b16 %v1767
        %v1791 = vunpack.c.l.b16 %v1768
        %v1792 = vunpack.c.l.b16 %v1769
        %v1793 = vunpack.c.l.b16 %v1770
        %v1794 = vunpack.c.l.b16 %v1771
        %v1795 = vunpack.c.l.b16 %v1772
        %v1796 = vunpack.c.l.b16 %v1773
        %v1797 = vunpack.c.l.b16 %v1774
        %v1798 = vpack.c.b16 %v1791, %v1790
        %v1799 = vpack.c.b16 %v1793, %v1792
        %v1800 = vpack.c.b16 %v1795, %v1794
        %v1801 = vpack.c.b16 %v1797, %v1796
        %vm1806 = vcmask 523264
        %v1808 = vsel %vm1806, %v1766, 0
        %1810 = vmatprep.subr.bf16.mxu0 0
        %1811 = vmatpush1.bf16.msra.mxu0 0
        %1812 = vmatprep.subr.bf16.mxu0 0
        %1813 = vmatpush1.bf16.msra.mxu0 0
        %1814 = vmatprep.subr.bf16.mxu0 0
        %1815 = vmatpush1.bf16.msra.mxu0 0
        %1816 = vmatprep.subr.bf16.mxu0 0
        %1817 = vmatpush1.bf16.msra.mxu0 0
        %1818 = vmatprep.subr.bf16.mxu0 0
        %1819 = vmatpush1.bf16.msra.mxu0 %v1801
        %1820 = vmatprep.subr.bf16.mxu0 0
        %1821 = vmatpush1.bf16.msra.mxu0 %v1800
        %1822 = vmatprep.subr.bf16.mxu0 0
        %1823 = vmatpush1.bf16.msra.mxu0 %v1799
        %1824 = vmatprep.subr.bf16.mxu0 0
        %1825 = vmatpush1.bf16.msra.mxu0 %v1798
        %1826 = vmatprep.subr.bf16.mxu0 0
        %1827 = vmatpush2.bf16.msra.mxu0 0
        %1828 = vmatprep.subr.bf16.mxu0 0
        %1829 = vmatpush2.bf16.msra.mxu0 0
        %1830 = vmatprep.subr.bf16.mxu0 0
        %1831 = vmatpush2.bf16.msra.mxu0 0
        %1832 = vmatprep.subr.bf16.mxu0 0
        %1833 = vmatpush2.bf16.msra.mxu0 0
        %1834 = vmatprep.subr.bf16.mxu0 0
        %1835 = vmatpush2.bf16.msra.mxu0 0
        %1836 = vmatprep.subr.bf16.mxu0 0
        %1837 = vmatpush2.bf16.msra.mxu0 0
        %1838 = vmatprep.subr.bf16.mxu0 0
        %1839 = vmatpush2.bf16.msra.mxu0 0
        %1840 = vmatprep.subr.bf16.mxu0 0
        %1841 = vmatpush2.bf16.msra.mxu0 0
        %1842 = vmatprep.mubr.bf16.mxu0 0
        %1843 = vmatmul.mubr.bf16.gmra.mxu0 %v1808
        %v1844 = vpop.f32.mrf.mxu0
        %v1845 = vadd.f32 %v1780, %v1844
        %v1846 = vpop.f32.mrf.mxu0
        %v1847 = vpop.f32.mrf.mxu0
        %v1848 = vpop.f32.mrf.mxu0
        %1849 = vdwg.mxu0
        %v1850 = vld [vmem:[%s18] sm:$0xf]
        %v1851 = vld [vmem:[%s18 + $0x4] sm:$0xf]
        %v1852 = vld [vmem:[%s19] sm:$0x1]
        %v1854 = vlaneseq
        %v1855 = vshrl.u32 %v1854, 7
        %v1856 = vsub.s32 0, %v1855
        %v1857 = vrot.slane %v1852, %v1856
        %v1861 = vunpack.c.l.b16 %v1850
        %v1862 = vunpack.c.l.b16 %v1851
        %v1863 = vpack.c.b16 %v1862, %v1861
        %1865 = vmatprep.subr.bf16.mxu0 0
        %1866 = vmatpush1.bf16.msra.mxu0 0
        %1867 = vmatprep.subr.bf16.mxu0 0
        %1868 = vmatpush1.bf16.msra.mxu0 0
        %1869 = vmatprep.subr.bf16.mxu0 0
        %1870 = vmatpush1.bf16.msra.mxu0 0
        %1871 = vmatprep.subr.bf16.mxu0 0
        %1872 = vmatpush1.bf16.msra.mxu0 0
        %1873 = vmatprep.subr.bf16.mxu0 0
        %1874 = vmatpush1.bf16.msra.mxu0 0
        %1875 = vmatprep.subr.bf16.mxu0 0
        %1876 = vmatpush1.bf16.msra.mxu0 0
        %1877 = vmatprep.subr.bf16.mxu0 0
        %1878 = vmatpush1.bf16.msra.mxu0 0
        %1879 = vmatprep.subr.bf16.mxu0 0
        %1880 = vmatpush1.bf16.msra.mxu0 %v1863
        %1881 = vmatprep.subr.bf16.mxu0 0
        %1882 = vmatpush2.bf16.msra.mxu0 0
        %1883 = vmatprep.subr.bf16.mxu0 0
        %1884 = vmatpush2.bf16.msra.mxu0 0
        %1885 = vmatprep.subr.bf16.mxu0 0
        %1886 = vmatpush2.bf16.msra.mxu0 0
        %1887 = vmatprep.subr.bf16.mxu0 0
        %1888 = vmatpush2.bf16.msra.mxu0 0
        %1889 = vmatprep.subr.bf16.mxu0 0
        %1890 = vmatpush2.bf16.msra.mxu0 0
        %1891 = vmatprep.subr.bf16.mxu0 0
        %1892 = vmatpush2.bf16.msra.mxu0 0
        %1893 = vmatprep.subr.bf16.mxu0 0
        %1894 = vmatpush2.bf16.msra.mxu0 0
        %1895 = vmatprep.subr.bf16.mxu0 0
        %1896 = vmatpush2.bf16.msra.mxu0 0
        %1897 = vmatprep.mubr.bf16.mxu0 0
        %1898 = vmatmul.mubr.bf16.gmra.mxu0 %v1671
        %v1899 = vpop.f32.mrf.mxu0
        %v1900 = vadd.f32 %v1857, %v1899
        %v1901 = vpop.f32.mrf.mxu0
        %v1902 = vpop.f32.mrf.mxu0
        %v1903 = vpop.f32.mrf.mxu0
        %1904 = vdwg.mxu0
        %v1905 = vadd.f32 %v1845, %v1900
        %v1906 = vld [vmem:[%s20] sm:$0x1]
        %v1907 = vld [vmem:[%s21] sm:$0x1]
        %vm1908 = vcmask 253952
        %v1909 = vsel %vm1908, %v1905, 0.0
        %1910 = vadd.xlane.f32.xlu0 %v1909
        %v1911 = vpop.xlane.xlu0 %1910
        %v1912 = vrcp.pop 32.0
        %v1913 = vmul.f32 %v1911, %v1912
        %v1914 = vsub.f32 %v1905, %v1913
        %v1915 = vmul.f32 %v1914, %v1914
        %v1916 = vsel %vm1908, %v1915, 0.0
        %1917 = vadd.xlane.f32.xlu0 %v1916
        %v1918 = vpop.xlane.xlu0 %1917
        %v1919 = vmul.f32 %v1918, %v1912
        %v1920 = vadd.f32 %v1919, 1e-06
        %v1921 = vrsqrt.pop %v1920
        %v1922 = vmul.f32 %v1914, %v1921
        %v1923 = vmul.f32 %v1922, %v1906
        %v1924 = vadd.f32 %v1923, %v1907
        %v1925 = vpack.c.bf16 %v1924, %v1924
        %v1926 = vld [vmem:[%s22] sm:$0xf]
        %v1927 = vld [vmem:[%s22 + $0x4] sm:$0xf]
        %v1928 = vld [vmem:[%s22 + $0x8] sm:$0xf]
        %v1929 = vld [vmem:[%s22 + $0xc] sm:$0xf]
        %v1930 = vld [vmem:[%s23] sm:$0x1]
        %v1935 = vunpack.c.l.b16 %v1926
        %v1936 = vunpack.c.l.b16 %v1927
        %v1937 = vunpack.c.l.b16 %v1928
        %v1938 = vunpack.c.l.b16 %v1929
        %v1939 = vpack.c.b16 %v1936, %v1935
        %v1940 = vpack.c.b16 %v1938, %v1937
        %vm1943 = vcmask 261120
        %v1945 = vsel %vm1943, %v1925, 0
        %1947 = vmatprep.subr.bf16.mxu0 0
        %1948 = vmatpush1.bf16.msra.mxu0 0
        %1949 = vmatprep.subr.bf16.mxu0 0
        %1950 = vmatpush1.bf16.msra.mxu0 0
        %1951 = vmatprep.subr.bf16.mxu0 0
        %1952 = vmatpush1.bf16.msra.mxu0 0
        %1953 = vmatprep.subr.bf16.mxu0 0
        %1954 = vmatpush1.bf16.msra.mxu0 0
        %1955 = vmatprep.subr.bf16.mxu0 0
        %1956 = vmatpush1.bf16.msra.mxu0 0
        %1957 = vmatprep.subr.bf16.mxu0 0
        %1958 = vmatpush1.bf16.msra.mxu0 0
        %1959 = vmatprep.subr.bf16.mxu0 0
        %1960 = vmatpush1.bf16.msra.mxu0 %v1940
        %1961 = vmatprep.subr.bf16.mxu0 0
        %1962 = vmatpush1.bf16.msra.mxu0 %v1939
        %1963 = vmatprep.subr.bf16.mxu0 0
        %1964 = vmatpush2.bf16.msra.mxu0 0
        %1965 = vmatprep.subr.bf16.mxu0 0
        %1966 = vmatpush2.bf16.msra.mxu0 0
        %1967 = vmatprep.subr.bf16.mxu0 0
        %1968 = vmatpush2.bf16.msra.mxu0 0
        %1969 = vmatprep.subr.bf16.mxu0 0
        %1970 = vmatpush2.bf16.msra.mxu0 0
        %1971 = vmatprep.subr.bf16.mxu0 0
        %1972 = vmatpush2.bf16.msra.mxu0 0
        %1973 = vmatprep.subr.bf16.mxu0 0
        %1974 = vmatpush2.bf16.msra.mxu0 0
        %1975 = vmatprep.subr.bf16.mxu0 0
        %1976 = vmatpush2.bf16.msra.mxu0 0
        %1977 = vmatprep.subr.bf16.mxu0 0
        %1978 = vmatpush2.bf16.msra.mxu0 0
        %1979 = vmatprep.mubr.bf16.mxu0 0
        %1980 = vmatmul.mubr.bf16.gmra.mxu0 %v1945
        %v1981 = vpop.f32.mrf.mxu0
        %v1982 = vadd.f32 %v1930, %v1981
        %v1983 = vpop.f32.mrf.mxu0
        %v1984 = vpop.f32.mrf.mxu0
        %v1985 = vpop.f32.mrf.mxu0
        %1986 = vdwg.mxu0
        %1987 = vst [vmem:[%s774] sm:$0x1] %v1982
        %s1988 = sand.u32 %s570, 1
        %s1989 = scalar_lea.sflag [#allocation3], %s1988
        %s1990 = sand.u32 %s570, 1
        %s1991 = scalar_lea.vmem [#allocation2], %s1990
        // Predicated region
        $region117: #{mvit_forward.7} parent=115 // pred_check
          %p1992 = pneg %p580
        $region118: #{mvit_forward.7} parent=115 // pred_check_branch
          %1994 = sbr.rel (%p1992) target = $region120
        $region119: #{mvit_forward.7} parent=115 // pred_region
          %s1996 = ssub.s32 16, 16
          %1997 = vsyncadd %s1989, %s1996
          %s1998 = smul.addr %s38, 16
          %s1999 = scalar_lea.hbm %s24, %s1998
          %s2001 = sshll.u32 %s1991, 4
          %s2002 = int_to_ptr.vmem [resolvable:$true] %s2001
          %2004 = dma.vmem_to_hbm [thread:$0]  %s2002, 16, %s1999, %s1989
        $region120: #{mvit_forward.7} parent=115 // pred_fallthru
          _
      $region116: #{mvit_forward.7} parent=5 // pred_fallthru
        _
      %p2005 = scmp.le.s32.totalorder 2, %s33
      // Predicated region
      $region121: #{mvit_forward.7} parent=5 // pred_check
        %p2006 = pneg %p2005
      $region122: #{mvit_forward.7} parent=5 // pred_check_branch
        %2008 = sbr.rel (%p2006) target = $region124
      $region123: #{mvit_forward.7} parent=5 // pred_region
        %s2009 = ssub.s32 %s33, 2
        // Predicated region
        $region125: #{mvit_forward.7} parent=123 // pred_check
          %p2010 = pneg %p586
        $region126: #{mvit_forward.7} parent=123 // pred_check_branch
          %2012 = sbr.rel (%p2010) target = $region128
        $region127: #{mvit_forward.7} parent=123 // pred_region
          %s2013 = sand.u32 %s571, 1
          %s2014 = scalar_lea.sflag [#allocation3], %s2013
          %s2015 = sand.u32 %s571, 1
          %s2016 = scalar_lea.vmem [#allocation2], %s2015
          %2017 = dma.done %s2014, 16
        $region128: #{mvit_forward.7} parent=123 // pred_fallthru
          _
      $region124: #{mvit_forward.7} parent=5 // pred_fallthru
        _
    $region6: #{mvit_forward.7} parent=1 // loop_footer
      %s37 = sadd.s32 1, %s33
    $region7: #{mvit_forward.7} parent=1 // loop_footer_branch
      %32 = sbr.rel target = $region3
    $region8: #{mvit_forward.7} parent=1 // loop_exit
      _
    %2018 = vsyncpa [#allocation3], 1
    %s2019 = scalar_lea.sflag [#allocation3], 1
    %2020 = vsyncpa %s2019, 1

</llo_original>
